<compile_context>
chip_gen: v5e
topology: v5e:2x2
jax: 0.10.0
libtpu: 0.0.40
codegen_flags: <defaults>
</compile_context>

<pallas_src>
import jax
import jax.numpy as jnp
from jax.experimental import pallas as pl
from jax.experimental.pallas import tpu as pltpu

BN_EPS = 1e-5     # torch.nn.BatchNorm1d default eps
DICE_EPS = 1e-3   # torch_rechub Dice epsilon


# ---------------------------------------------------------------------------
# Activation helpers
# ---------------------------------------------------------------------------
def _dice(x, alpha):
    """Kernel-side Dice: per-row standardization + sigmoid gate (f32 math)."""
    avg = jnp.mean(x, axis=-1, keepdims=True)
    var = jnp.mean((x - avg) ** 2, axis=-1, keepdims=True)
    norm = (x - avg) * jax.lax.rsqrt(var + DICE_EPS)        # rsqrt -> EUP slot
    ps = jax.nn.sigmoid(norm)
    return ps * x + (1.0 - ps) * alpha * x


def _dice_ref(x, alpha):
    avg = jnp.mean(x, axis=-1, keepdims=True)
    var = jnp.mean((x - avg) ** 2, axis=-1, keepdims=True)
    norm = (x - avg) / jnp.sqrt(var + DICE_EPS)
    ps = jax.nn.sigmoid(norm)
    return ps * x + (1.0 - ps) * alpha * x


def _bn_eval(x, gamma, beta, mean, var):
    return (x - mean) / jnp.sqrt(var + BN_EPS) * gamma + beta


# ---------------------------------------------------------------------------
# Fused DIN forward kernel (one grid step = one batch tile, all in VMEM).
# ---------------------------------------------------------------------------
def _din_fused_kernel(hist_ref, tgt_ref, feat_ref,
                      wt_ref, whp_ref, ab1_ref, aalpha_ref, aw2_ref, ab2_ref,
                      mw1_ref, mb1_ref, ma1_ref, mw2_ref, mb2_ref, ma2_ref,
                      mw3_ref, mb3_ref, out_ref):
    N_h, TB, S, E = hist_ref.shape
    N_t = tgt_ref.shape[0]
    N_f = feat_ref.shape[0]
    D1 = wt_ref.shape[-1]
    f32 = jnp.float32

    mw1 = mw1_ref[...]                       # (all_dims, d_mlp1), MXU dtype
    d_mlp1 = mw1.shape[-1]
    cdt = mw1.dtype                          # compute dtype feeding the MXU

    # MLP first-layer accumulator, initialized with the (BN-folded) bias.
    acc = jnp.broadcast_to(mb1_ref[...].astype(f32), (TB, d_mlp1))

    # --- target attention per history feature; pooled result is consumed
    #     immediately by its mw1 slab (no live list of pooled slabs) ---------
    for i in range(N_h):                     # static loop, N_h is tiny
        hist_i = hist_ref[i]                 # (TB, S, E)
        tgt_i = tgt_ref[i]                   # (TB, E)

        # [t, h, t-h, t*h] @ W1 == t@(Wa+Wc) + [h || t*h] @ [Wb-Wc ; Wd]
        # target-side term is per batch row (hoisted out of S); b1 folded in.
        tgt_term = jnp.dot(tgt_i, wt_ref[i],
                           preferred_element_type=f32) + ab1_ref[i]   # (TB, D1)

        lhs = jnp.concatenate([hist_i, hist_i * tgt_i[:, None, :]],
                              axis=-1)                                 # (TB, S, 2E)
        h = jnp.dot(lhs.reshape(TB * S, 2 * E), whp_ref[i],
                    preferred_element_type=f32).reshape(TB, S, D1)
        h = h + tgt_term[:, None, :]          # broadcast over S, no materialize
        h = _dice(h, aalpha_ref[i])           # (TB, S, D1), f32

        # Linear(D1, 1): VPU multiply + XLU lane reduction (no (.,1) matmul).
        w = jnp.sum(h * aw2_ref[i], axis=-1, keepdims=True) + ab2_ref[i]  # (TB,S,1)
        pooled = jnp.sum(w * hist_i.astype(f32), axis=1)                  # (TB, E)

        acc = acc + jnp.dot(pooled.astype(cdt), mw1[i * E:(i + 1) * E, :],
                            preferred_element_type=f32)

    # target / profile feature slabs of the MLP first layer
    for j in range(N_t):
        idx = N_h + j
        acc = acc + jnp.dot(tgt_ref[j], mw1[idx * E:(idx + 1) * E, :],
                            preferred_element_type=f32)
    for j in range(N_f):
        idx = N_h + N_t + j
        acc = acc + jnp.dot(feat_ref[j], mw1[idx * E:(idx + 1) * E, :],
                            preferred_element_type=f32)

    # --- final MLP (f32 elementwise, MXU-dtype dots with f32 accumulation) ---
    h = _dice(acc, ma1_ref[...])
    h = jnp.dot(h.astype(cdt), mw2_ref[...],
                preferred_element_type=f32) + mb2_ref[...]
    h = _dice(h, ma2_ref[...])
    # Final Linear(d2, 1) with the batch axis on lanes: contract rhs's last dim
    # ((1,d2) x (TB,d2)^T -> (1,TB)) so the output store is a lane-dense vst.
    y = jax.lax.dot_general(mw3_ref[...], h, (((1,), (1,)), ((), ())),
                            preferred_element_type=f32) + mb3_ref[...]  # (1, TB)
    out_ref[...] = jax.nn.sigmoid(y)


def _full_block(a):
    nd = a.ndim
    return pl.BlockSpec(a.shape, lambda i: (0,) * nd)


def din_forward(hist, tgt, feat, att_p, mlp_p, *,
                batch_tile=256, vmem_limit_bytes=48 * 1024 * 1024):
    """hist: (N_h,B,S,E), tgt: (N_t,B,E), feat: (N_f,B,E) -> (B,) scores.

    batch_tile / vmem_limit_bytes are generation knobs:
      v7x : keep tiles small enough for 64 MiB VMEM (TB~256 f32 / ~512 bf16
            at S=64) and rely on the "parallel" axis for its 2 TensorCores.
      v6e/v5e: raise batch_tile and vmem_limit_bytes (~100 MiB of the 128 MiB
            VMEM) -- bigger blocks push a mem-bound kernel toward the HBM
            roofline.
    """
    N_h, B, S, E = hist.shape
    N_t = tgt.shape[0]
    N_f = feat.shape[0]

    if B <= batch_tile:
        TB, B_pad = B, B
    else:
        TB = batch_tile                      # multiple of 128 -> lane-dense out ok
        B_pad = ((B + TB - 1) // TB) * TB
    if B_pad != B:                           # zero-pad ragged batch; sliced below
        pad = B_pad - B
        hist = jnp.pad(hist, ((0, 0), (0, pad), (0, 0), (0, 0)))
        tgt = jnp.pad(tgt, ((0, 0), (0, pad), (0, 0)))
        feat = jnp.pad(feat, ((0, 0), (0, pad), (0, 0)))

    weights = (att_p["wt"], att_p["whp"], att_p["b1"], att_p["alpha"],
               att_p["w2row"], att_p["b2"],
               mlp_p["w1"], mlp_p["b1"], mlp_p["a1"],
               mlp_p["w2"], mlp_p["b2"], mlp_p["a2"],
               mlp_p["w3row"], mlp_p["b3"])

    out = pl.pallas_call(
        _din_fused_kernel,
        out_shape=jax.ShapeDtypeStruct((1, B_pad), jnp.float32),
        grid=(B_pad // TB,),
        in_specs=[pl.BlockSpec((N_h, TB, S, E), lambda i: (0, i, 0, 0)),
                  pl.BlockSpec((N_t, TB, E), lambda i: (0, i, 0)),
                  pl.BlockSpec((N_f, TB, E), lambda i: (0, i, 0))]
                 + [_full_block(w) for w in weights],
        out_specs=pl.BlockSpec((1, TB), lambda i: (0, i)),
        compiler_params=pltpu.CompilerParams(
            dimension_semantics=("parallel",),
            vmem_limit_bytes=vmem_limit_bytes),
    )(hist, tgt, feat, *weights)
    return out[0, :B]


# ---------------------------------------------------------------------------
# Parameter init (raw, torch-like layout) + wrapper-side fusion/folding.
# ---------------------------------------------------------------------------
def _linear_init(key, fan_in, fan_out):
    k1, k2 = jax.random.split(key)
    bound = 1.0 / float(fan_in) ** 0.5
    w = jax.random.uniform(k1, (fan_in, fan_out), jnp.float32, -bound, bound)
    b = jax.random.uniform(k2, (fan_out,), jnp.float32, -bound, bound)
    return w, b


def _bn_stats_init(key, dim):
    kg, kb, km, kv = jax.random.split(key, 4)
    g = jax.random.uniform(kg, (dim,), jnp.float32, 0.5, 1.5)
    be = 0.1 * jax.random.normal(kb, (dim,), jnp.float32)
    m = 0.1 * jax.random.normal(km, (dim,), jnp.float32)
    v = jax.random.uniform(kv, (dim,), jnp.float32, 0.5, 1.5)
    return g, be, m, v


def init_attention_params(key, n_hist, emb_dim, att_dim):
    w1s, b1s, w2s, b2s, alphas = [], [], [], [], []
    gs, bes, ms, vs = [], [], [], []
    for _ in range(n_hist):
        key, k1, k2, k3, k4 = jax.random.split(key, 5)
        w1, b1 = _linear_init(k1, 4 * emb_dim, att_dim)
        w2, b2 = _linear_init(k2, att_dim, 1)
        alpha = jax.random.normal(k3, (), jnp.float32)
        g, be, m, v = _bn_stats_init(k4, att_dim)   # non-trivial stats: exercises fold
        w1s.append(w1); b1s.append(b1)
        w2s.append(w2[:, 0]); b2s.append(b2[0]); alphas.append(alpha)
        gs.append(g); bes.append(be); ms.append(m); vs.append(v)
    return {
        "w1": jnp.stack(w1s), "b1": jnp.stack(b1s),
        "bn_g": jnp.stack(gs), "bn_b": jnp.stack(bes),
        "bn_m": jnp.stack(ms), "bn_v": jnp.stack(vs),
        "alpha": jnp.stack(alphas),
        "w2": jnp.stack(w2s), "b2": jnp.stack(b2s),
    }


def init_mlp_params(key, in_dim, dims):
    d1, d2 = dims
    key, k1, k2, k3, k4, k5, k6, k7 = jax.random.split(key, 8)
    w1, b1 = _linear_init(k1, in_dim, d1)
    w2, b2 = _linear_init(k2, d1, d2)
    w3, b3 = _linear_init(k3, d2, 1)
    g1, be1, m1, v1 = _bn_stats_init(k6, d1)
    g2, be2, m2, v2 = _bn_stats_init(k7, d2)
    return {
        "w1": w1, "b1": b1, "g1": g1, "be1": be1, "m1": m1, "v1": v1,
        "a1": jax.random.normal(k4, (), jnp.float32),
        "w2": w2, "b2": b2, "g2": g2, "be2": be2, "m2": m2, "v2": v2,
        "a2": jax.random.normal(k5, (), jnp.float32),
        "w3": w3[:, 0], "b3": b3[0],
    }


def _fold_bn_into_linear(w, b, gamma, beta, mean, var):
    scale = gamma / jnp.sqrt(var + BN_EPS)
    return w * scale[None, :], (b - mean) * scale + beta


def fuse_attention_params(p, emb_dim, compute_dtype=jnp.float32):
    """Fold eval BN into Linear1 and split/pack W1 so the att_in concat disappears.

    MXU-feeding weights (wt, whp) are cast to compute_dtype (bf16 halves HBM
    bytes and doubles MXU rate on v6e/v7x); biases / alphas / w2 row stay f32.
    """
    E = emb_dim
    scale = p["bn_g"] / jnp.sqrt(p["bn_v"] + BN_EPS)        # (N_h, D1)
    w1f = p["w1"] * scale[:, None, :]                       # (N_h, 4E, D1)
    b1f = (p["b1"] - p["bn_m"]) * scale + p["bn_b"]         # (N_h, D1)
    wa = w1f[:, 0 * E:1 * E, :]    # target slab
    wb = w1f[:, 1 * E:2 * E, :]    # history slab
    wc = w1f[:, 2 * E:3 * E, :]    # (target - history) slab
    wd = w1f[:, 3 * E:4 * E, :]    # (target * history) slab
    return {
        "wt": (wa + wc).astype(compute_dtype),                       # (N_h, E, D1)
        "whp": jnp.concatenate([wb - wc, wd], axis=1).astype(compute_dtype),  # (N_h,2E,D1)
        "b1": b1f[:, None, :].astype(jnp.float32),                   # (N_h, 1, D1)
        "alpha": p["alpha"][:, None, None].astype(jnp.float32),      # (N_h, 1, 1)
        "w2row": p["w2"][:, None, :].astype(jnp.float32),            # (N_h, 1, D1)
        "b2": p["b2"][:, None, None].astype(jnp.float32),            # (N_h, 1, 1)
    }


def fuse_mlp_params(p, compute_dtype=jnp.float32):
    w1f, b1f = _fold_bn_into_linear(p["w1"], p["b1"], p["g1"], p["be1"],
                                    p["m1"], p["v1"])
    w2f, b2f = _fold_bn_into_linear(p["w2"], p["b2"], p["g2"], p["be2"],
                                    p["m2"], p["v2"])
    return {
        "w1": w1f.astype(compute_dtype), "b1": b1f[None, :].astype(jnp.float32),
        "a1": p["a1"].reshape(1, 1).astype(jnp.float32),
        "w2": w2f.astype(compute_dtype), "b2": b2f[None, :].astype(jnp.float32),
        "a2": p["a2"].reshape(1, 1).astype(jnp.float32),
        "w3row": p["w3"][None, :].astype(jnp.float32),
        "b3": p["b3"].reshape(1, 1).astype(jnp.float32),
    }


# ---------------------------------------------------------------------------
# Pure-JAX reference (mirrors the PyTorch forward, raw un-folded params).
# ---------------------------------------------------------------------------
def din_reference(hist_k, tgt_k, feat_k, att_p, mlp_p):
    N_h, B, S, E = hist_k.shape
    pooled = []
    for i in range(N_h):
        hist = hist_k[i]
        tgt = tgt_k[i]
        tgt_e = jnp.broadcast_to(tgt[:, None, :], (B, S, E))
        att_in = jnp.concatenate(
            [tgt_e, hist, tgt_e - hist, tgt_e * hist], axis=-1)
        x = att_in.reshape(B * S, 4 * E)
        h = x @ att_p["w1"][i] + att_p["b1"][i]
        h = _bn_eval(h, att_p["bn_g"][i], att_p["bn_b"][i],
                     att_p["bn_m"][i], att_p["bn_v"][i])
        h = _dice_ref(h, att_p["alpha"][i])
        w = (h @ att_p["w2"][i][:, None] + att_p["b2"][i]).reshape(B, S)
        pooled.append(jnp.sum(w[:, :, None] * hist, axis=1))
    attention_pooling = jnp.concatenate(pooled, axis=-1)          # (B, N_h*E)
    tgt_flat = jnp.transpose(tgt_k, (1, 0, 2)).reshape(B, -1)
    feat_flat = jnp.transpose(feat_k, (1, 0, 2)).reshape(B, -1)
    mlp_in = jnp.concatenate([attention_pooling, tgt_flat, feat_flat], axis=1)
    h = mlp_in @ mlp_p["w1"] + mlp_p["b1"]
    h = _bn_eval(h, mlp_p["g1"], mlp_p["be1"], mlp_p["m1"], mlp_p["v1"])
    h = _dice_ref(h, mlp_p["a1"])
    h = h @ mlp_p["w2"] + mlp_p["b2"]
    h = _bn_eval(h, mlp_p["g2"], mlp_p["be2"], mlp_p["m2"], mlp_p["v2"])
    h = _dice_ref(h, mlp_p["a2"])
    y = h @ mlp_p["w3"][:, None] + mlp_p["b3"]
    return jax.nn.sigmoid(y)[:, 0]


if __name__ == "__main__":
    B, S, E = 8, 16, 8
    N_f, N_h, N_t = 3, 2, 2          # profile feats / history feats / target feats
    ATT_DIM = 36                     # attention_mlp_params dims=[36]
    MLP_DIMS = (64, 32)              # mlp_params dims
    VOCAB = 50

    key = jax.random.PRNGKey(0)
    (key, k_feat, k_hist, k_tgt, k_if, k_ih, k_it,
     k_att, k_mlp) = jax.random.split(key, 9)

    feat_tables = 0.1 * jax.random.normal(k_feat, (N_f, VOCAB, E), jnp.float32)
    hist_tables = 0.1 * jax.random.normal(k_hist, (N_h, VOCAB, E), jnp.float32)
    tgt_tables = 0.1 * jax.random.normal(k_tgt, (N_t, VOCAB, E), jnp.float32)
    ids_feat = jax.random.randint(k_if, (B, N_f), 0, VOCAB)
    ids_hist = jax.random.randint(k_ih, (B, N_h, S), 0, VOCAB)
    ids_tgt = jax.random.randint(k_it, (B, N_t), 0, VOCAB)

    # TODO(synk): embedding gather stays in plain JAX (table lookup is glue);
    # gathered directly into kernel layout (feature axis leading) so the
    # kernel path has no wrapper transposes.
    feat_k = jnp.stack([feat_tables[j][ids_feat[:, j]]
                        for j in range(N_f)], axis=0)            # (N_f, B, E)
    hist_k = jnp.stack([hist_tables[j][ids_hist[:, j]]
                        for j in range(N_h)], axis=0)            # (N_h, B, S, E)
    tgt_k = jnp.stack([tgt_tables[j][ids_tgt[:, j]]
                       for j in range(N_t)], axis=0)             # (N_t, B, E)

    att_raw = init_attention_params(k_att, N_h, E, ATT_DIM)
    all_dims = (N_h + N_t + N_f) * E
    mlp_raw = init_mlp_params(k_mlp, all_dims, MLP_DIMS)
    y_ref = din_reference(hist_k, tgt_k, feat_k, att_raw, mlp_raw)

    # --- f32 path (tight tolerance; exercises the non-trivial BN fold) ------
    att_f32 = fuse_attention_params(att_raw, E, jnp.float32)
    mlp_f32 = fuse_mlp_params(mlp_raw, jnp.float32)
    y32 = jax.block_until_ready(
        din_forward(hist_k, tgt_k, feat_k, att_f32, mlp_f32))
    assert y32.shape == (B,)
    assert jnp.allclose(y32, y_ref, rtol=1e-3, atol=1e-4), (y32, y_ref)

    # --- bf16 operand path (production perf config; bf16-level tolerance) ---
    att_bf = fuse_attention_params(att_raw, E, jnp.bfloat16)
    mlp_bf = fuse_mlp_params(mlp_raw, jnp.bfloat16)
    y16 = jax.block_until_ready(
        din_forward(hist_k.astype(jnp.bfloat16), tgt_k.astype(jnp.bfloat16),
                    feat_k.astype(jnp.bfloat16), att_bf, mlp_bf))
    assert y16.shape == (B,)
    assert jnp.allclose(y16.astype(jnp.float32), y_ref, rtol=5e-2, atol=5e-2), \
        (y16, y_ref)

    print("KERNEL_OK")
</pallas_src>

<mosaic_0001>
module attributes {stable_mosaic.version = 11 : i64} {
  func.func @_din_fused_kernel(%arg0: i32, %arg1: memref<2x8x16x8xf32, #tpu.memory_space<vmem>>, %arg2: memref<2x8x8xf32, #tpu.memory_space<vmem>>, %arg3: memref<3x8x8xf32, #tpu.memory_space<vmem>>, %arg4: memref<2x8x36xf32, #tpu.memory_space<vmem>>, %arg5: memref<2x16x36xf32, #tpu.memory_space<vmem>>, %arg6: memref<2x1x36xf32, #tpu.memory_space<vmem>>, %arg7: memref<2x1x1xf32, #tpu.memory_space<vmem>>, %arg8: memref<2x1x36xf32, #tpu.memory_space<vmem>>, %arg9: memref<2x1x1xf32, #tpu.memory_space<vmem>>, %arg10: memref<56x64xf32, #tpu.memory_space<vmem>>, %arg11: memref<1x64xf32, #tpu.memory_space<vmem>>, %arg12: memref<1x1xf32, #tpu.memory_space<vmem>>, %arg13: memref<64x32xf32, #tpu.memory_space<vmem>>, %arg14: memref<1x32xf32, #tpu.memory_space<vmem>>, %arg15: memref<1x1xf32, #tpu.memory_space<vmem>>, %arg16: memref<1x32xf32, #tpu.memory_space<vmem>>, %arg17: memref<1x1xf32, #tpu.memory_space<vmem>>, %arg18: memref<1x8xf32, #tpu.memory_space<vmem>>) attributes {dimension_semantics = [#tpu.dimension_semantics<parallel>], iteration_bounds = array<i64: 1>, scalar_prefetch = 0 : i64, scratch_operands = 0 : i64, tpu.core_type = #tpu.core_type<tc>, window_params = [{transform_indices = @transform_0, window_bounds = array<i64: 2, 8, 16, 8>}, {transform_indices = @transform_1, window_bounds = array<i64: 2, 8, 8>}, {transform_indices = @transform_2, window_bounds = array<i64: 3, 8, 8>}, {pipeline_mode = #tpu.pipeline_mode<synchronous>, transform_indices = @transform_3, window_bounds = array<i64: 2, 8, 36>}, {pipeline_mode = #tpu.pipeline_mode<synchronous>, transform_indices = @transform_4, window_bounds = array<i64: 2, 16, 36>}, {pipeline_mode = #tpu.pipeline_mode<synchronous>, transform_indices = @transform_5, window_bounds = array<i64: 2, 1, 36>}, {pipeline_mode = #tpu.pipeline_mode<synchronous>, transform_indices = @transform_6, window_bounds = array<i64: 2, 1, 1>}, {pipeline_mode = #tpu.pipeline_mode<synchronous>, transform_indices = @transform_7, window_bounds = array<i64: 2, 1, 36>}, {pipeline_mode = #tpu.pipeline_mode<synchronous>, transform_indices = @transform_8, window_bounds = array<i64: 2, 1, 1>}, {pipeline_mode = #tpu.pipeline_mode<synchronous>, transform_indices = @transform_9, window_bounds = array<i64: 56, 64>}, {pipeline_mode = #tpu.pipeline_mode<synchronous>, transform_indices = @transform_10, window_bounds = array<i64: 1, 64>}, {pipeline_mode = #tpu.pipeline_mode<synchronous>, transform_indices = @transform_11, window_bounds = array<i64: 1, 1>}, {pipeline_mode = #tpu.pipeline_mode<synchronous>, transform_indices = @transform_12, window_bounds = array<i64: 64, 32>}, {pipeline_mode = #tpu.pipeline_mode<synchronous>, transform_indices = @transform_13, window_bounds = array<i64: 1, 32>}, {pipeline_mode = #tpu.pipeline_mode<synchronous>, transform_indices = @transform_14, window_bounds = array<i64: 1, 1>}, {pipeline_mode = #tpu.pipeline_mode<synchronous>, transform_indices = @transform_15, window_bounds = array<i64: 1, 32>}, {pipeline_mode = #tpu.pipeline_mode<synchronous>, transform_indices = @transform_16, window_bounds = array<i64: 1, 1>}, {transform_indices = @transform_17, window_bounds = array<i64: 1, 8>}]} {
    %c0 = arith.constant 0 : index
    %c0_0 = arith.constant 0 : index
    %0 = vector.load %arg10[%c0, %c0_0] : memref<56x64xf32, #tpu.memory_space<vmem>>, vector<56x64xf32>
    %c0_1 = arith.constant 0 : index
    %c0_2 = arith.constant 0 : index
    %1 = vector.load %arg11[%c0_1, %c0_2] : memref<1x64xf32, #tpu.memory_space<vmem>>, vector<1x64xf32>
    %2 = vector.shape_cast %1 : vector<1x64xf32> to vector<1x64xf32>
    %3 = vector.broadcast %2 : vector<1x64xf32> to vector<8x64xf32>
    %c0_3 = arith.constant 0 : index
    %c0_4 = arith.constant 0 : index
    %c0_5 = arith.constant 0 : index
    %c0_6 = arith.constant 0 : index
    %4 = vector.load %arg1[%c0_3, %c0_4, %c0_5, %c0_6] : memref<2x8x16x8xf32, #tpu.memory_space<vmem>>, vector<1x8x16x8xf32>
    %5 = vector.shape_cast %4 : vector<1x8x16x8xf32> to vector<8x16x8xf32>
    %c0_7 = arith.constant 0 : index
    %c0_8 = arith.constant 0 : index
    %c0_9 = arith.constant 0 : index
    %6 = vector.load %arg2[%c0_7, %c0_8, %c0_9] : memref<2x8x8xf32, #tpu.memory_space<vmem>>, vector<1x8x8xf32>
    %7 = vector.shape_cast %6 : vector<1x8x8xf32> to vector<8x8xf32>
    %c0_10 = arith.constant 0 : index
    %c0_11 = arith.constant 0 : index
    %c0_12 = arith.constant 0 : index
    %8 = vector.load %arg4[%c0_10, %c0_11, %c0_12] : memref<2x8x36xf32, #tpu.memory_space<vmem>>, vector<1x8x36xf32>
    %9 = vector.shape_cast %8 : vector<1x8x36xf32> to vector<8x36xf32>
    %cst = arith.constant dense<0.000000e+00> : vector<8x36xf32>
    %10 = tpu.matmul %7, %9, %cst {dimension_numbers = #tpu.dot_dimension_numbers<[1], [0], [0], [1], [0, 0, 1, 1], [], []>} : vector<8x8xf32>, vector<8x36xf32>, vector<8x36xf32> -> vector<8x36xf32>
    %c0_13 = arith.constant 0 : index
    %c0_14 = arith.constant 0 : index
    %c0_15 = arith.constant 0 : index
    %11 = vector.load %arg6[%c0_13, %c0_14, %c0_15] : memref<2x1x36xf32, #tpu.memory_space<vmem>>, vector<1x1x36xf32>
    %12 = vector.shape_cast %11 : vector<1x1x36xf32> to vector<1x36xf32>
    %13 = vector.broadcast %12 : vector<1x36xf32> to vector<8x36xf32>
    %14 = arith.addf %10, %13 : vector<8x36xf32>
    %15 = vector.shape_cast %7 : vector<8x8xf32> to vector<8x1x8xf32>
    %16 = vector.broadcast %15 : vector<8x1x8xf32> to vector<8x16x8xf32>
    %17 = arith.mulf %5, %16 : vector<8x16x8xf32>
    %18 = tpu.concatenate %5, %17 in 2 : vector<8x16x8xf32>, vector<8x16x8xf32> -> vector<8x16x16xf32>
    %19 = vector.shape_cast %18 : vector<8x16x16xf32> to vector<128x16xf32>
    %c0_16 = arith.constant 0 : index
    %c0_17 = arith.constant 0 : index
    %c0_18 = arith.constant 0 : index
    %20 = vector.load %arg5[%c0_16, %c0_17, %c0_18] : memref<2x16x36xf32, #tpu.memory_space<vmem>>, vector<1x16x36xf32>
    %21 = vector.shape_cast %20 : vector<1x16x36xf32> to vector<16x36xf32>
    %cst_19 = arith.constant dense<0.000000e+00> : vector<128x36xf32>
    %22 = tpu.matmul %19, %21, %cst_19 {dimension_numbers = #tpu.dot_dimension_numbers<[1], [0], [0], [1], [0, 0, 1, 1], [], []>} : vector<128x16xf32>, vector<16x36xf32>, vector<128x36xf32> -> vector<128x36xf32>
    %23 = vector.shape_cast %22 : vector<128x36xf32> to vector<8x16x36xf32>
    %24 = vector.shape_cast %14 : vector<8x36xf32> to vector<8x1x36xf32>
    %25 = vector.broadcast %24 : vector<8x1x36xf32> to vector<8x16x36xf32>
    %26 = arith.addf %23, %25 : vector<8x16x36xf32>
    %c0_20 = arith.constant 0 : index
    %c0_21 = arith.constant 0 : index
    %c0_22 = arith.constant 0 : index
    %27 = vector.load %arg7[%c0_20, %c0_21, %c0_22] : memref<2x1x1xf32, #tpu.memory_space<vmem>>, vector<1x1x1xf32>
    %28 = vector.shape_cast %27 : vector<1x1x1xf32> to vector<1x1xf32>
    %cst_23 = arith.constant dense<0.000000e+00> : vector<8x16xf32>
    %29 = vector.multi_reduction <add>, %26, %cst_23 [2] : vector<8x16x36xf32> to vector<8x16xf32>
    %30 = vector.shape_cast %29 : vector<8x16xf32> to vector<8x16x1xf32>
    %cst_24 = arith.constant 3.600000e+01 : f32
    %31 = vector.broadcast %cst_24 : f32 to vector<8x16x1xf32>
    %32 = arith.divf %30, %31 : vector<8x16x1xf32>
    %33 = vector.broadcast %32 : vector<8x16x1xf32> to vector<8x16x36xf32>
    %34 = arith.subf %26, %33 : vector<8x16x36xf32>
    %35 = arith.mulf %34, %34 : vector<8x16x36xf32>
    %cst_25 = arith.constant dense<0.000000e+00> : vector<8x16xf32>
    %36 = vector.multi_reduction <add>, %35, %cst_25 [2] : vector<8x16x36xf32> to vector<8x16xf32>
    %37 = vector.shape_cast %36 : vector<8x16xf32> to vector<8x16x1xf32>
    %cst_26 = arith.constant 3.600000e+01 : f32
    %38 = vector.broadcast %cst_26 : f32 to vector<8x16x1xf32>
    %39 = arith.divf %37, %38 : vector<8x16x1xf32>
    %40 = vector.broadcast %32 : vector<8x16x1xf32> to vector<8x16x36xf32>
    %41 = arith.subf %26, %40 : vector<8x16x36xf32>
    %cst_27 = arith.constant 1.000000e-03 : f32
    %42 = vector.broadcast %cst_27 : f32 to vector<8x16x1xf32>
    %43 = arith.addf %39, %42 : vector<8x16x1xf32>
    %44 = math.rsqrt %43 : vector<8x16x1xf32>
    %45 = vector.broadcast %44 : vector<8x16x1xf32> to vector<8x16x36xf32>
    %46 = arith.mulf %41, %45 : vector<8x16x36xf32>
    %47 = arith.negf %46 : vector<8x16x36xf32>
    %48 = math.exp %47 : vector<8x16x36xf32>
    %cst_28 = arith.constant 1.000000e+00 : f32
    %49 = vector.broadcast %cst_28 : f32 to vector<8x16x36xf32>
    %50 = arith.addf %49, %48 : vector<8x16x36xf32>
    %51 = arith.divf %49, %50 : vector<8x16x36xf32>
    %52 = arith.mulf %51, %26 : vector<8x16x36xf32>
    %cst_29 = arith.constant 1.000000e+00 : f32
    %53 = vector.broadcast %cst_29 : f32 to vector<8x16x36xf32>
    %54 = arith.subf %53, %51 : vector<8x16x36xf32>
    %55 = vector.shape_cast %28 : vector<1x1xf32> to vector<1x1x1xf32>
    %56 = vector.broadcast %55 : vector<1x1x1xf32> to vector<8x16x36xf32>
    %57 = arith.mulf %54, %56 : vector<8x16x36xf32>
    %58 = arith.mulf %57, %26 : vector<8x16x36xf32>
    %59 = arith.addf %52, %58 : vector<8x16x36xf32>
    %c0_30 = arith.constant 0 : index
    %c0_31 = arith.constant 0 : index
    %c0_32 = arith.constant 0 : index
    %60 = vector.load %arg8[%c0_30, %c0_31, %c0_32] : memref<2x1x36xf32, #tpu.memory_space<vmem>>, vector<1x1x36xf32>
    %61 = vector.shape_cast %60 : vector<1x1x36xf32> to vector<1x36xf32>
    %62 = vector.shape_cast %61 : vector<1x36xf32> to vector<1x1x36xf32>
    %63 = vector.broadcast %62 : vector<1x1x36xf32> to vector<8x16x36xf32>
    %64 = arith.mulf %59, %63 : vector<8x16x36xf32>
    %cst_33 = arith.constant dense<0.000000e+00> : vector<8x16xf32>
    %65 = vector.multi_reduction <add>, %64, %cst_33 [2] : vector<8x16x36xf32> to vector<8x16xf32>
    %66 = vector.shape_cast %65 : vector<8x16xf32> to vector<8x16x1xf32>
    %c0_34 = arith.constant 0 : index
    %c0_35 = arith.constant 0 : index
    %c0_36 = arith.constant 0 : index
    %67 = vector.load %arg9[%c0_34, %c0_35, %c0_36] : memref<2x1x1xf32, #tpu.memory_space<vmem>>, vector<1x1x1xf32>
    %68 = vector.shape_cast %67 : vector<1x1x1xf32> to vector<1x1xf32>
    %69 = vector.shape_cast %68 : vector<1x1xf32> to vector<1x1x1xf32>
    %70 = vector.broadcast %69 : vector<1x1x1xf32> to vector<8x16x1xf32>
    %71 = arith.addf %66, %70 : vector<8x16x1xf32>
    %72 = vector.broadcast %71 : vector<8x16x1xf32> to vector<8x16x8xf32>
    %73 = arith.mulf %72, %5 : vector<8x16x8xf32>
    %cst_37 = arith.constant dense<0.000000e+00> : vector<8x8xf32>
    %74 = vector.multi_reduction <add>, %73, %cst_37 [1] : vector<8x16x8xf32> to vector<8x8xf32>
    %75 = vector.extract_strided_slice %0 {offsets = [0, 0], sizes = [8, 64], strides = [1, 1]} : vector<56x64xf32> to vector<8x64xf32>
    %cst_38 = arith.constant dense<0.000000e+00> : vector<8x64xf32>
    %76 = tpu.matmul %74, %75, %cst_38 {dimension_numbers = #tpu.dot_dimension_numbers<[1], [0], [0], [1], [0, 0, 1, 1], [], []>} : vector<8x8xf32>, vector<8x64xf32>, vector<8x64xf32> -> vector<8x64xf32>
    %77 = arith.addf %3, %76 : vector<8x64xf32>
    %c1 = arith.constant 1 : index
    %c0_39 = arith.constant 0 : index
    %c0_40 = arith.constant 0 : index
    %c0_41 = arith.constant 0 : index
    %78 = vector.load %arg1[%c1, %c0_39, %c0_40, %c0_41] : memref<2x8x16x8xf32, #tpu.memory_space<vmem>>, vector<1x8x16x8xf32>
    %79 = vector.shape_cast %78 : vector<1x8x16x8xf32> to vector<8x16x8xf32>
    %c1_42 = arith.constant 1 : index
    %c0_43 = arith.constant 0 : index
    %c0_44 = arith.constant 0 : index
    %80 = vector.load %arg2[%c1_42, %c0_43, %c0_44] : memref<2x8x8xf32, #tpu.memory_space<vmem>>, vector<1x8x8xf32>
    %81 = vector.shape_cast %80 : vector<1x8x8xf32> to vector<8x8xf32>
    %c1_45 = arith.constant 1 : index
    %c0_46 = arith.constant 0 : index
    %c0_47 = arith.constant 0 : index
    %82 = vector.load %arg4[%c1_45, %c0_46, %c0_47] : memref<2x8x36xf32, #tpu.memory_space<vmem>>, vector<1x8x36xf32>
    %83 = vector.shape_cast %82 : vector<1x8x36xf32> to vector<8x36xf32>
    %cst_48 = arith.constant dense<0.000000e+00> : vector<8x36xf32>
    %84 = tpu.matmul %81, %83, %cst_48 {dimension_numbers = #tpu.dot_dimension_numbers<[1], [0], [0], [1], [0, 0, 1, 1], [], []>} : vector<8x8xf32>, vector<8x36xf32>, vector<8x36xf32> -> vector<8x36xf32>
    %c1_49 = arith.constant 1 : index
    %c0_50 = arith.constant 0 : index
    %c0_51 = arith.constant 0 : index
    %85 = vector.load %arg6[%c1_49, %c0_50, %c0_51] : memref<2x1x36xf32, #tpu.memory_space<vmem>>, vector<1x1x36xf32>
    %86 = vector.shape_cast %85 : vector<1x1x36xf32> to vector<1x36xf32>
    %87 = vector.broadcast %86 : vector<1x36xf32> to vector<8x36xf32>
    %88 = arith.addf %84, %87 : vector<8x36xf32>
    %89 = vector.shape_cast %81 : vector<8x8xf32> to vector<8x1x8xf32>
    %90 = vector.broadcast %89 : vector<8x1x8xf32> to vector<8x16x8xf32>
    %91 = arith.mulf %79, %90 : vector<8x16x8xf32>
    %92 = tpu.concatenate %79, %91 in 2 : vector<8x16x8xf32>, vector<8x16x8xf32> -> vector<8x16x16xf32>
    %93 = vector.shape_cast %92 : vector<8x16x16xf32> to vector<128x16xf32>
    %c1_52 = arith.constant 1 : index
    %c0_53 = arith.constant 0 : index
    %c0_54 = arith.constant 0 : index
    %94 = vector.load %arg5[%c1_52, %c0_53, %c0_54] : memref<2x16x36xf32, #tpu.memory_space<vmem>>, vector<1x16x36xf32>
    %95 = vector.shape_cast %94 : vector<1x16x36xf32> to vector<16x36xf32>
    %cst_55 = arith.constant dense<0.000000e+00> : vector<128x36xf32>
    %96 = tpu.matmul %93, %95, %cst_55 {dimension_numbers = #tpu.dot_dimension_numbers<[1], [0], [0], [1], [0, 0, 1, 1], [], []>} : vector<128x16xf32>, vector<16x36xf32>, vector<128x36xf32> -> vector<128x36xf32>
    %97 = vector.shape_cast %96 : vector<128x36xf32> to vector<8x16x36xf32>
    %98 = vector.shape_cast %88 : vector<8x36xf32> to vector<8x1x36xf32>
    %99 = vector.broadcast %98 : vector<8x1x36xf32> to vector<8x16x36xf32>
    %100 = arith.addf %97, %99 : vector<8x16x36xf32>
    %c1_56 = arith.constant 1 : index
    %c0_57 = arith.constant 0 : index
    %c0_58 = arith.constant 0 : index
    %101 = vector.load %arg7[%c1_56, %c0_57, %c0_58] : memref<2x1x1xf32, #tpu.memory_space<vmem>>, vector<1x1x1xf32>
    %102 = vector.shape_cast %101 : vector<1x1x1xf32> to vector<1x1xf32>
    %cst_59 = arith.constant dense<0.000000e+00> : vector<8x16xf32>
    %103 = vector.multi_reduction <add>, %100, %cst_59 [2] : vector<8x16x36xf32> to vector<8x16xf32>
    %104 = vector.shape_cast %103 : vector<8x16xf32> to vector<8x16x1xf32>
    %cst_60 = arith.constant 3.600000e+01 : f32
    %105 = vector.broadcast %cst_60 : f32 to vector<8x16x1xf32>
    %106 = arith.divf %104, %105 : vector<8x16x1xf32>
    %107 = vector.broadcast %106 : vector<8x16x1xf32> to vector<8x16x36xf32>
    %108 = arith.subf %100, %107 : vector<8x16x36xf32>
    %109 = arith.mulf %108, %108 : vector<8x16x36xf32>
    %cst_61 = arith.constant dense<0.000000e+00> : vector<8x16xf32>
    %110 = vector.multi_reduction <add>, %109, %cst_61 [2] : vector<8x16x36xf32> to vector<8x16xf32>
    %111 = vector.shape_cast %110 : vector<8x16xf32> to vector<8x16x1xf32>
    %cst_62 = arith.constant 3.600000e+01 : f32
    %112 = vector.broadcast %cst_62 : f32 to vector<8x16x1xf32>
    %113 = arith.divf %111, %112 : vector<8x16x1xf32>
    %114 = vector.broadcast %106 : vector<8x16x1xf32> to vector<8x16x36xf32>
    %115 = arith.subf %100, %114 : vector<8x16x36xf32>
    %cst_63 = arith.constant 1.000000e-03 : f32
    %116 = vector.broadcast %cst_63 : f32 to vector<8x16x1xf32>
    %117 = arith.addf %113, %116 : vector<8x16x1xf32>
    %118 = math.rsqrt %117 : vector<8x16x1xf32>
    %119 = vector.broadcast %118 : vector<8x16x1xf32> to vector<8x16x36xf32>
    %120 = arith.mulf %115, %119 : vector<8x16x36xf32>
    %121 = arith.negf %120 : vector<8x16x36xf32>
    %122 = math.exp %121 : vector<8x16x36xf32>
    %cst_64 = arith.constant 1.000000e+00 : f32
    %123 = vector.broadcast %cst_64 : f32 to vector<8x16x36xf32>
    %124 = arith.addf %123, %122 : vector<8x16x36xf32>
    %125 = arith.divf %123, %124 : vector<8x16x36xf32>
    %126 = arith.mulf %125, %100 : vector<8x16x36xf32>
    %cst_65 = arith.constant 1.000000e+00 : f32
    %127 = vector.broadcast %cst_65 : f32 to vector<8x16x36xf32>
    %128 = arith.subf %127, %125 : vector<8x16x36xf32>
    %129 = vector.shape_cast %102 : vector<1x1xf32> to vector<1x1x1xf32>
    %130 = vector.broadcast %129 : vector<1x1x1xf32> to vector<8x16x36xf32>
    %131 = arith.mulf %128, %130 : vector<8x16x36xf32>
    %132 = arith.mulf %131, %100 : vector<8x16x36xf32>
    %133 = arith.addf %126, %132 : vector<8x16x36xf32>
    %c1_66 = arith.constant 1 : index
    %c0_67 = arith.constant 0 : index
    %c0_68 = arith.constant 0 : index
    %134 = vector.load %arg8[%c1_66, %c0_67, %c0_68] : memref<2x1x36xf32, #tpu.memory_space<vmem>>, vector<1x1x36xf32>
    %135 = vector.shape_cast %134 : vector<1x1x36xf32> to vector<1x36xf32>
    %136 = vector.shape_cast %135 : vector<1x36xf32> to vector<1x1x36xf32>
    %137 = vector.broadcast %136 : vector<1x1x36xf32> to vector<8x16x36xf32>
    %138 = arith.mulf %133, %137 : vector<8x16x36xf32>
    %cst_69 = arith.constant dense<0.000000e+00> : vector<8x16xf32>
    %139 = vector.multi_reduction <add>, %138, %cst_69 [2] : vector<8x16x36xf32> to vector<8x16xf32>
    %140 = vector.shape_cast %139 : vector<8x16xf32> to vector<8x16x1xf32>
    %c1_70 = arith.constant 1 : index
    %c0_71 = arith.constant 0 : index
    %c0_72 = arith.constant 0 : index
    %141 = vector.load %arg9[%c1_70, %c0_71, %c0_72] : memref<2x1x1xf32, #tpu.memory_space<vmem>>, vector<1x1x1xf32>
    %142 = vector.shape_cast %141 : vector<1x1x1xf32> to vector<1x1xf32>
    %143 = vector.shape_cast %142 : vector<1x1xf32> to vector<1x1x1xf32>
    %144 = vector.broadcast %143 : vector<1x1x1xf32> to vector<8x16x1xf32>
    %145 = arith.addf %140, %144 : vector<8x16x1xf32>
    %146 = vector.broadcast %145 : vector<8x16x1xf32> to vector<8x16x8xf32>
    %147 = arith.mulf %146, %79 : vector<8x16x8xf32>
    %cst_73 = arith.constant dense<0.000000e+00> : vector<8x8xf32>
    %148 = vector.multi_reduction <add>, %147, %cst_73 [1] : vector<8x16x8xf32> to vector<8x8xf32>
    %149 = vector.extract_strided_slice %0 {offsets = [8, 0], sizes = [8, 64], strides = [1, 1]} : vector<56x64xf32> to vector<8x64xf32>
    %cst_74 = arith.constant dense<0.000000e+00> : vector<8x64xf32>
    %150 = tpu.matmul %148, %149, %cst_74 {dimension_numbers = #tpu.dot_dimension_numbers<[1], [0], [0], [1], [0, 0, 1, 1], [], []>} : vector<8x8xf32>, vector<8x64xf32>, vector<8x64xf32> -> vector<8x64xf32>
    %151 = arith.addf %77, %150 : vector<8x64xf32>
    %c0_75 = arith.constant 0 : index
    %c0_76 = arith.constant 0 : index
    %c0_77 = arith.constant 0 : index
    %152 = vector.load %arg2[%c0_75, %c0_76, %c0_77] : memref<2x8x8xf32, #tpu.memory_space<vmem>>, vector<1x8x8xf32>
    %153 = vector.shape_cast %152 : vector<1x8x8xf32> to vector<8x8xf32>
    %154 = vector.extract_strided_slice %0 {offsets = [16, 0], sizes = [8, 64], strides = [1, 1]} : vector<56x64xf32> to vector<8x64xf32>
    %cst_78 = arith.constant dense<0.000000e+00> : vector<8x64xf32>
    %155 = tpu.matmul %153, %154, %cst_78 {dimension_numbers = #tpu.dot_dimension_numbers<[1], [0], [0], [1], [0, 0, 1, 1], [], []>} : vector<8x8xf32>, vector<8x64xf32>, vector<8x64xf32> -> vector<8x64xf32>
    %156 = arith.addf %151, %155 : vector<8x64xf32>
    %c1_79 = arith.constant 1 : index
    %c0_80 = arith.constant 0 : index
    %c0_81 = arith.constant 0 : index
    %157 = vector.load %arg2[%c1_79, %c0_80, %c0_81] : memref<2x8x8xf32, #tpu.memory_space<vmem>>, vector<1x8x8xf32>
    %158 = vector.shape_cast %157 : vector<1x8x8xf32> to vector<8x8xf32>
    %159 = vector.extract_strided_slice %0 {offsets = [24, 0], sizes = [8, 64], strides = [1, 1]} : vector<56x64xf32> to vector<8x64xf32>
    %cst_82 = arith.constant dense<0.000000e+00> : vector<8x64xf32>
    %160 = tpu.matmul %158, %159, %cst_82 {dimension_numbers = #tpu.dot_dimension_numbers<[1], [0], [0], [1], [0, 0, 1, 1], [], []>} : vector<8x8xf32>, vector<8x64xf32>, vector<8x64xf32> -> vector<8x64xf32>
    %161 = arith.addf %156, %160 : vector<8x64xf32>
    %c0_83 = arith.constant 0 : index
    %c0_84 = arith.constant 0 : index
    %c0_85 = arith.constant 0 : index
    %162 = vector.load %arg3[%c0_83, %c0_84, %c0_85] : memref<3x8x8xf32, #tpu.memory_space<vmem>>, vector<1x8x8xf32>
    %163 = vector.shape_cast %162 : vector<1x8x8xf32> to vector<8x8xf32>
    %164 = vector.extract_strided_slice %0 {offsets = [32, 0], sizes = [8, 64], strides = [1, 1]} : vector<56x64xf32> to vector<8x64xf32>
    %cst_86 = arith.constant dense<0.000000e+00> : vector<8x64xf32>
    %165 = tpu.matmul %163, %164, %cst_86 {dimension_numbers = #tpu.dot_dimension_numbers<[1], [0], [0], [1], [0, 0, 1, 1], [], []>} : vector<8x8xf32>, vector<8x64xf32>, vector<8x64xf32> -> vector<8x64xf32>
    %166 = arith.addf %161, %165 : vector<8x64xf32>
    %c1_87 = arith.constant 1 : index
    %c0_88 = arith.constant 0 : index
    %c0_89 = arith.constant 0 : index
    %167 = vector.load %arg3[%c1_87, %c0_88, %c0_89] : memref<3x8x8xf32, #tpu.memory_space<vmem>>, vector<1x8x8xf32>
    %168 = vector.shape_cast %167 : vector<1x8x8xf32> to vector<8x8xf32>
    %169 = vector.extract_strided_slice %0 {offsets = [40, 0], sizes = [8, 64], strides = [1, 1]} : vector<56x64xf32> to vector<8x64xf32>
    %cst_90 = arith.constant dense<0.000000e+00> : vector<8x64xf32>
    %170 = tpu.matmul %168, %169, %cst_90 {dimension_numbers = #tpu.dot_dimension_numbers<[1], [0], [0], [1], [0, 0, 1, 1], [], []>} : vector<8x8xf32>, vector<8x64xf32>, vector<8x64xf32> -> vector<8x64xf32>
    %171 = arith.addf %166, %170 : vector<8x64xf32>
    %c2 = arith.constant 2 : index
    %c0_91 = arith.constant 0 : index
    %c0_92 = arith.constant 0 : index
    %172 = vector.load %arg3[%c2, %c0_91, %c0_92] : memref<3x8x8xf32, #tpu.memory_space<vmem>>, vector<1x8x8xf32>
    %173 = vector.shape_cast %172 : vector<1x8x8xf32> to vector<8x8xf32>
    %174 = vector.extract_strided_slice %0 {offsets = [48, 0], sizes = [8, 64], strides = [1, 1]} : vector<56x64xf32> to vector<8x64xf32>
    %cst_93 = arith.constant dense<0.000000e+00> : vector<8x64xf32>
    %175 = tpu.matmul %173, %174, %cst_93 {dimension_numbers = #tpu.dot_dimension_numbers<[1], [0], [0], [1], [0, 0, 1, 1], [], []>} : vector<8x8xf32>, vector<8x64xf32>, vector<8x64xf32> -> vector<8x64xf32>
    %176 = arith.addf %171, %175 : vector<8x64xf32>
    %c0_94 = arith.constant 0 : index
    %c0_95 = arith.constant 0 : index
    %177 = vector.load %arg12[%c0_94, %c0_95] : memref<1x1xf32, #tpu.memory_space<vmem>>, vector<1x1xf32>
    %cst_96 = arith.constant dense<0.000000e+00> : vector<8xf32>
    %178 = vector.multi_reduction <add>, %176, %cst_96 [1] : vector<8x64xf32> to vector<8xf32>
    %179 = vector.shape_cast %178 : vector<8xf32> to vector<8x1xf32>
    %cst_97 = arith.constant 6.400000e+01 : f32
    %180 = vector.broadcast %cst_97 : f32 to vector<8x1xf32>
    %181 = arith.divf %179, %180 : vector<8x1xf32>
    %182 = vector.broadcast %181 : vector<8x1xf32> to vector<8x64xf32>
    %183 = arith.subf %176, %182 : vector<8x64xf32>
    %184 = arith.mulf %183, %183 : vector<8x64xf32>
    %cst_98 = arith.constant dense<0.000000e+00> : vector<8xf32>
    %185 = vector.multi_reduction <add>, %184, %cst_98 [1] : vector<8x64xf32> to vector<8xf32>
    %186 = vector.shape_cast %185 : vector<8xf32> to vector<8x1xf32>
    %cst_99 = arith.constant 6.400000e+01 : f32
    %187 = vector.broadcast %cst_99 : f32 to vector<8x1xf32>
    %188 = arith.divf %186, %187 : vector<8x1xf32>
    %189 = vector.broadcast %181 : vector<8x1xf32> to vector<8x64xf32>
    %190 = arith.subf %176, %189 : vector<8x64xf32>
    %cst_100 = arith.constant 1.000000e-03 : f32
    %191 = vector.broadcast %cst_100 : f32 to vector<8x1xf32>
    %192 = arith.addf %188, %191 : vector<8x1xf32>
    %193 = math.rsqrt %192 : vector<8x1xf32>
    %194 = vector.broadcast %193 : vector<8x1xf32> to vector<8x64xf32>
    %195 = arith.mulf %190, %194 : vector<8x64xf32>
    %196 = arith.negf %195 : vector<8x64xf32>
    %197 = math.exp %196 : vector<8x64xf32>
    %cst_101 = arith.constant 1.000000e+00 : f32
    %198 = vector.broadcast %cst_101 : f32 to vector<8x64xf32>
    %199 = arith.addf %198, %197 : vector<8x64xf32>
    %200 = arith.divf %198, %199 : vector<8x64xf32>
    %201 = arith.mulf %200, %176 : vector<8x64xf32>
    %cst_102 = arith.constant 1.000000e+00 : f32
    %202 = vector.broadcast %cst_102 : f32 to vector<8x64xf32>
    %203 = arith.subf %202, %200 : vector<8x64xf32>
    %204 = vector.broadcast %177 : vector<1x1xf32> to vector<8x64xf32>
    %205 = arith.mulf %203, %204 : vector<8x64xf32>
    %206 = arith.mulf %205, %176 : vector<8x64xf32>
    %207 = arith.addf %201, %206 : vector<8x64xf32>
    %c0_103 = arith.constant 0 : index
    %c0_104 = arith.constant 0 : index
    %208 = vector.load %arg13[%c0_103, %c0_104] : memref<64x32xf32, #tpu.memory_space<vmem>>, vector<64x32xf32>
    %cst_105 = arith.constant dense<0.000000e+00> : vector<8x32xf32>
    %209 = tpu.matmul %207, %208, %cst_105 {dimension_numbers = #tpu.dot_dimension_numbers<[1], [0], [0], [1], [0, 0, 1, 1], [], []>} : vector<8x64xf32>, vector<64x32xf32>, vector<8x32xf32> -> vector<8x32xf32>
    %c0_106 = arith.constant 0 : index
    %c0_107 = arith.constant 0 : index
    %210 = vector.load %arg14[%c0_106, %c0_107] : memref<1x32xf32, #tpu.memory_space<vmem>>, vector<1x32xf32>
    %211 = vector.broadcast %210 : vector<1x32xf32> to vector<8x32xf32>
    %212 = arith.addf %209, %211 : vector<8x32xf32>
    %c0_108 = arith.constant 0 : index
    %c0_109 = arith.constant 0 : index
    %213 = vector.load %arg15[%c0_108, %c0_109] : memref<1x1xf32, #tpu.memory_space<vmem>>, vector<1x1xf32>
    %cst_110 = arith.constant dense<0.000000e+00> : vector<8xf32>
    %214 = vector.multi_reduction <add>, %212, %cst_110 [1] : vector<8x32xf32> to vector<8xf32>
    %215 = vector.shape_cast %214 : vector<8xf32> to vector<8x1xf32>
    %cst_111 = arith.constant 3.200000e+01 : f32
    %216 = vector.broadcast %cst_111 : f32 to vector<8x1xf32>
    %217 = arith.divf %215, %216 : vector<8x1xf32>
    %218 = vector.broadcast %217 : vector<8x1xf32> to vector<8x32xf32>
    %219 = arith.subf %212, %218 : vector<8x32xf32>
    %220 = arith.mulf %219, %219 : vector<8x32xf32>
    %cst_112 = arith.constant dense<0.000000e+00> : vector<8xf32>
    %221 = vector.multi_reduction <add>, %220, %cst_112 [1] : vector<8x32xf32> to vector<8xf32>
    %222 = vector.shape_cast %221 : vector<8xf32> to vector<8x1xf32>
    %cst_113 = arith.constant 3.200000e+01 : f32
    %223 = vector.broadcast %cst_113 : f32 to vector<8x1xf32>
    %224 = arith.divf %222, %223 : vector<8x1xf32>
    %225 = vector.broadcast %217 : vector<8x1xf32> to vector<8x32xf32>
    %226 = arith.subf %212, %225 : vector<8x32xf32>
    %cst_114 = arith.constant 1.000000e-03 : f32
    %227 = vector.broadcast %cst_114 : f32 to vector<8x1xf32>
    %228 = arith.addf %224, %227 : vector<8x1xf32>
    %229 = math.rsqrt %228 : vector<8x1xf32>
    %230 = vector.broadcast %229 : vector<8x1xf32> to vector<8x32xf32>
    %231 = arith.mulf %226, %230 : vector<8x32xf32>
    %232 = arith.negf %231 : vector<8x32xf32>
    %233 = math.exp %232 : vector<8x32xf32>
    %cst_115 = arith.constant 1.000000e+00 : f32
    %234 = vector.broadcast %cst_115 : f32 to vector<8x32xf32>
    %235 = arith.addf %234, %233 : vector<8x32xf32>
    %236 = arith.divf %234, %235 : vector<8x32xf32>
    %237 = arith.mulf %236, %212 : vector<8x32xf32>
    %cst_116 = arith.constant 1.000000e+00 : f32
    %238 = vector.broadcast %cst_116 : f32 to vector<8x32xf32>
    %239 = arith.subf %238, %236 : vector<8x32xf32>
    %240 = vector.broadcast %213 : vector<1x1xf32> to vector<8x32xf32>
    %241 = arith.mulf %239, %240 : vector<8x32xf32>
    %242 = arith.mulf %241, %212 : vector<8x32xf32>
    %243 = arith.addf %237, %242 : vector<8x32xf32>
    %c0_117 = arith.constant 0 : index
    %c0_118 = arith.constant 0 : index
    %244 = vector.load %arg16[%c0_117, %c0_118] : memref<1x32xf32, #tpu.memory_space<vmem>>, vector<1x32xf32>
    %cst_119 = arith.constant dense<0.000000e+00> : vector<1x8xf32>
    %245 = tpu.matmul %244, %243, %cst_119 {dimension_numbers = #tpu.dot_dimension_numbers<[1], [1], [0], [0], [0, 0, 1, 0], [], []>} : vector<1x32xf32>, vector<8x32xf32>, vector<1x8xf32> -> vector<1x8xf32>
    %c0_120 = arith.constant 0 : index
    %c0_121 = arith.constant 0 : index
    %246 = vector.load %arg17[%c0_120, %c0_121] : memref<1x1xf32, #tpu.memory_space<vmem>>, vector<1x1xf32>
    %247 = vector.broadcast %246 : vector<1x1xf32> to vector<1x8xf32>
    %248 = arith.addf %245, %247 : vector<1x8xf32>
    %249 = arith.negf %248 : vector<1x8xf32>
    %250 = math.exp %249 : vector<1x8xf32>
    %cst_122 = arith.constant 1.000000e+00 : f32
    %251 = vector.broadcast %cst_122 : f32 to vector<1x8xf32>
    %252 = arith.addf %251, %250 : vector<1x8xf32>
    %253 = arith.divf %251, %252 : vector<1x8xf32>
    %c0_123 = arith.constant 0 : index
    %c0_124 = arith.constant 0 : index
    %254 = vector.load %arg18[%c0_123, %c0_124] : memref<1x8xf32, #tpu.memory_space<vmem>>, vector<1x8xf32>
    tpu.vector_store %arg18[%c0_123, %c0_124], %253 {strides = array<i32>} : memref<1x8xf32, #tpu.memory_space<vmem>>, vector<1x8xf32>,
    return
  }
  func.func @transform_0(%arg0: i32) -> (i32, i32, i32, i32) {
    %c0_i32 = arith.constant 0 : i32
    %c0_i32_0 = arith.constant 0 : i32
    %c0_i32_1 = arith.constant 0 : i32
    %c0_i32_2 = arith.constant 0 : i32
    return %c0_i32, %arg0, %c0_i32_0, %c0_i32_1 : i32, i32, i32, i32
  }
  func.func @transform_1(%arg0: i32) -> (i32, i32, i32) {
    %c0_i32 = arith.constant 0 : i32
    %c0_i32_0 = arith.constant 0 : i32
    %c0_i32_1 = arith.constant 0 : i32
    return %c0_i32, %arg0, %c0_i32_0 : i32, i32, i32
  }
  func.func @transform_2(%arg0: i32) -> (i32, i32, i32) {
    %c0_i32 = arith.constant 0 : i32
    %c0_i32_0 = arith.constant 0 : i32
    %c0_i32_1 = arith.constant 0 : i32
    return %c0_i32, %arg0, %c0_i32_0 : i32, i32, i32
  }
  func.func @transform_3(%arg0: i32) -> (i32, i32, i32) {
    %c0_i32 = arith.constant 0 : i32
    %c0_i32_0 = arith.constant 0 : i32
    %c0_i32_1 = arith.constant 0 : i32
    %c0_i32_2 = arith.constant 0 : i32
    return %c0_i32, %c0_i32_0, %c0_i32_1 : i32, i32, i32
  }
  func.func @transform_4(%arg0: i32) -> (i32, i32, i32) {
    %c0_i32 = arith.constant 0 : i32
    %c0_i32_0 = arith.constant 0 : i32
    %c0_i32_1 = arith.constant 0 : i32
    %c0_i32_2 = arith.constant 0 : i32
    return %c0_i32, %c0_i32_0, %c0_i32_1 : i32, i32, i32
  }
  func.func @transform_5(%arg0: i32) -> (i32, i32, i32) {
    %c0_i32 = arith.constant 0 : i32
    %c0_i32_0 = arith.constant 0 : i32
    %c0_i32_1 = arith.constant 0 : i32
    %c0_i32_2 = arith.constant 0 : i32
    return %c0_i32, %c0_i32_0, %c0_i32_1 : i32, i32, i32
  }
  func.func @transform_6(%arg0: i32) -> (i32, i32, i32) {
    %c0_i32 = arith.constant 0 : i32
    %c0_i32_0 = arith.constant 0 : i32
    %c0_i32_1 = arith.constant 0 : i32
    %c0_i32_2 = arith.constant 0 : i32
    return %c0_i32, %c0_i32_0, %c0_i32_1 : i32, i32, i32
  }
  func.func @transform_7(%arg0: i32) -> (i32, i32, i32) {
    %c0_i32 = arith.constant 0 : i32
    %c0_i32_0 = arith.constant 0 : i32
    %c0_i32_1 = arith.constant 0 : i32
    %c0_i32_2 = arith.constant 0 : i32
    return %c0_i32, %c0_i32_0, %c0_i32_1 : i32, i32, i32
  }
  func.func @transform_8(%arg0: i32) -> (i32, i32, i32) {
    %c0_i32 = arith.constant 0 : i32
    %c0_i32_0 = arith.constant 0 : i32
    %c0_i32_1 = arith.constant 0 : i32
    %c0_i32_2 = arith.constant 0 : i32
    return %c0_i32, %c0_i32_0, %c0_i32_1 : i32, i32, i32
  }
  func.func @transform_9(%arg0: i32) -> (i32, i32) {
    %c0_i32 = arith.constant 0 : i32
    %c0_i32_0 = arith.constant 0 : i32
    %c0_i32_1 = arith.constant 0 : i32
    return %c0_i32, %c0_i32_0 : i32, i32
  }
  func.func @transform_10(%arg0: i32) -> (i32, i32) {
    %c0_i32 = arith.constant 0 : i32
    %c0_i32_0 = arith.constant 0 : i32
    %c0_i32_1 = arith.constant 0 : i32
    return %c0_i32, %c0_i32_0 : i32, i32
  }
  func.func @transform_11(%arg0: i32) -> (i32, i32) {
    %c0_i32 = arith.constant 0 : i32
    %c0_i32_0 = arith.constant 0 : i32
    %c0_i32_1 = arith.constant 0 : i32
    return %c0_i32, %c0_i32_0 : i32, i32
  }
  func.func @transform_12(%arg0: i32) -> (i32, i32) {
    %c0_i32 = arith.constant 0 : i32
    %c0_i32_0 = arith.constant 0 : i32
    %c0_i32_1 = arith.constant 0 : i32
    return %c0_i32, %c0_i32_0 : i32, i32
  }
  func.func @transform_13(%arg0: i32) -> (i32, i32) {
    %c0_i32 = arith.constant 0 : i32
    %c0_i32_0 = arith.constant 0 : i32
    %c0_i32_1 = arith.constant 0 : i32
    return %c0_i32, %c0_i32_0 : i32, i32
  }
  func.func @transform_14(%arg0: i32) -> (i32, i32) {
    %c0_i32 = arith.constant 0 : i32
    %c0_i32_0 = arith.constant 0 : i32
    %c0_i32_1 = arith.constant 0 : i32
    return %c0_i32, %c0_i32_0 : i32, i32
  }
  func.func @transform_15(%arg0: i32) -> (i32, i32) {
    %c0_i32 = arith.constant 0 : i32
    %c0_i32_0 = arith.constant 0 : i32
    %c0_i32_1 = arith.constant 0 : i32
    return %c0_i32, %c0_i32_0 : i32, i32
  }
  func.func @transform_16(%arg0: i32) -> (i32, i32) {
    %c0_i32 = arith.constant 0 : i32
    %c0_i32_0 = arith.constant 0 : i32
    %c0_i32_1 = arith.constant 0 : i32
    return %c0_i32, %c0_i32_0 : i32, i32
  }
  func.func @transform_17(%arg0: i32) -> (i32, i32) {
    %c0_i32 = arith.constant 0 : i32
    %c0_i32_0 = arith.constant 0 : i32
    return %c0_i32, %arg0 : i32, i32
  }
}

</mosaic_0001>

<llo_original>
// kernel: tpu_custom_call.1
$region0: #{tpu_custom_call.1}
  #allocation0 [shape = 'u32[]', space=smem, size = 0x4, offset = 0x4, fixed_abs, tag = 'smem constant byte address 0x4 - core index']
  #allocation1 [shape = 'u32[72,128]{1,0:T(1,128)}', space=vmem, size = 0x9000, scoped, tag = 'internal scratch']
  #allocation2 [shape = 'f32[1,1]{1,0:T(1,128)S(1)}', space=vmem, size = 0x200, scoped, tag = 'scoped memory for tpu_custom_call.1']
  #allocation3 [shape = 'f32[1,1]{1,0:T(1,128)S(1)}', space=vmem, size = 0x200, scoped, tag = 'scoped memory for tpu_custom_call.1']
  #allocation4 [shape = 'f32[1,1]{1,0:T(1,128)S(1)}', space=vmem, size = 0x200, scoped, tag = 'scoped memory for tpu_custom_call.1']
  %s0 = inlined_call_operand.vmem [shape: f32[2,8,16,8], index: 0, kind: input, shape index: {}]
  %s1 = inlined_call_operand.vmem [shape: f32[2,8,8], index: 1, kind: input, shape index: {}]
  %s2 = inlined_call_operand.vmem [shape: f32[3,8,8], index: 2, kind: input, shape index: {}]
  %s3 = inlined_call_operand.vmem [shape: f32[2,8,36], index: 3, kind: input, shape index: {}]
  %s4 = inlined_call_operand.vmem [shape: f32[2,16,36], index: 4, kind: input, shape index: {}]
  %s5 = inlined_call_operand.vmem [shape: f32[2,1,36], index: 5, kind: input, shape index: {}]
  %s6 = inlined_call_operand.vmem [shape: f32[2,1,1], index: 6, kind: input, shape index: {}]
  %s7 = inlined_call_operand.vmem [shape: f32[2,1,36], index: 7, kind: input, shape index: {}]
  %s8 = inlined_call_operand.vmem [shape: f32[2,1,1], index: 8, kind: input, shape index: {}]
  %s9 = inlined_call_operand.vmem [shape: f32[56,64], index: 9, kind: input, shape index: {}]
  %s10 = inlined_call_operand.vmem [shape: f32[1,64], index: 10, kind: input, shape index: {}]
  %s11 = inlined_call_operand.<no memory space> [shape: f32[1,1], index: 11, kind: input, shape index: {}]
  %s12 = inlined_call_operand.vmem [shape: f32[64,32], index: 12, kind: input, shape index: {}]
  %s13 = inlined_call_operand.vmem [shape: f32[1,32], index: 13, kind: input, shape index: {}]
  %s14 = inlined_call_operand.<no memory space> [shape: f32[1,1], index: 14, kind: input, shape index: {}]
  %s15 = inlined_call_operand.vmem [shape: f32[1,32], index: 15, kind: input, shape index: {}]
  %s16 = inlined_call_operand.<no memory space> [shape: f32[1,1], index: 16, kind: input, shape index: {}]
  %s17 = inlined_call_operand.hbm [shape: f32[1,8], index: 17, kind: output, shape index: {}]
  %s18 = sld [smem:[#allocation0]]
  $region78: #{tpu_custom_call.1} parent=0
    _
  %s20 = ssub.s32 1, %s18
  %s21 = scalar_select 0, %s20, %s18
  %v22 = vstv %s11
  %23 = vst [vmem:[#allocation2] sm:$0x1] %v22
  %v24 = vstv %s14
  %25 = vst [vmem:[#allocation3] sm:$0x1] %v24
  %v26 = vstv %s16
  %27 = vst [vmem:[#allocation4] sm:$0x1] %v26
  $region1: #{tpu_custom_call.1} parent=0
    #allocation5 [shape = 'u8[512]{0}', space=vmem, size = 0x400, scoped, tag = 'output window, operand 0, single buffered']
    #allocation6 [shape = 's32[1]{0}', space=sflag, size = 0x4, scoped, tag = 'scoped memory for tpu_custom_call.1']
    %28 = vsyncpa [#allocation6], 0
    // Predicated region
    $region2: #{tpu_custom_call.1} parent=1 // pred_check
      _
    $region3: #{tpu_custom_call.1} parent=1 // pred_check_branch
      %30 = sbr.rel (0) target = $region5
    $region4: #{tpu_custom_call.1} parent=1 // pred_region
      _
    $region5: #{tpu_custom_call.1} parent=1 // pred_fallthru
      _
    // Predicated region
    $region6: #{tpu_custom_call.1} parent=1 // pred_check
      _
    $region7: #{tpu_custom_call.1} parent=1 // pred_check_branch
      %32 = sbr.rel (0) target = $region9
    $region8: #{tpu_custom_call.1} parent=1 // pred_region
      _
    $region9: #{tpu_custom_call.1} parent=1 // pred_fallthru
      _
    // Predicated region
    $region10: #{tpu_custom_call.1} parent=1 // pred_check
      _
    $region11: #{tpu_custom_call.1} parent=1 // pred_check_branch
      %34 = sbr.rel (0) target = $region13
    $region12: #{tpu_custom_call.1} parent=1 // pred_region
      _
    $region13: #{tpu_custom_call.1} parent=1 // pred_fallthru
      _
    // Predicated region
    $region14: #{tpu_custom_call.1} parent=1 // pred_check
      _
    $region15: #{tpu_custom_call.1} parent=1 // pred_check_branch
      %36 = sbr.rel (0) target = $region17
    $region16: #{tpu_custom_call.1} parent=1 // pred_region
      _
    $region17: #{tpu_custom_call.1} parent=1 // pred_fallthru
      _
    // Predicated region
    $region18: #{tpu_custom_call.1} parent=1 // pred_check
      _
    $region19: #{tpu_custom_call.1} parent=1 // pred_check_branch
      %38 = sbr.rel (0) target = $region21
    $region20: #{tpu_custom_call.1} parent=1 // pred_region
      _
    $region21: #{tpu_custom_call.1} parent=1 // pred_fallthru
      _
    // Predicated region
    $region22: #{tpu_custom_call.1} parent=1 // pred_check
      _
    $region23: #{tpu_custom_call.1} parent=1 // pred_check_branch
      %40 = sbr.rel (0) target = $region25
    $region24: #{tpu_custom_call.1} parent=1 // pred_region
      _
    $region25: #{tpu_custom_call.1} parent=1 // pred_fallthru
      _
    // Predicated region
    $region26: #{tpu_custom_call.1} parent=1 // pred_check
      _
    $region27: #{tpu_custom_call.1} parent=1 // pred_check_branch
      %42 = sbr.rel (0) target = $region29
    $region28: #{tpu_custom_call.1} parent=1 // pred_region
      _
    $region29: #{tpu_custom_call.1} parent=1 // pred_fallthru
      _
    // Predicated region
    $region30: #{tpu_custom_call.1} parent=1 // pred_check
      _
    $region31: #{tpu_custom_call.1} parent=1 // pred_check_branch
      %44 = sbr.rel (0) target = $region33
    $region32: #{tpu_custom_call.1} parent=1 // pred_region
      _
    $region33: #{tpu_custom_call.1} parent=1 // pred_fallthru
      _
    // Predicated region
    $region34: #{tpu_custom_call.1} parent=1 // pred_check
      _
    $region35: #{tpu_custom_call.1} parent=1 // pred_check_branch
      %46 = sbr.rel (0) target = $region37
    $region36: #{tpu_custom_call.1} parent=1 // pred_region
      _
    $region37: #{tpu_custom_call.1} parent=1 // pred_fallthru
      _
    // Predicated region
    $region38: #{tpu_custom_call.1} parent=1 // pred_check
      _
    $region39: #{tpu_custom_call.1} parent=1 // pred_check_branch
      %48 = sbr.rel (0) target = $region41
    $region40: #{tpu_custom_call.1} parent=1 // pred_region
      _
    $region41: #{tpu_custom_call.1} parent=1 // pred_fallthru
      _
    // Predicated region
    $region42: #{tpu_custom_call.1} parent=1 // pred_check
      _
    $region43: #{tpu_custom_call.1} parent=1 // pred_check_branch
      %50 = sbr.rel (0) target = $region45
    $region44: #{tpu_custom_call.1} parent=1 // pred_region
      _
    $region45: #{tpu_custom_call.1} parent=1 // pred_fallthru
      _
    // Predicated region
    $region46: #{tpu_custom_call.1} parent=1 // pred_check
      _
    $region47: #{tpu_custom_call.1} parent=1 // pred_check_branch
      %52 = sbr.rel (0) target = $region49
    $region48: #{tpu_custom_call.1} parent=1 // pred_region
      _
    $region49: #{tpu_custom_call.1} parent=1 // pred_fallthru
      _
    // Predicated region
    $region50: #{tpu_custom_call.1} parent=1 // pred_check
      _
    $region51: #{tpu_custom_call.1} parent=1 // pred_check_branch
      %54 = sbr.rel (0) target = $region53
    $region52: #{tpu_custom_call.1} parent=1 // pred_region
      _
    $region53: #{tpu_custom_call.1} parent=1 // pred_fallthru
      _
    // Predicated region
    $region54: #{tpu_custom_call.1} parent=1 // pred_check
      _
    $region55: #{tpu_custom_call.1} parent=1 // pred_check_branch
      %56 = sbr.rel (0) target = $region57
    $region56: #{tpu_custom_call.1} parent=1 // pred_region
      _
    $region57: #{tpu_custom_call.1} parent=1 // pred_fallthru
      _
    // Predicated region
    $region58: #{tpu_custom_call.1} parent=1 // pred_check
      _
    $region59: #{tpu_custom_call.1} parent=1 // pred_check_branch
      %58 = sbr.rel (0) target = $region61
    $region60: #{tpu_custom_call.1} parent=1 // pred_region
      _
    $region61: #{tpu_custom_call.1} parent=1 // pred_fallthru
      _
    // Predicated region
    $region62: #{tpu_custom_call.1} parent=1 // pred_check
      _
    $region63: #{tpu_custom_call.1} parent=1 // pred_check_branch
      %60 = sbr.rel (0) target = $region65
    $region64: #{tpu_custom_call.1} parent=1 // pred_region
      _
    $region65: #{tpu_custom_call.1} parent=1 // pred_fallthru
      _
    // Predicated region
    $region66: #{tpu_custom_call.1} parent=1 // pred_check
      _
    $region67: #{tpu_custom_call.1} parent=1 // pred_check_branch
      %62 = sbr.rel (0) target = $region69
    $region68: #{tpu_custom_call.1} parent=1 // pred_region
      _
    $region69: #{tpu_custom_call.1} parent=1 // pred_fallthru
      _
    %v63 = vld [vmem:[%s9] sm:$0xff]
    %v64 = vld [vmem:[%s9 + $0x8] sm:$0xff]
    %v65 = vld [vmem:[%s9 + $0x10] sm:$0xff]
    %v66 = vld [vmem:[%s9 + $0x18] sm:$0xff]
    %v67 = vld [vmem:[%s9 + $0x20] sm:$0xff]
    %v68 = vld [vmem:[%s9 + $0x28] sm:$0xff]
    %v69 = vld [vmem:[%s9 + $0x30] sm:$0xff]
    %v70 = vld [vmem:[%s10] sm:$0x1]
    %v72 = vperm.slane %v70, 0
    %v74 = vld [vmem:[%s0] sm:$0xff]
    %v75 = vld [vmem:[%s0 + $0x8] sm:$0xff]
    %v76 = vld [vmem:[%s0 + $0x10] sm:$0xff]
    %v77 = vld [vmem:[%s0 + $0x18] sm:$0xff]
    %v78 = vld [vmem:[%s0 + $0x20] sm:$0xff]
    %v79 = vld [vmem:[%s0 + $0x28] sm:$0xff]
    %v80 = vld [vmem:[%s0 + $0x30] sm:$0xff]
    %v81 = vld [vmem:[%s0 + $0x38] sm:$0xff]
    %v82 = vld [vmem:[%s0 + $0x40] sm:$0xff]
    %v83 = vld [vmem:[%s0 + $0x48] sm:$0xff]
    %v84 = vld [vmem:[%s0 + $0x50] sm:$0xff]
    %v85 = vld [vmem:[%s0 + $0x58] sm:$0xff]
    %v86 = vld [vmem:[%s0 + $0x60] sm:$0xff]
    %v87 = vld [vmem:[%s0 + $0x68] sm:$0xff]
    %v88 = vld [vmem:[%s0 + $0x70] sm:$0xff]
    %v89 = vld [vmem:[%s0 + $0x78] sm:$0xff]
    %v90 = vld [vmem:[%s1] sm:$0xff]
    %v91 = vld [vmem:[%s3] sm:$0xff]
    %v92 = vld [vmem:[%s5] sm:$0x1]
    %v94 = vperm.slane %v92, 0
    %vm96 = vcmask 64512
    %v98 = vsel %vm96, %v90, 0
    %100 = vmatpush.msra.mxu0 0.0
    %101 = vmatpush.msra.mxu0 0.0
    %102 = vmatpush.msra.mxu0 0.0
    %103 = vmatpush.msra.mxu0 0.0
    %104 = vmatpush.msra.mxu0 0.0
    %105 = vmatpush.msra.mxu0 0.0
    %106 = vmatpush.msra.mxu0 0.0
    %107 = vmatpush.msra.mxu0 0.0
    %108 = vmatpush.msra.mxu0 0.0
    %109 = vmatpush.msra.mxu0 0.0
    %110 = vmatpush.msra.mxu0 0.0
    %111 = vmatpush.msra.mxu0 0.0
    %112 = vmatpush.msra.mxu0 0.0
    %113 = vmatpush.msra.mxu0 0.0
    %114 = vmatpush.msra.mxu0 0.0
    %115 = vmatpush.msra.mxu0 %v91
    %116 = vmatmul.f32.gmra.mxu0 %v98
    %v117 = vpop.f32.mrf.mxu0
    %v118 = vadd.f32 %v94, %v117
    %119 = vdwg.mxu0
    %v120 = vrot.slane %v90, 1
    %v121 = vrot.slane %v90, 2
    %v122 = vrot.slane %v90, 3
    %v123 = vrot.slane %v90, 4
    %v124 = vrot.slane %v90, 5
    %v125 = vrot.slane %v90, 6
    %v126 = vrot.slane %v90, 7
    %v127 = vperm.slane %v90, 0
    %v128 = vperm.slane %v120, 0
    %v129 = vperm.slane %v121, 0
    %v130 = vperm.slane %v122, 0
    %v131 = vperm.slane %v123, 0
    %v132 = vperm.slane %v124, 0
    %v133 = vperm.slane %v125, 0
    %v134 = vperm.slane %v126, 0
    %v143 = vmul.f32 %v74, %v127
    %v144 = vmul.f32 %v75, %v127
    %v145 = vmul.f32 %v76, %v128
    %v146 = vmul.f32 %v77, %v128
    %v147 = vmul.f32 %v78, %v129
    %v148 = vmul.f32 %v79, %v129
    %v149 = vmul.f32 %v80, %v130
    %v150 = vmul.f32 %v81, %v130
    %v151 = vmul.f32 %v82, %v131
    %v152 = vmul.f32 %v83, %v131
    %v153 = vmul.f32 %v84, %v132
    %v154 = vmul.f32 %v85, %v132
    %v155 = vmul.f32 %v86, %v133
    %v156 = vmul.f32 %v87, %v133
    %v157 = vmul.f32 %v88, %v134
    %v158 = vmul.f32 %v89, %v134
    %175 = vrot.lane.b32.xlu0 %v143, 8
    %v176 = vpop.permute.xlu0 %175
    %177 = vrot.lane.b32.xlu0 %v144, 8
    %v178 = vpop.permute.xlu0 %177
    %179 = vrot.lane.b32.xlu0 %v145, 8
    %v180 = vpop.permute.xlu0 %179
    %181 = vrot.lane.b32.xlu0 %v146, 8
    %v182 = vpop.permute.xlu0 %181
    %183 = vrot.lane.b32.xlu0 %v147, 8
    %v184 = vpop.permute.xlu0 %183
    %185 = vrot.lane.b32.xlu0 %v148, 8
    %v186 = vpop.permute.xlu0 %185
    %187 = vrot.lane.b32.xlu0 %v149, 8
    %v188 = vpop.permute.xlu0 %187
    %189 = vrot.lane.b32.xlu0 %v150, 8
    %v190 = vpop.permute.xlu0 %189
    %191 = vrot.lane.b32.xlu0 %v151, 8
    %v192 = vpop.permute.xlu0 %191
    %193 = vrot.lane.b32.xlu0 %v152, 8
    %v194 = vpop.permute.xlu0 %193
    %195 = vrot.lane.b32.xlu0 %v153, 8
    %v196 = vpop.permute.xlu0 %195
    %197 = vrot.lane.b32.xlu0 %v154, 8
    %v198 = vpop.permute.xlu0 %197
    %199 = vrot.lane.b32.xlu0 %v155, 8
    %v200 = vpop.permute.xlu0 %199
    %201 = vrot.lane.b32.xlu0 %v156, 8
    %v202 = vpop.permute.xlu0 %201
    %203 = vrot.lane.b32.xlu0 %v157, 8
    %v204 = vpop.permute.xlu0 %203
    %205 = vrot.lane.b32.xlu0 %v158, 8
    %v206 = vpop.permute.xlu0 %205
    %v223 = vsel %vm96, %v74, %v176
    %v224 = vsel %vm96, %v75, %v178
    %v225 = vsel %vm96, %v76, %v180
    %v226 = vsel %vm96, %v77, %v182
    %v227 = vsel %vm96, %v78, %v184
    %v228 = vsel %vm96, %v79, %v186
    %v229 = vsel %vm96, %v80, %v188
    %v230 = vsel %vm96, %v81, %v190
    %v231 = vsel %vm96, %v82, %v192
    %v232 = vsel %vm96, %v83, %v194
    %v233 = vsel %vm96, %v84, %v196
    %v234 = vsel %vm96, %v85, %v198
    %v235 = vsel %vm96, %v86, %v200
    %v236 = vsel %vm96, %v87, %v202
    %v237 = vsel %vm96, %v88, %v204
    %v238 = vsel %vm96, %v89, %v206
    %v239 = vld [vmem:[%s4] sm:$0xff]
    %v240 = vld [vmem:[%s4 + $0x8] sm:$0xff]
    %vm241 = vcmask 130048
    %v243 = vsel %vm241, %v223, 0
    %v246 = vsel %vm241, %v224, 0
    %v249 = vsel %vm241, %v225, 0
    %v252 = vsel %vm241, %v226, 0
    %v255 = vsel %vm241, %v227, 0
    %v258 = vsel %vm241, %v228, 0
    %v261 = vsel %vm241, %v229, 0
    %v264 = vsel %vm241, %v230, 0
    %v267 = vsel %vm241, %v231, 0
    %v270 = vsel %vm241, %v232, 0
    %v273 = vsel %vm241, %v233, 0
    %v276 = vsel %vm241, %v234, 0
    %v279 = vsel %vm241, %v235, 0
    %v282 = vsel %vm241, %v236, 0
    %v285 = vsel %vm241, %v237, 0
    %v288 = vsel %vm241, %v238, 0
    %290 = vmatpush.msra.mxu0 0.0
    %291 = vmatpush.msra.mxu0 0.0
    %292 = vmatpush.msra.mxu0 0.0
    %293 = vmatpush.msra.mxu0 0.0
    %294 = vmatpush.msra.mxu0 0.0
    %295 = vmatpush.msra.mxu0 0.0
    %296 = vmatpush.msra.mxu0 0.0
    %297 = vmatpush.msra.mxu0 0.0
    %298 = vmatpush.msra.mxu0 0.0
    %299 = vmatpush.msra.mxu0 0.0
    %300 = vmatpush.msra.mxu0 0.0
    %301 = vmatpush.msra.mxu0 0.0
    %302 = vmatpush.msra.mxu0 0.0
    %303 = vmatpush.msra.mxu0 0.0
    %304 = vmatpush.msra.mxu0 %v240
    %305 = vmatpush.msra.mxu0 %v239
    %306 = vmatmul.f32.gmra.mxu0 %v243
    %v307 = vpop.f32.mrf.mxu0
    %v308 = vadd.f32 0.0, %v307
    %309 = vmatmul.f32.gmra.mxu0 %v246
    %v310 = vpop.f32.mrf.mxu0
    %v311 = vadd.f32 0.0, %v310
    %312 = vmatmul.f32.gmra.mxu0 %v249
    %v313 = vpop.f32.mrf.mxu0
    %v314 = vadd.f32 0.0, %v313
    %315 = vmatmul.f32.gmra.mxu0 %v252
    %v316 = vpop.f32.mrf.mxu0
    %v317 = vadd.f32 0.0, %v316
    %318 = vmatmul.f32.gmra.mxu0 %v255
    %v319 = vpop.f32.mrf.mxu0
    %v320 = vadd.f32 0.0, %v319
    %321 = vmatmul.f32.gmra.mxu0 %v258
    %v322 = vpop.f32.mrf.mxu0
    %v323 = vadd.f32 0.0, %v322
    %324 = vmatmul.f32.gmra.mxu0 %v261
    %v325 = vpop.f32.mrf.mxu0
    %v326 = vadd.f32 0.0, %v325
    %327 = vmatmul.f32.gmra.mxu0 %v264
    %v328 = vpop.f32.mrf.mxu0
    %v329 = vadd.f32 0.0, %v328
    %330 = vmatmul.f32.gmra.mxu0 %v267
    %v331 = vpop.f32.mrf.mxu0
    %v332 = vadd.f32 0.0, %v331
    %333 = vmatmul.f32.gmra.mxu0 %v270
    %v334 = vpop.f32.mrf.mxu0
    %v335 = vadd.f32 0.0, %v334
    %336 = vmatmul.f32.gmra.mxu0 %v273
    %v337 = vpop.f32.mrf.mxu0
    %v338 = vadd.f32 0.0, %v337
    %339 = vmatmul.f32.gmra.mxu0 %v276
    %v340 = vpop.f32.mrf.mxu0
    %v341 = vadd.f32 0.0, %v340
    %342 = vmatmul.f32.gmra.mxu0 %v279
    %v343 = vpop.f32.mrf.mxu0
    %v344 = vadd.f32 0.0, %v343
    %345 = vmatmul.f32.gmra.mxu0 %v282
    %v346 = vpop.f32.mrf.mxu0
    %v347 = vadd.f32 0.0, %v346
    %348 = vmatmul.f32.gmra.mxu0 %v285
    %v349 = vpop.f32.mrf.mxu0
    %v350 = vadd.f32 0.0, %v349
    %351 = vmatmul.f32.gmra.mxu0 %v288
    %v352 = vpop.f32.mrf.mxu0
    %v353 = vadd.f32 0.0, %v352
    %354 = vdwg.mxu0
    %v356 = vrot.slane %v118, 1
    %v357 = vrot.slane %v118, 2
    %v358 = vrot.slane %v118, 3
    %v359 = vrot.slane %v118, 4
    %v360 = vrot.slane %v118, 5
    %v361 = vrot.slane %v118, 6
    %v362 = vrot.slane %v118, 7
    %v363 = vperm.slane %v118, 0
    %v364 = vperm.slane %v356, 0
    %v365 = vperm.slane %v357, 0
    %v366 = vperm.slane %v358, 0
    %v367 = vperm.slane %v359, 0
    %v368 = vperm.slane %v360, 0
    %v369 = vperm.slane %v361, 0
    %v370 = vperm.slane %v362, 0
    %v379 = vadd.f32 %v308, %v363
    %v380 = vadd.f32 %v311, %v363
    %v381 = vadd.f32 %v314, %v364
    %v382 = vadd.f32 %v317, %v364
    %v383 = vadd.f32 %v320, %v365
    %v384 = vadd.f32 %v323, %v365
    %v385 = vadd.f32 %v326, %v366
    %v386 = vadd.f32 %v329, %v366
    %v387 = vadd.f32 %v332, %v367
    %v388 = vadd.f32 %v335, %v367
    %v389 = vadd.f32 %v338, %v368
    %v390 = vadd.f32 %v341, %v368
    %v391 = vadd.f32 %v344, %v369
    %v392 = vadd.f32 %v347, %v369
    %v393 = vadd.f32 %v350, %v370
    %v394 = vadd.f32 %v353, %v370
    %v395 = vld [vmem:[%s6] sm:$0x1]
    %vm396 = vcmask 293888
    %v397 = vsel %vm396, %v379, 0.0
    %398 = vadd.xlane.f32.xlu0 %v397
    %v399 = vpop.xlane.xlu0 %398
    %v400 = vsel %vm396, %v380, 0.0
    %401 = vadd.xlane.f32.xlu0 %v400
    %v402 = vpop.xlane.xlu0 %401
    %v403 = vsel %vm396, %v381, 0.0
    %404 = vadd.xlane.f32.xlu0 %v403
    %v405 = vpop.xlane.xlu0 %404
    %v406 = vsel %vm396, %v382, 0.0
    %407 = vadd.xlane.f32.xlu0 %v406
    %v408 = vpop.xlane.xlu0 %407
    %v409 = vsel %vm396, %v383, 0.0
    %410 = vadd.xlane.f32.xlu0 %v409
    %v411 = vpop.xlane.xlu0 %410
    %v412 = vsel %vm396, %v384, 0.0
    %413 = vadd.xlane.f32.xlu0 %v412
    %v414 = vpop.xlane.xlu0 %413
    %v415 = vsel %vm396, %v385, 0.0
    %416 = vadd.xlane.f32.xlu0 %v415
    %v417 = vpop.xlane.xlu0 %416
    %v418 = vsel %vm396, %v386, 0.0
    %419 = vadd.xlane.f32.xlu0 %v418
    %v420 = vpop.xlane.xlu0 %419
    %v421 = vsel %vm396, %v387, 0.0
    %422 = vadd.xlane.f32.xlu0 %v421
    %v423 = vpop.xlane.xlu0 %422
    %v424 = vsel %vm396, %v388, 0.0
    %425 = vadd.xlane.f32.xlu0 %v424
    %v426 = vpop.xlane.xlu0 %425
    %v427 = vsel %vm396, %v389, 0.0
    %428 = vadd.xlane.f32.xlu0 %v427
    %v429 = vpop.xlane.xlu0 %428
    %v430 = vsel %vm396, %v390, 0.0
    %431 = vadd.xlane.f32.xlu0 %v430
    %v432 = vpop.xlane.xlu0 %431
    %v433 = vsel %vm396, %v391, 0.0
    %434 = vadd.xlane.f32.xlu0 %v433
    %v435 = vpop.xlane.xlu0 %434
    %v436 = vsel %vm396, %v392, 0.0
    %437 = vadd.xlane.f32.xlu0 %v436
    %v438 = vpop.xlane.xlu0 %437
    %v439 = vsel %vm396, %v393, 0.0
    %440 = vadd.xlane.f32.xlu0 %v439
    %v441 = vpop.xlane.xlu0 %440
    %v442 = vsel %vm396, %v394, 0.0
    %443 = vadd.xlane.f32.xlu0 %v442
    %v444 = vpop.xlane.xlu0 %443
    %v445 = vrcp.pop 36.0
    %v446 = vmul.f32 36.0, %v445
    %v447 = vsub.f32 1.0, %v446
    %v448 = vmul.f32 %v445, %v447
    %v449 = vadd.f32 %v445, %v448
    %vm450 = vweird.f32 %v445
    %v451 = vsel %vm450, %v445, %v449
    %v452 = vmul.f32 %v399, %v451
    %v453 = vmul.f32 %v402, %v451
    %v454 = vmul.f32 %v405, %v451
    %v455 = vmul.f32 %v408, %v451
    %v456 = vmul.f32 %v411, %v451
    %v457 = vmul.f32 %v414, %v451
    %v458 = vmul.f32 %v417, %v451
    %v459 = vmul.f32 %v420, %v451
    %v460 = vmul.f32 %v423, %v451
    %v461 = vmul.f32 %v426, %v451
    %v462 = vmul.f32 %v429, %v451
    %v463 = vmul.f32 %v432, %v451
    %v464 = vmul.f32 %v435, %v451
    %v465 = vmul.f32 %v438, %v451
    %v466 = vmul.f32 %v441, %v451
    %v467 = vmul.f32 %v444, %v451
    %v468 = vsub.f32 %v379, %v452
    %v469 = vsub.f32 %v380, %v453
    %v470 = vsub.f32 %v381, %v454
    %v471 = vsub.f32 %v382, %v455
    %v472 = vsub.f32 %v383, %v456
    %v473 = vsub.f32 %v384, %v457
    %v474 = vsub.f32 %v385, %v458
    %v475 = vsub.f32 %v386, %v459
    %v476 = vsub.f32 %v387, %v460
    %v477 = vsub.f32 %v388, %v461
    %v478 = vsub.f32 %v389, %v462
    %v479 = vsub.f32 %v390, %v463
    %v480 = vsub.f32 %v391, %v464
    %v481 = vsub.f32 %v392, %v465
    %v482 = vsub.f32 %v393, %v466
    %v483 = vsub.f32 %v394, %v467
    %v484 = vmul.f32 %v468, %v468
    %v485 = vmul.f32 %v469, %v469
    %v486 = vmul.f32 %v470, %v470
    %v487 = vmul.f32 %v471, %v471
    %v488 = vmul.f32 %v472, %v472
    %v489 = vmul.f32 %v473, %v473
    %v490 = vmul.f32 %v474, %v474
    %v491 = vmul.f32 %v475, %v475
    %v492 = vmul.f32 %v476, %v476
    %v493 = vmul.f32 %v477, %v477
    %v494 = vmul.f32 %v478, %v478
    %v495 = vmul.f32 %v479, %v479
    %v496 = vmul.f32 %v480, %v480
    %v497 = vmul.f32 %v481, %v481
    %v498 = vmul.f32 %v482, %v482
    %v499 = vmul.f32 %v483, %v483
    %v500 = vsel %vm396, %v484, 0.0
    %501 = vadd.xlane.f32.xlu0 %v500
    %v502 = vpop.xlane.xlu0 %501
    %v503 = vsel %vm396, %v485, 0.0
    %504 = vadd.xlane.f32.xlu0 %v503
    %v505 = vpop.xlane.xlu0 %504
    %v506 = vsel %vm396, %v486, 0.0
    %507 = vadd.xlane.f32.xlu0 %v506
    %v508 = vpop.xlane.xlu0 %507
    %v509 = vsel %vm396, %v487, 0.0
    %510 = vadd.xlane.f32.xlu0 %v509
    %v511 = vpop.xlane.xlu0 %510
    %v512 = vsel %vm396, %v488, 0.0
    %513 = vadd.xlane.f32.xlu0 %v512
    %v514 = vpop.xlane.xlu0 %513
    %v515 = vsel %vm396, %v489, 0.0
    %516 = vadd.xlane.f32.xlu0 %v515
    %v517 = vpop.xlane.xlu0 %516
    %v518 = vsel %vm396, %v490, 0.0
    %519 = vadd.xlane.f32.xlu0 %v518
    %v520 = vpop.xlane.xlu0 %519
    %v521 = vsel %vm396, %v491, 0.0
    %522 = vadd.xlane.f32.xlu0 %v521
    %v523 = vpop.xlane.xlu0 %522
    %v524 = vsel %vm396, %v492, 0.0
    %525 = vadd.xlane.f32.xlu0 %v524
    %v526 = vpop.xlane.xlu0 %525
    %v527 = vsel %vm396, %v493, 0.0
    %528 = vadd.xlane.f32.xlu0 %v527
    %v529 = vpop.xlane.xlu0 %528
    %v530 = vsel %vm396, %v494, 0.0
    %531 = vadd.xlane.f32.xlu0 %v530
    %v532 = vpop.xlane.xlu0 %531
    %v533 = vsel %vm396, %v495, 0.0
    %534 = vadd.xlane.f32.xlu0 %v533
    %v535 = vpop.xlane.xlu0 %534
    %v536 = vsel %vm396, %v496, 0.0
    %537 = vadd.xlane.f32.xlu0 %v536
    %v538 = vpop.xlane.xlu0 %537
    %v539 = vsel %vm396, %v497, 0.0
    %540 = vadd.xlane.f32.xlu0 %v539
    %v541 = vpop.xlane.xlu0 %540
    %v542 = vsel %vm396, %v498, 0.0
    %543 = vadd.xlane.f32.xlu0 %v542
    %v544 = vpop.xlane.xlu0 %543
    %v545 = vsel %vm396, %v499, 0.0
    %546 = vadd.xlane.f32.xlu0 %v545
    %v547 = vpop.xlane.xlu0 %546
    %v548 = vmul.f32 %v502, %v451
    %v549 = vmul.f32 %v505, %v451
    %v550 = vmul.f32 %v508, %v451
    %v551 = vmul.f32 %v511, %v451
    %v552 = vmul.f32 %v514, %v451
    %v553 = vmul.f32 %v517, %v451
    %v554 = vmul.f32 %v520, %v451
    %v555 = vmul.f32 %v523, %v451
    %v556 = vmul.f32 %v526, %v451
    %v557 = vmul.f32 %v529, %v451
    %v558 = vmul.f32 %v532, %v451
    %v559 = vmul.f32 %v535, %v451
    %v560 = vmul.f32 %v538, %v451
    %v561 = vmul.f32 %v541, %v451
    %v562 = vmul.f32 %v544, %v451
    %v563 = vmul.f32 %v547, %v451
    %v564 = vadd.f32 %v548, 0.001
    %v565 = vadd.f32 %v549, 0.001
    %v566 = vadd.f32 %v550, 0.001
    %v567 = vadd.f32 %v551, 0.001
    %v568 = vadd.f32 %v552, 0.001
    %v569 = vadd.f32 %v553, 0.001
    %v570 = vadd.f32 %v554, 0.001
    %v571 = vadd.f32 %v555, 0.001
    %v572 = vadd.f32 %v556, 0.001
    %v573 = vadd.f32 %v557, 0.001
    %v574 = vadd.f32 %v558, 0.001
    %v575 = vadd.f32 %v559, 0.001
    %v576 = vadd.f32 %v560, 0.001
    %v577 = vadd.f32 %v561, 0.001
    %v578 = vadd.f32 %v562, 0.001
    %v579 = vadd.f32 %v563, 0.001
    %v580 = vrsqrt.pop %v564
    %v581 = vmul.f32 %v580, %v564
    %v582 = vmul.f32 %v581, %v580
    %v583 = vmul.f32 0.5, %v582
    %v584 = vsub.f32 1.5, %v583
    %v585 = vmul.f32 %v580, %v584
    %vm586 = vweird.f32 %v564
    %vm587 = vweird.f32 %v580
    %vm588 = vmor %vm586, %vm587
    %v589 = vsel %vm588, %v580, %v585
    %v590 = vrsqrt.pop %v565
    %v591 = vmul.f32 %v590, %v565
    %v592 = vmul.f32 %v591, %v590
    %v593 = vmul.f32 0.5, %v592
    %v594 = vsub.f32 1.5, %v593
    %v595 = vmul.f32 %v590, %v594
    %vm596 = vweird.f32 %v565
    %vm597 = vweird.f32 %v590
    %vm598 = vmor %vm596, %vm597
    %v599 = vsel %vm598, %v590, %v595
    %v600 = vrsqrt.pop %v566
    %v601 = vmul.f32 %v600, %v566
    %v602 = vmul.f32 %v601, %v600
    %v603 = vmul.f32 0.5, %v602
    %v604 = vsub.f32 1.5, %v603
    %v605 = vmul.f32 %v600, %v604
    %vm606 = vweird.f32 %v566
    %vm607 = vweird.f32 %v600
    %vm608 = vmor %vm606, %vm607
    %v609 = vsel %vm608, %v600, %v605
    %v610 = vrsqrt.pop %v567
    %v611 = vmul.f32 %v610, %v567
    %v612 = vmul.f32 %v611, %v610
    %v613 = vmul.f32 0.5, %v612
    %v614 = vsub.f32 1.5, %v613
    %v615 = vmul.f32 %v610, %v614
    %vm616 = vweird.f32 %v567
    %vm617 = vweird.f32 %v610
    %vm618 = vmor %vm616, %vm617
    %v619 = vsel %vm618, %v610, %v615
    %v620 = vrsqrt.pop %v568
    %v621 = vmul.f32 %v620, %v568
    %v622 = vmul.f32 %v621, %v620
    %v623 = vmul.f32 0.5, %v622
    %v624 = vsub.f32 1.5, %v623
    %v625 = vmul.f32 %v620, %v624
    %vm626 = vweird.f32 %v568
    %vm627 = vweird.f32 %v620
    %vm628 = vmor %vm626, %vm627
    %v629 = vsel %vm628, %v620, %v625
    %v630 = vrsqrt.pop %v569
    %v631 = vmul.f32 %v630, %v569
    %v632 = vmul.f32 %v631, %v630
    %v633 = vmul.f32 0.5, %v632
    %v634 = vsub.f32 1.5, %v633
    %v635 = vmul.f32 %v630, %v634
    %vm636 = vweird.f32 %v569
    %vm637 = vweird.f32 %v630
    %vm638 = vmor %vm636, %vm637
    %v639 = vsel %vm638, %v630, %v635
    %v640 = vrsqrt.pop %v570
    %v641 = vmul.f32 %v640, %v570
    %v642 = vmul.f32 %v641, %v640
    %v643 = vmul.f32 0.5, %v642
    %v644 = vsub.f32 1.5, %v643
    %v645 = vmul.f32 %v640, %v644
    %vm646 = vweird.f32 %v570
    %vm647 = vweird.f32 %v640
    %vm648 = vmor %vm646, %vm647
    %v649 = vsel %vm648, %v640, %v645
    %v650 = vrsqrt.pop %v571
    %v651 = vmul.f32 %v650, %v571
    %v652 = vmul.f32 %v651, %v650
    %v653 = vmul.f32 0.5, %v652
    %v654 = vsub.f32 1.5, %v653
    %v655 = vmul.f32 %v650, %v654
    %vm656 = vweird.f32 %v571
    %vm657 = vweird.f32 %v650
    %vm658 = vmor %vm656, %vm657
    %v659 = vsel %vm658, %v650, %v655
    %v660 = vrsqrt.pop %v572
    %v661 = vmul.f32 %v660, %v572
    %v662 = vmul.f32 %v661, %v660
    %v663 = vmul.f32 0.5, %v662
    %v664 = vsub.f32 1.5, %v663
    %v665 = vmul.f32 %v660, %v664
    %vm666 = vweird.f32 %v572
    %vm667 = vweird.f32 %v660
    %vm668 = vmor %vm666, %vm667
    %v669 = vsel %vm668, %v660, %v665
    %v670 = vrsqrt.pop %v573
    %v671 = vmul.f32 %v670, %v573
    %v672 = vmul.f32 %v671, %v670
    %v673 = vmul.f32 0.5, %v672
    %v674 = vsub.f32 1.5, %v673
    %v675 = vmul.f32 %v670, %v674
    %vm676 = vweird.f32 %v573
    %vm677 = vweird.f32 %v670
    %vm678 = vmor %vm676, %vm677
    %v679 = vsel %vm678, %v670, %v675
    %v680 = vrsqrt.pop %v574
    %v681 = vmul.f32 %v680, %v574
    %v682 = vmul.f32 %v681, %v680
    %v683 = vmul.f32 0.5, %v682
    %v684 = vsub.f32 1.5, %v683
    %v685 = vmul.f32 %v680, %v684
    %vm686 = vweird.f32 %v574
    %vm687 = vweird.f32 %v680
    %vm688 = vmor %vm686, %vm687
    %v689 = vsel %vm688, %v680, %v685
    %v690 = vrsqrt.pop %v575
    %v691 = vmul.f32 %v690, %v575
    %v692 = vmul.f32 %v691, %v690
    %v693 = vmul.f32 0.5, %v692
    %v694 = vsub.f32 1.5, %v693
    %v695 = vmul.f32 %v690, %v694
    %vm696 = vweird.f32 %v575
    %vm697 = vweird.f32 %v690
    %vm698 = vmor %vm696, %vm697
    %v699 = vsel %vm698, %v690, %v695
    %v700 = vrsqrt.pop %v576
    %v701 = vmul.f32 %v700, %v576
    %v702 = vmul.f32 %v701, %v700
    %v703 = vmul.f32 0.5, %v702
    %v704 = vsub.f32 1.5, %v703
    %v705 = vmul.f32 %v700, %v704
    %vm706 = vweird.f32 %v576
    %vm707 = vweird.f32 %v700
    %vm708 = vmor %vm706, %vm707
    %v709 = vsel %vm708, %v700, %v705
    %v710 = vrsqrt.pop %v577
    %v711 = vmul.f32 %v710, %v577
    %v712 = vmul.f32 %v711, %v710
    %v713 = vmul.f32 0.5, %v712
    %v714 = vsub.f32 1.5, %v713
    %v715 = vmul.f32 %v710, %v714
    %vm716 = vweird.f32 %v577
    %vm717 = vweird.f32 %v710
    %vm718 = vmor %vm716, %vm717
    %v719 = vsel %vm718, %v710, %v715
    %v720 = vrsqrt.pop %v578
    %v721 = vmul.f32 %v720, %v578
    %v722 = vmul.f32 %v721, %v720
    %v723 = vmul.f32 0.5, %v722
    %v724 = vsub.f32 1.5, %v723
    %v725 = vmul.f32 %v720, %v724
    %vm726 = vweird.f32 %v578
    %vm727 = vweird.f32 %v720
    %vm728 = vmor %vm726, %vm727
    %v729 = vsel %vm728, %v720, %v725
    %v730 = vrsqrt.pop %v579
    %v731 = vmul.f32 %v730, %v579
    %v732 = vmul.f32 %v731, %v730
    %v733 = vmul.f32 0.5, %v732
    %v734 = vsub.f32 1.5, %v733
    %v735 = vmul.f32 %v730, %v734
    %vm736 = vweird.f32 %v579
    %vm737 = vweird.f32 %v730
    %vm738 = vmor %vm736, %vm737
    %v739 = vsel %vm738, %v730, %v735
    %v740 = vmul.f32 %v468, %v589
    %v741 = vmul.f32 %v469, %v599
    %v742 = vmul.f32 %v470, %v609
    %v743 = vmul.f32 %v471, %v619
    %v744 = vmul.f32 %v472, %v629
    %v745 = vmul.f32 %v473, %v639
    %v746 = vmul.f32 %v474, %v649
    %v747 = vmul.f32 %v475, %v659
    %v748 = vmul.f32 %v476, %v669
    %v749 = vmul.f32 %v477, %v679
    %v750 = vmul.f32 %v478, %v689
    %v751 = vmul.f32 %v479, %v699
    %v752 = vmul.f32 %v480, %v709
    %v753 = vmul.f32 %v481, %v719
    %v754 = vmul.f32 %v482, %v729
    %v755 = vmul.f32 %v483, %v739
    %v756 = vxor.u32 %v740, 2147483648
    %v757 = vxor.u32 %v741, 2147483648
    %v758 = vxor.u32 %v742, 2147483648
    %v759 = vxor.u32 %v743, 2147483648
    %v760 = vxor.u32 %v744, 2147483648
    %v761 = vxor.u32 %v745, 2147483648
    %v762 = vxor.u32 %v746, 2147483648
    %v763 = vxor.u32 %v747, 2147483648
    %v764 = vxor.u32 %v748, 2147483648
    %v765 = vxor.u32 %v749, 2147483648
    %v766 = vxor.u32 %v750, 2147483648
    %v767 = vxor.u32 %v751, 2147483648
    %v768 = vxor.u32 %v752, 2147483648
    %v769 = vxor.u32 %v753, 2147483648
    %v770 = vxor.u32 %v754, 2147483648
    %v771 = vxor.u32 %v755, 2147483648
    %v772 = vmul.f32 %v756, 1.442695
    %v773 = vpow.pop %v772
    %v774 = vmul.f32 %v757, 1.442695
    %v775 = vpow.pop %v774
    %v776 = vmul.f32 %v758, 1.442695
    %v777 = vpow.pop %v776
    %v778 = vmul.f32 %v759, 1.442695
    %v779 = vpow.pop %v778
    %v780 = vmul.f32 %v760, 1.442695
    %v781 = vpow.pop %v780
    %v782 = vmul.f32 %v761, 1.442695
    %v783 = vpow.pop %v782
    %v784 = vmul.f32 %v762, 1.442695
    %v785 = vpow.pop %v784
    %v786 = vmul.f32 %v763, 1.442695
    %v787 = vpow.pop %v786
    %v788 = vmul.f32 %v764, 1.442695
    %v789 = vpow.pop %v788
    %v790 = vmul.f32 %v765, 1.442695
    %v791 = vpow.pop %v790
    %v792 = vmul.f32 %v766, 1.442695
    %v793 = vpow.pop %v792
    %v794 = vmul.f32 %v767, 1.442695
    %v795 = vpow.pop %v794
    %v796 = vmul.f32 %v768, 1.442695
    %v797 = vpow.pop %v796
    %v798 = vmul.f32 %v769, 1.442695
    %v799 = vpow.pop %v798
    %v800 = vmul.f32 %v770, 1.442695
    %v801 = vpow.pop %v800
    %v802 = vmul.f32 %v771, 1.442695
    %v803 = vpow.pop %v802
    %v804 = vadd.f32 %v773, 1.0
    %v805 = vadd.f32 %v775, 1.0
    %v806 = vadd.f32 %v777, 1.0
    %v807 = vadd.f32 %v779, 1.0
    %v808 = vadd.f32 %v781, 1.0
    %v809 = vadd.f32 %v783, 1.0
    %v810 = vadd.f32 %v785, 1.0
    %v811 = vadd.f32 %v787, 1.0
    %v812 = vadd.f32 %v789, 1.0
    %v813 = vadd.f32 %v791, 1.0
    %v814 = vadd.f32 %v793, 1.0
    %v815 = vadd.f32 %v795, 1.0
    %v816 = vadd.f32 %v797, 1.0
    %v817 = vadd.f32 %v799, 1.0
    %v818 = vadd.f32 %v801, 1.0
    %v819 = vadd.f32 %v803, 1.0
    %v820 = vrcp.pop %v804
    %v821 = vmul.f32 %v804, %v820
    %v822 = vsub.f32 1.0, %v821
    %v823 = vmul.f32 %v820, %v822
    %v824 = vadd.f32 %v820, %v823
    %vm825 = vweird.f32 %v804
    %vm826 = vweird.f32 %v820
    %vm827 = vmor %vm825, %vm826
    %v828 = vsel %vm827, %v820, %v824
    %v829 = vand.u32 2147483647, %v804
    %vm830 = vcmp.eq.f32.partialorder %v829, 8.507059e+37
    %v831 = vand.u32 %v804, 2147483648
    %v832 = vor.u32 1.1754944e-38, %v831
    %v833 = vsel %vm830, %v832, %v828
    %v834 = vmul.f32 1.0, %v833
    %v835 = vrcp.pop %v805
    %v836 = vmul.f32 %v805, %v835
    %v837 = vsub.f32 1.0, %v836
    %v838 = vmul.f32 %v835, %v837
    %v839 = vadd.f32 %v835, %v838
    %vm840 = vweird.f32 %v805
    %vm841 = vweird.f32 %v835
    %vm842 = vmor %vm840, %vm841
    %v843 = vsel %vm842, %v835, %v839
    %v844 = vand.u32 2147483647, %v805
    %vm845 = vcmp.eq.f32.partialorder %v844, 8.507059e+37
    %v846 = vand.u32 %v805, 2147483648
    %v847 = vor.u32 1.1754944e-38, %v846
    %v848 = vsel %vm845, %v847, %v843
    %v849 = vmul.f32 1.0, %v848
    %v850 = vrcp.pop %v806
    %v851 = vmul.f32 %v806, %v850
    %v852 = vsub.f32 1.0, %v851
    %v853 = vmul.f32 %v850, %v852
    %v854 = vadd.f32 %v850, %v853
    %vm855 = vweird.f32 %v806
    %vm856 = vweird.f32 %v850
    %vm857 = vmor %vm855, %vm856
    %v858 = vsel %vm857, %v850, %v854
    %v859 = vand.u32 2147483647, %v806
    %vm860 = vcmp.eq.f32.partialorder %v859, 8.507059e+37
    %v861 = vand.u32 %v806, 2147483648
    %v862 = vor.u32 1.1754944e-38, %v861
    %v863 = vsel %vm860, %v862, %v858
    %v864 = vmul.f32 1.0, %v863
    %v865 = vrcp.pop %v807
    %v866 = vmul.f32 %v807, %v865
    %v867 = vsub.f32 1.0, %v866
    %v868 = vmul.f32 %v865, %v867
    %v869 = vadd.f32 %v865, %v868
    %vm870 = vweird.f32 %v807
    %vm871 = vweird.f32 %v865
    %vm872 = vmor %vm870, %vm871
    %v873 = vsel %vm872, %v865, %v869
    %v874 = vand.u32 2147483647, %v807
    %vm875 = vcmp.eq.f32.partialorder %v874, 8.507059e+37
    %v876 = vand.u32 %v807, 2147483648
    %v877 = vor.u32 1.1754944e-38, %v876
    %v878 = vsel %vm875, %v877, %v873
    %v879 = vmul.f32 1.0, %v878
    %v880 = vrcp.pop %v808
    %v881 = vmul.f32 %v808, %v880
    %v882 = vsub.f32 1.0, %v881
    %v883 = vmul.f32 %v880, %v882
    %v884 = vadd.f32 %v880, %v883
    %vm885 = vweird.f32 %v808
    %vm886 = vweird.f32 %v880
    %vm887 = vmor %vm885, %vm886
    %v888 = vsel %vm887, %v880, %v884
    %v889 = vand.u32 2147483647, %v808
    %vm890 = vcmp.eq.f32.partialorder %v889, 8.507059e+37
    %v891 = vand.u32 %v808, 2147483648
    %v892 = vor.u32 1.1754944e-38, %v891
    %v893 = vsel %vm890, %v892, %v888
    %v894 = vmul.f32 1.0, %v893
    %v895 = vrcp.pop %v809
    %v896 = vmul.f32 %v809, %v895
    %v897 = vsub.f32 1.0, %v896
    %v898 = vmul.f32 %v895, %v897
    %v899 = vadd.f32 %v895, %v898
    %vm900 = vweird.f32 %v809
    %vm901 = vweird.f32 %v895
    %vm902 = vmor %vm900, %vm901
    %v903 = vsel %vm902, %v895, %v899
    %v904 = vand.u32 2147483647, %v809
    %vm905 = vcmp.eq.f32.partialorder %v904, 8.507059e+37
    %v906 = vand.u32 %v809, 2147483648
    %v907 = vor.u32 1.1754944e-38, %v906
    %v908 = vsel %vm905, %v907, %v903
    %v909 = vmul.f32 1.0, %v908
    %v910 = vrcp.pop %v810
    %v911 = vmul.f32 %v810, %v910
    %v912 = vsub.f32 1.0, %v911
    %v913 = vmul.f32 %v910, %v912
    %v914 = vadd.f32 %v910, %v913
    %vm915 = vweird.f32 %v810
    %vm916 = vweird.f32 %v910
    %vm917 = vmor %vm915, %vm916
    %v918 = vsel %vm917, %v910, %v914
    %v919 = vand.u32 2147483647, %v810
    %vm920 = vcmp.eq.f32.partialorder %v919, 8.507059e+37
    %v921 = vand.u32 %v810, 2147483648
    %v922 = vor.u32 1.1754944e-38, %v921
    %v923 = vsel %vm920, %v922, %v918
    %v924 = vmul.f32 1.0, %v923
    %v925 = vrcp.pop %v811
    %v926 = vmul.f32 %v811, %v925
    %v927 = vsub.f32 1.0, %v926
    %v928 = vmul.f32 %v925, %v927
    %v929 = vadd.f32 %v925, %v928
    %vm930 = vweird.f32 %v811
    %vm931 = vweird.f32 %v925
    %vm932 = vmor %vm930, %vm931
    %v933 = vsel %vm932, %v925, %v929
    %v934 = vand.u32 2147483647, %v811
    %vm935 = vcmp.eq.f32.partialorder %v934, 8.507059e+37
    %v936 = vand.u32 %v811, 2147483648
    %v937 = vor.u32 1.1754944e-38, %v936
    %v938 = vsel %vm935, %v937, %v933
    %v939 = vmul.f32 1.0, %v938
    %v940 = vrcp.pop %v812
    %v941 = vmul.f32 %v812, %v940
    %v942 = vsub.f32 1.0, %v941
    %v943 = vmul.f32 %v940, %v942
    %v944 = vadd.f32 %v940, %v943
    %vm945 = vweird.f32 %v812
    %vm946 = vweird.f32 %v940
    %vm947 = vmor %vm945, %vm946
    %v948 = vsel %vm947, %v940, %v944
    %v949 = vand.u32 2147483647, %v812
    %vm950 = vcmp.eq.f32.partialorder %v949, 8.507059e+37
    %v951 = vand.u32 %v812, 2147483648
    %v952 = vor.u32 1.1754944e-38, %v951
    %v953 = vsel %vm950, %v952, %v948
    %v954 = vmul.f32 1.0, %v953
    %v955 = vrcp.pop %v813
    %v956 = vmul.f32 %v813, %v955
    %v957 = vsub.f32 1.0, %v956
    %v958 = vmul.f32 %v955, %v957
    %v959 = vadd.f32 %v955, %v958
    %vm960 = vweird.f32 %v813
    %vm961 = vweird.f32 %v955
    %vm962 = vmor %vm960, %vm961
    %v963 = vsel %vm962, %v955, %v959
    %v964 = vand.u32 2147483647, %v813
    %vm965 = vcmp.eq.f32.partialorder %v964, 8.507059e+37
    %v966 = vand.u32 %v813, 2147483648
    %v967 = vor.u32 1.1754944e-38, %v966
    %v968 = vsel %vm965, %v967, %v963
    %v969 = vmul.f32 1.0, %v968
    %v970 = vrcp.pop %v814
    %v971 = vmul.f32 %v814, %v970
    %v972 = vsub.f32 1.0, %v971
    %v973 = vmul.f32 %v970, %v972
    %v974 = vadd.f32 %v970, %v973
    %vm975 = vweird.f32 %v814
    %vm976 = vweird.f32 %v970
    %vm977 = vmor %vm975, %vm976
    %v978 = vsel %vm977, %v970, %v974
    %v979 = vand.u32 2147483647, %v814
    %vm980 = vcmp.eq.f32.partialorder %v979, 8.507059e+37
    %v981 = vand.u32 %v814, 2147483648
    %v982 = vor.u32 1.1754944e-38, %v981
    %v983 = vsel %vm980, %v982, %v978
    %v984 = vmul.f32 1.0, %v983
    %v985 = vrcp.pop %v815
    %v986 = vmul.f32 %v815, %v985
    %v987 = vsub.f32 1.0, %v986
    %v988 = vmul.f32 %v985, %v987
    %v989 = vadd.f32 %v985, %v988
    %vm990 = vweird.f32 %v815
    %vm991 = vweird.f32 %v985
    %vm992 = vmor %vm990, %vm991
    %v993 = vsel %vm992, %v985, %v989
    %v994 = vand.u32 2147483647, %v815
    %vm995 = vcmp.eq.f32.partialorder %v994, 8.507059e+37
    %v996 = vand.u32 %v815, 2147483648
    %v997 = vor.u32 1.1754944e-38, %v996
    %v998 = vsel %vm995, %v997, %v993
    %v999 = vmul.f32 1.0, %v998
    %v1000 = vrcp.pop %v816
    %v1001 = vmul.f32 %v816, %v1000
    %v1002 = vsub.f32 1.0, %v1001
    %v1003 = vmul.f32 %v1000, %v1002
    %v1004 = vadd.f32 %v1000, %v1003
    %vm1005 = vweird.f32 %v816
    %vm1006 = vweird.f32 %v1000
    %vm1007 = vmor %vm1005, %vm1006
    %v1008 = vsel %vm1007, %v1000, %v1004
    %v1009 = vand.u32 2147483647, %v816
    %vm1010 = vcmp.eq.f32.partialorder %v1009, 8.507059e+37
    %v1011 = vand.u32 %v816, 2147483648
    %v1012 = vor.u32 1.1754944e-38, %v1011
    %v1013 = vsel %vm1010, %v1012, %v1008
    %v1014 = vmul.f32 1.0, %v1013
    %v1015 = vrcp.pop %v817
    %v1016 = vmul.f32 %v817, %v1015
    %v1017 = vsub.f32 1.0, %v1016
    %v1018 = vmul.f32 %v1015, %v1017
    %v1019 = vadd.f32 %v1015, %v1018
    %vm1020 = vweird.f32 %v817
    %vm1021 = vweird.f32 %v1015
    %vm1022 = vmor %vm1020, %vm1021
    %v1023 = vsel %vm1022, %v1015, %v1019
    %v1024 = vand.u32 2147483647, %v817
    %vm1025 = vcmp.eq.f32.partialorder %v1024, 8.507059e+37
    %v1026 = vand.u32 %v817, 2147483648
    %v1027 = vor.u32 1.1754944e-38, %v1026
    %v1028 = vsel %vm1025, %v1027, %v1023
    %v1029 = vmul.f32 1.0, %v1028
    %v1030 = vrcp.pop %v818
    %v1031 = vmul.f32 %v818, %v1030
    %v1032 = vsub.f32 1.0, %v1031
    %v1033 = vmul.f32 %v1030, %v1032
    %v1034 = vadd.f32 %v1030, %v1033
    %vm1035 = vweird.f32 %v818
    %vm1036 = vweird.f32 %v1030
    %vm1037 = vmor %vm1035, %vm1036
    %v1038 = vsel %vm1037, %v1030, %v1034
    %v1039 = vand.u32 2147483647, %v818
    %vm1040 = vcmp.eq.f32.partialorder %v1039, 8.507059e+37
    %v1041 = vand.u32 %v818, 2147483648
    %v1042 = vor.u32 1.1754944e-38, %v1041
    %v1043 = vsel %vm1040, %v1042, %v1038
    %v1044 = vmul.f32 1.0, %v1043
    %v1045 = vrcp.pop %v819
    %v1046 = vmul.f32 %v819, %v1045
    %v1047 = vsub.f32 1.0, %v1046
    %v1048 = vmul.f32 %v1045, %v1047
    %v1049 = vadd.f32 %v1045, %v1048
    %vm1050 = vweird.f32 %v819
    %vm1051 = vweird.f32 %v1045
    %vm1052 = vmor %vm1050, %vm1051
    %v1053 = vsel %vm1052, %v1045, %v1049
    %v1054 = vand.u32 2147483647, %v819
    %vm1055 = vcmp.eq.f32.partialorder %v1054, 8.507059e+37
    %v1056 = vand.u32 %v819, 2147483648
    %v1057 = vor.u32 1.1754944e-38, %v1056
    %v1058 = vsel %vm1055, %v1057, %v1053
    %v1059 = vmul.f32 1.0, %v1058
    %v1060 = vmul.f32 %v834, %v379
    %v1061 = vmul.f32 %v849, %v380
    %v1062 = vmul.f32 %v864, %v381
    %v1063 = vmul.f32 %v879, %v382
    %v1064 = vmul.f32 %v894, %v383
    %v1065 = vmul.f32 %v909, %v384
    %v1066 = vmul.f32 %v924, %v385
    %v1067 = vmul.f32 %v939, %v386
    %v1068 = vmul.f32 %v954, %v387
    %v1069 = vmul.f32 %v969, %v388
    %v1070 = vmul.f32 %v984, %v389
    %v1071 = vmul.f32 %v999, %v390
    %v1072 = vmul.f32 %v1014, %v391
    %v1073 = vmul.f32 %v1029, %v392
    %v1074 = vmul.f32 %v1044, %v393
    %v1075 = vmul.f32 %v1059, %v394
    %v1076 = vsub.f32 1.0, %v834
    %v1077 = vsub.f32 1.0, %v849
    %v1078 = vsub.f32 1.0, %v864
    %v1079 = vsub.f32 1.0, %v879
    %v1080 = vsub.f32 1.0, %v894
    %v1081 = vsub.f32 1.0, %v909
    %v1082 = vsub.f32 1.0, %v924
    %v1083 = vsub.f32 1.0, %v939
    %v1084 = vsub.f32 1.0, %v954
    %v1085 = vsub.f32 1.0, %v969
    %v1086 = vsub.f32 1.0, %v984
    %v1087 = vsub.f32 1.0, %v999
    %v1088 = vsub.f32 1.0, %v1014
    %v1089 = vsub.f32 1.0, %v1029
    %v1090 = vsub.f32 1.0, %v1044
    %v1091 = vsub.f32 1.0, %v1059
    %v1093 = vperm.slane %v395, 0
    %1094 = vset.pattern.permute.xlu0 0
    %1095 = vperm.xlu0 %1094, %v1093
    %v1096 = vpop.permute.xlu0 %1095
    %v1098 = vmul.f32 %v1076, %v1096
    %v1099 = vmul.f32 %v1077, %v1096
    %v1100 = vmul.f32 %v1078, %v1096
    %v1101 = vmul.f32 %v1079, %v1096
    %v1102 = vmul.f32 %v1080, %v1096
    %v1103 = vmul.f32 %v1081, %v1096
    %v1104 = vmul.f32 %v1082, %v1096
    %v1105 = vmul.f32 %v1083, %v1096
    %v1106 = vmul.f32 %v1084, %v1096
    %v1107 = vmul.f32 %v1085, %v1096
    %v1108 = vmul.f32 %v1086, %v1096
    %v1109 = vmul.f32 %v1087, %v1096
    %v1110 = vmul.f32 %v1088, %v1096
    %v1111 = vmul.f32 %v1089, %v1096
    %v1112 = vmul.f32 %v1090, %v1096
    %v1113 = vmul.f32 %v1091, %v1096
    %v1114 = vmul.f32 %v1098, %v379
    %v1115 = vmul.f32 %v1099, %v380
    %v1116 = vmul.f32 %v1100, %v381
    %v1117 = vmul.f32 %v1101, %v382
    %v1118 = vmul.f32 %v1102, %v383
    %v1119 = vmul.f32 %v1103, %v384
    %v1120 = vmul.f32 %v1104, %v385
    %v1121 = vmul.f32 %v1105, %v386
    %v1122 = vmul.f32 %v1106, %v387
    %v1123 = vmul.f32 %v1107, %v388
    %v1124 = vmul.f32 %v1108, %v389
    %v1125 = vmul.f32 %v1109, %v390
    %v1126 = vmul.f32 %v1110, %v391
    %v1127 = vmul.f32 %v1111, %v392
    %v1128 = vmul.f32 %v1112, %v393
    %v1129 = vmul.f32 %v1113, %v394
    %v1130 = vadd.f32 %v1060, %v1114
    %v1131 = vadd.f32 %v1061, %v1115
    %v1132 = vadd.f32 %v1062, %v1116
    %v1133 = vadd.f32 %v1063, %v1117
    %v1134 = vadd.f32 %v1064, %v1118
    %v1135 = vadd.f32 %v1065, %v1119
    %v1136 = vadd.f32 %v1066, %v1120
    %v1137 = vadd.f32 %v1067, %v1121
    %v1138 = vadd.f32 %v1068, %v1122
    %v1139 = vadd.f32 %v1069, %v1123
    %v1140 = vadd.f32 %v1070, %v1124
    %v1141 = vadd.f32 %v1071, %v1125
    %v1142 = vadd.f32 %v1072, %v1126
    %v1143 = vadd.f32 %v1073, %v1127
    %v1144 = vadd.f32 %v1074, %v1128
    %v1145 = vadd.f32 %v1075, %v1129
    %v1146 = vld [vmem:[%s7] sm:$0x1]
    %v1148 = vperm.slane %v1146, 0
    %v1150 = vmul.f32 %v1130, %v1148
    %v1151 = vmul.f32 %v1131, %v1148
    %v1152 = vmul.f32 %v1132, %v1148
    %v1153 = vmul.f32 %v1133, %v1148
    %v1154 = vmul.f32 %v1134, %v1148
    %v1155 = vmul.f32 %v1135, %v1148
    %v1156 = vmul.f32 %v1136, %v1148
    %v1157 = vmul.f32 %v1137, %v1148
    %v1158 = vmul.f32 %v1138, %v1148
    %v1159 = vmul.f32 %v1139, %v1148
    %v1160 = vmul.f32 %v1140, %v1148
    %v1161 = vmul.f32 %v1141, %v1148
    %v1162 = vmul.f32 %v1142, %v1148
    %v1163 = vmul.f32 %v1143, %v1148
    %v1164 = vmul.f32 %v1144, %v1148
    %v1165 = vmul.f32 %v1145, %v1148
    %v1166 = vsel %vm396, %v1150, 0.0
    %1167 = vadd.xlane.f32.xlu0 %v1166
    %v1168 = vpop.xlane.xlu0 %1167
    %v1169 = vsel %vm396, %v1151, 0.0
    %1170 = vadd.xlane.f32.xlu0 %v1169
    %v1171 = vpop.xlane.xlu0 %1170
    %v1172 = vsel %vm396, %v1152, 0.0
    %1173 = vadd.xlane.f32.xlu0 %v1172
    %v1174 = vpop.xlane.xlu0 %1173
    %v1175 = vsel %vm396, %v1153, 0.0
    %1176 = vadd.xlane.f32.xlu0 %v1175
    %v1177 = vpop.xlane.xlu0 %1176
    %v1178 = vsel %vm396, %v1154, 0.0
    %1179 = vadd.xlane.f32.xlu0 %v1178
    %v1180 = vpop.xlane.xlu0 %1179
    %v1181 = vsel %vm396, %v1155, 0.0
    %1182 = vadd.xlane.f32.xlu0 %v1181
    %v1183 = vpop.xlane.xlu0 %1182
    %v1184 = vsel %vm396, %v1156, 0.0
    %1185 = vadd.xlane.f32.xlu0 %v1184
    %v1186 = vpop.xlane.xlu0 %1185
    %v1187 = vsel %vm396, %v1157, 0.0
    %1188 = vadd.xlane.f32.xlu0 %v1187
    %v1189 = vpop.xlane.xlu0 %1188
    %v1190 = vsel %vm396, %v1158, 0.0
    %1191 = vadd.xlane.f32.xlu0 %v1190
    %v1192 = vpop.xlane.xlu0 %1191
    %v1193 = vsel %vm396, %v1159, 0.0
    %1194 = vadd.xlane.f32.xlu0 %v1193
    %v1195 = vpop.xlane.xlu0 %1194
    %v1196 = vsel %vm396, %v1160, 0.0
    %1197 = vadd.xlane.f32.xlu0 %v1196
    %v1198 = vpop.xlane.xlu0 %1197
    %v1199 = vsel %vm396, %v1161, 0.0
    %1200 = vadd.xlane.f32.xlu0 %v1199
    %v1201 = vpop.xlane.xlu0 %1200
    %v1202 = vsel %vm396, %v1162, 0.0
    %1203 = vadd.xlane.f32.xlu0 %v1202
    %v1204 = vpop.xlane.xlu0 %1203
    %v1205 = vsel %vm396, %v1163, 0.0
    %1206 = vadd.xlane.f32.xlu0 %v1205
    %v1207 = vpop.xlane.xlu0 %1206
    %v1208 = vsel %vm396, %v1164, 0.0
    %1209 = vadd.xlane.f32.xlu0 %v1208
    %v1210 = vpop.xlane.xlu0 %1209
    %v1211 = vsel %vm396, %v1165, 0.0
    %1212 = vadd.xlane.f32.xlu0 %v1211
    %v1213 = vpop.xlane.xlu0 %1212
    %v1214 = vld [vmem:[%s8] sm:$0x1]
    %v1216 = vperm.slane %v1214, 0
    %v1218 = vadd.f32 %v1168, %v1216
    %v1219 = vadd.f32 %v1171, %v1216
    %v1220 = vadd.f32 %v1174, %v1216
    %v1221 = vadd.f32 %v1177, %v1216
    %v1222 = vadd.f32 %v1180, %v1216
    %v1223 = vadd.f32 %v1183, %v1216
    %v1224 = vadd.f32 %v1186, %v1216
    %v1225 = vadd.f32 %v1189, %v1216
    %v1226 = vadd.f32 %v1192, %v1216
    %v1227 = vadd.f32 %v1195, %v1216
    %v1228 = vadd.f32 %v1198, %v1216
    %v1229 = vadd.f32 %v1201, %v1216
    %v1230 = vadd.f32 %v1204, %v1216
    %v1231 = vadd.f32 %v1207, %v1216
    %v1232 = vadd.f32 %v1210, %v1216
    %v1233 = vadd.f32 %v1213, %v1216
    %1235 = vset.pattern.permute.xlu0 0
    %1236 = vperm.xlu0 %1235, %v1218
    %v1237 = vpop.permute.xlu0 %1236
    %1240 = vset.pattern.permute.xlu0 0
    %1241 = vperm.xlu0 %1240, %v1219
    %v1242 = vpop.permute.xlu0 %1241
    %1245 = vset.pattern.permute.xlu0 0
    %1246 = vperm.xlu0 %1245, %v1220
    %v1247 = vpop.permute.xlu0 %1246
    %1250 = vset.pattern.permute.xlu0 0
    %1251 = vperm.xlu0 %1250, %v1221
    %v1252 = vpop.permute.xlu0 %1251
    %1255 = vset.pattern.permute.xlu0 0
    %1256 = vperm.xlu0 %1255, %v1222
    %v1257 = vpop.permute.xlu0 %1256
    %1260 = vset.pattern.permute.xlu0 0
    %1261 = vperm.xlu0 %1260, %v1223
    %v1262 = vpop.permute.xlu0 %1261
    %1265 = vset.pattern.permute.xlu0 0
    %1266 = vperm.xlu0 %1265, %v1224
    %v1267 = vpop.permute.xlu0 %1266
    %1270 = vset.pattern.permute.xlu0 0
    %1271 = vperm.xlu0 %1270, %v1225
    %v1272 = vpop.permute.xlu0 %1271
    %1275 = vset.pattern.permute.xlu0 0
    %1276 = vperm.xlu0 %1275, %v1226
    %v1277 = vpop.permute.xlu0 %1276
    %1280 = vset.pattern.permute.xlu0 0
    %1281 = vperm.xlu0 %1280, %v1227
    %v1282 = vpop.permute.xlu0 %1281
    %1285 = vset.pattern.permute.xlu0 0
    %1286 = vperm.xlu0 %1285, %v1228
    %v1287 = vpop.permute.xlu0 %1286
    %1290 = vset.pattern.permute.xlu0 0
    %1291 = vperm.xlu0 %1290, %v1229
    %v1292 = vpop.permute.xlu0 %1291
    %1295 = vset.pattern.permute.xlu0 0
    %1296 = vperm.xlu0 %1295, %v1230
    %v1297 = vpop.permute.xlu0 %1296
    %1300 = vset.pattern.permute.xlu0 0
    %1301 = vperm.xlu0 %1300, %v1231
    %v1302 = vpop.permute.xlu0 %1301
    %1305 = vset.pattern.permute.xlu0 0
    %1306 = vperm.xlu0 %1305, %v1232
    %v1307 = vpop.permute.xlu0 %1306
    %1310 = vset.pattern.permute.xlu0 0
    %1311 = vperm.xlu0 %1310, %v1233
    %v1312 = vpop.permute.xlu0 %1311
    %v1314 = vmul.f32 %v1237, %v74
    %v1315 = vmul.f32 %v1242, %v75
    %v1316 = vmul.f32 %v1247, %v76
    %v1317 = vmul.f32 %v1252, %v77
    %v1318 = vmul.f32 %v1257, %v78
    %v1319 = vmul.f32 %v1262, %v79
    %v1320 = vmul.f32 %v1267, %v80
    %v1321 = vmul.f32 %v1272, %v81
    %v1322 = vmul.f32 %v1277, %v82
    %v1323 = vmul.f32 %v1282, %v83
    %v1324 = vmul.f32 %v1287, %v84
    %v1325 = vmul.f32 %v1292, %v85
    %v1326 = vmul.f32 %v1297, %v86
    %v1327 = vmul.f32 %v1302, %v87
    %v1328 = vmul.f32 %v1307, %v88
    %v1329 = vmul.f32 %v1312, %v89
    %v1330 = vsel %vm96, %v1314, 0.0
    %v1331 = vsel %vm96, %v1315, 0.0
    %v1332 = vadd.f32 %v1330, %v1331
    %v1333 = vrot.slane %v1332, 4
    %v1334 = vadd.f32 %v1332, %v1333
    %v1335 = vrot.slane %v1334, 2
    %v1336 = vadd.f32 %v1334, %v1335
    %v1337 = vrot.slane %v1336, 1
    %v1338 = vadd.f32 %v1336, %v1337
    %v1339 = vsel %vm96, %v1316, 0.0
    %v1340 = vsel %vm96, %v1317, 0.0
    %v1341 = vadd.f32 %v1339, %v1340
    %v1342 = vrot.slane %v1341, 4
    %v1343 = vadd.f32 %v1341, %v1342
    %v1344 = vrot.slane %v1343, 2
    %v1345 = vadd.f32 %v1343, %v1344
    %v1346 = vrot.slane %v1345, 1
    %v1347 = vadd.f32 %v1345, %v1346
    %v1348 = vsel %vm96, %v1318, 0.0
    %v1349 = vsel %vm96, %v1319, 0.0
    %v1350 = vadd.f32 %v1348, %v1349
    %v1351 = vrot.slane %v1350, 4
    %v1352 = vadd.f32 %v1350, %v1351
    %v1353 = vrot.slane %v1352, 2
    %v1354 = vadd.f32 %v1352, %v1353
    %v1355 = vrot.slane %v1354, 1
    %v1356 = vadd.f32 %v1354, %v1355
    %v1357 = vsel %vm96, %v1320, 0.0
    %v1358 = vsel %vm96, %v1321, 0.0
    %v1359 = vadd.f32 %v1357, %v1358
    %v1360 = vrot.slane %v1359, 4
    %v1361 = vadd.f32 %v1359, %v1360
    %v1362 = vrot.slane %v1361, 2
    %v1363 = vadd.f32 %v1361, %v1362
    %v1364 = vrot.slane %v1363, 1
    %v1365 = vadd.f32 %v1363, %v1364
    %v1366 = vsel %vm96, %v1322, 0.0
    %v1367 = vsel %vm96, %v1323, 0.0
    %v1368 = vadd.f32 %v1366, %v1367
    %v1369 = vrot.slane %v1368, 4
    %v1370 = vadd.f32 %v1368, %v1369
    %v1371 = vrot.slane %v1370, 2
    %v1372 = vadd.f32 %v1370, %v1371
    %v1373 = vrot.slane %v1372, 1
    %v1374 = vadd.f32 %v1372, %v1373
    %v1375 = vsel %vm96, %v1324, 0.0
    %v1376 = vsel %vm96, %v1325, 0.0
    %v1377 = vadd.f32 %v1375, %v1376
    %v1378 = vrot.slane %v1377, 4
    %v1379 = vadd.f32 %v1377, %v1378
    %v1380 = vrot.slane %v1379, 2
    %v1381 = vadd.f32 %v1379, %v1380
    %v1382 = vrot.slane %v1381, 1
    %v1383 = vadd.f32 %v1381, %v1382
    %v1384 = vsel %vm96, %v1326, 0.0
    %v1385 = vsel %vm96, %v1327, 0.0
    %v1386 = vadd.f32 %v1384, %v1385
    %v1387 = vrot.slane %v1386, 4
    %v1388 = vadd.f32 %v1386, %v1387
    %v1389 = vrot.slane %v1388, 2
    %v1390 = vadd.f32 %v1388, %v1389
    %v1391 = vrot.slane %v1390, 1
    %v1392 = vadd.f32 %v1390, %v1391
    %v1393 = vsel %vm96, %v1328, 0.0
    %v1394 = vsel %vm96, %v1329, 0.0
    %v1395 = vadd.f32 %v1393, %v1394
    %v1396 = vrot.slane %v1395, 4
    %v1397 = vadd.f32 %v1395, %v1396
    %v1398 = vrot.slane %v1397, 2
    %v1399 = vadd.f32 %v1397, %v1398
    %v1400 = vrot.slane %v1399, 1
    %v1401 = vadd.f32 %v1399, %v1400
    %vm1410 = vcmask 1041409
    %v1411 = vsel %vm1410, %v1347, %v1338
    %vm1412 = vcmask 1042434
    %v1413 = vsel %vm1412, %v1356, %v1411
    %vm1414 = vcmask 1043459
    %v1415 = vsel %vm1414, %v1365, %v1413
    %vm1416 = vcmask 1044484
    %v1417 = vsel %vm1416, %v1374, %v1415
    %vm1418 = vcmask 1045509
    %v1419 = vsel %vm1418, %v1383, %v1417
    %vm1420 = vcmask 1046534
    %v1421 = vsel %vm1420, %v1392, %v1419
    %vm1422 = vcmask 1047559
    %v1423 = vsel %vm1422, %v1401, %v1421
    %v1424 = vsel %vm96, %v1423, 0
    %1426 = vmatpush.msra.mxu0 0.0
    %1427 = vmatpush.msra.mxu0 0.0
    %1428 = vmatpush.msra.mxu0 0.0
    %1429 = vmatpush.msra.mxu0 0.0
    %1430 = vmatpush.msra.mxu0 0.0
    %1431 = vmatpush.msra.mxu0 0.0
    %1432 = vmatpush.msra.mxu0 0.0
    %1433 = vmatpush.msra.mxu0 0.0
    %1434 = vmatpush.msra.mxu0 0.0
    %1435 = vmatpush.msra.mxu0 0.0
    %1436 = vmatpush.msra.mxu0 0.0
    %1437 = vmatpush.msra.mxu0 0.0
    %1438 = vmatpush.msra.mxu0 0.0
    %1439 = vmatpush.msra.mxu0 0.0
    %1440 = vmatpush.msra.mxu0 0.0
    %1441 = vmatpush.msra.mxu0 %v63
    %1442 = vmatmul.f32.gmra.mxu0 %v1424
    %v1443 = vpop.f32.mrf.mxu0
    %v1444 = vadd.f32 0.0, %v1443
    %1445 = vdwg.mxu0
    %v1446 = vadd.f32 %v72, %v1444
    %s1447 = scalar_lea.vmem %s0, 128
    %v1448 = vld [vmem:[%s1447] sm:$0xff]
    %v1449 = vld [vmem:[%s1447 + $0x8] sm:$0xff]
    %v1450 = vld [vmem:[%s1447 + $0x10] sm:$0xff]
    %v1451 = vld [vmem:[%s1447 + $0x18] sm:$0xff]
    %v1452 = vld [vmem:[%s1447 + $0x20] sm:$0xff]
    %v1453 = vld [vmem:[%s1447 + $0x28] sm:$0xff]
    %v1454 = vld [vmem:[%s1447 + $0x30] sm:$0xff]
    %v1455 = vld [vmem:[%s1447 + $0x38] sm:$0xff]
    %v1456 = vld [vmem:[%s1447 + $0x40] sm:$0xff]
    %v1457 = vld [vmem:[%s1447 + $0x48] sm:$0xff]
    %v1458 = vld [vmem:[%s1447 + $0x50] sm:$0xff]
    %v1459 = vld [vmem:[%s1447 + $0x58] sm:$0xff]
    %v1460 = vld [vmem:[%s1447 + $0x60] sm:$0xff]
    %v1461 = vld [vmem:[%s1447 + $0x68] sm:$0xff]
    %v1462 = vld [vmem:[%s1447 + $0x70] sm:$0xff]
    %v1463 = vld [vmem:[%s1447 + $0x78] sm:$0xff]
    %s1464 = scalar_lea.vmem %s1, 8
    %v1465 = vld [vmem:[%s1464] sm:$0xff]
    %s1466 = scalar_lea.vmem %s3, 8
    %v1467 = vld [vmem:[%s1466] sm:$0xff]
    %s1468 = scalar_lea.vmem %s5, 1
    %v1469 = vld [vmem:[%s1468] sm:$0x1]
    %v1471 = vperm.slane %v1469, 0
    %v1474 = vsel %vm96, %v1465, 0
    %1476 = vmatpush.msra.mxu0 0.0
    %1477 = vmatpush.msra.mxu0 0.0
    %1478 = vmatpush.msra.mxu0 0.0
    %1479 = vmatpush.msra.mxu0 0.0
    %1480 = vmatpush.msra.mxu0 0.0
    %1481 = vmatpush.msra.mxu0 0.0
    %1482 = vmatpush.msra.mxu0 0.0
    %1483 = vmatpush.msra.mxu0 0.0
    %1484 = vmatpush.msra.mxu0 0.0
    %1485 = vmatpush.msra.mxu0 0.0
    %1486 = vmatpush.msra.mxu0 0.0
    %1487 = vmatpush.msra.mxu0 0.0
    %1488 = vmatpush.msra.mxu0 0.0
    %1489 = vmatpush.msra.mxu0 0.0
    %1490 = vmatpush.msra.mxu0 0.0
    %1491 = vmatpush.msra.mxu0 %v1467
    %1492 = vmatmul.f32.gmra.mxu0 %v1474
    %v1493 = vpop.f32.mrf.mxu0
    %v1494 = vadd.f32 %v1471, %v1493
    %1495 = vdwg.mxu0
    %v1496 = vrot.slane %v1465, 1
    %v1497 = vrot.slane %v1465, 2
    %v1498 = vrot.slane %v1465, 3
    %v1499 = vrot.slane %v1465, 4
    %v1500 = vrot.slane %v1465, 5
    %v1501 = vrot.slane %v1465, 6
    %v1502 = vrot.slane %v1465, 7
    %v1503 = vperm.slane %v1465, 0
    %v1504 = vperm.slane %v1496, 0
    %v1505 = vperm.slane %v1497, 0
    %v1506 = vperm.slane %v1498, 0
    %v1507 = vperm.slane %v1499, 0
    %v1508 = vperm.slane %v1500, 0
    %v1509 = vperm.slane %v1501, 0
    %v1510 = vperm.slane %v1502, 0
    %v1519 = vmul.f32 %v1448, %v1503
    %v1520 = vmul.f32 %v1449, %v1503
    %v1521 = vmul.f32 %v1450, %v1504
    %v1522 = vmul.f32 %v1451, %v1504
    %v1523 = vmul.f32 %v1452, %v1505
    %v1524 = vmul.f32 %v1453, %v1505
    %v1525 = vmul.f32 %v1454, %v1506
    %v1526 = vmul.f32 %v1455, %v1506
    %v1527 = vmul.f32 %v1456, %v1507
    %v1528 = vmul.f32 %v1457, %v1507
    %v1529 = vmul.f32 %v1458, %v1508
    %v1530 = vmul.f32 %v1459, %v1508
    %v1531 = vmul.f32 %v1460, %v1509
    %v1532 = vmul.f32 %v1461, %v1509
    %v1533 = vmul.f32 %v1462, %v1510
    %v1534 = vmul.f32 %v1463, %v1510
    %1551 = vrot.lane.b32.xlu0 %v1519, 8
    %v1552 = vpop.permute.xlu0 %1551
    %1553 = vrot.lane.b32.xlu0 %v1520, 8
    %v1554 = vpop.permute.xlu0 %1553
    %1555 = vrot.lane.b32.xlu0 %v1521, 8
    %v1556 = vpop.permute.xlu0 %1555
    %1557 = vrot.lane.b32.xlu0 %v1522, 8
    %v1558 = vpop.permute.xlu0 %1557
    %1559 = vrot.lane.b32.xlu0 %v1523, 8
    %v1560 = vpop.permute.xlu0 %1559
    %1561 = vrot.lane.b32.xlu0 %v1524, 8
    %v1562 = vpop.permute.xlu0 %1561
    %1563 = vrot.lane.b32.xlu0 %v1525, 8
    %v1564 = vpop.permute.xlu0 %1563
    %1565 = vrot.lane.b32.xlu0 %v1526, 8
    %v1566 = vpop.permute.xlu0 %1565
    %1567 = vrot.lane.b32.xlu0 %v1527, 8
    %v1568 = vpop.permute.xlu0 %1567
    %1569 = vrot.lane.b32.xlu0 %v1528, 8
    %v1570 = vpop.permute.xlu0 %1569
    %1571 = vrot.lane.b32.xlu0 %v1529, 8
    %v1572 = vpop.permute.xlu0 %1571
    %1573 = vrot.lane.b32.xlu0 %v1530, 8
    %v1574 = vpop.permute.xlu0 %1573
    %1575 = vrot.lane.b32.xlu0 %v1531, 8
    %v1576 = vpop.permute.xlu0 %1575
    %1577 = vrot.lane.b32.xlu0 %v1532, 8
    %v1578 = vpop.permute.xlu0 %1577
    %1579 = vrot.lane.b32.xlu0 %v1533, 8
    %v1580 = vpop.permute.xlu0 %1579
    %1581 = vrot.lane.b32.xlu0 %v1534, 8
    %v1582 = vpop.permute.xlu0 %1581
    %v1599 = vsel %vm96, %v1448, %v1552
    %v1600 = vsel %vm96, %v1449, %v1554
    %v1601 = vsel %vm96, %v1450, %v1556
    %v1602 = vsel %vm96, %v1451, %v1558
    %v1603 = vsel %vm96, %v1452, %v1560
    %v1604 = vsel %vm96, %v1453, %v1562
    %v1605 = vsel %vm96, %v1454, %v1564
    %v1606 = vsel %vm96, %v1455, %v1566
    %v1607 = vsel %vm96, %v1456, %v1568
    %v1608 = vsel %vm96, %v1457, %v1570
    %v1609 = vsel %vm96, %v1458, %v1572
    %v1610 = vsel %vm96, %v1459, %v1574
    %v1611 = vsel %vm96, %v1460, %v1576
    %v1612 = vsel %vm96, %v1461, %v1578
    %v1613 = vsel %vm96, %v1462, %v1580
    %v1614 = vsel %vm96, %v1463, %v1582
    %s1615 = scalar_lea.vmem %s4, 16
    %v1616 = vld [vmem:[%s1615] sm:$0xff]
    %v1617 = vld [vmem:[%s1615 + $0x8] sm:$0xff]
    %v1619 = vsel %vm241, %v1599, 0
    %v1622 = vsel %vm241, %v1600, 0
    %v1625 = vsel %vm241, %v1601, 0
    %v1628 = vsel %vm241, %v1602, 0
    %v1631 = vsel %vm241, %v1603, 0
    %v1634 = vsel %vm241, %v1604, 0
    %v1637 = vsel %vm241, %v1605, 0
    %v1640 = vsel %vm241, %v1606, 0
    %v1643 = vsel %vm241, %v1607, 0
    %v1646 = vsel %vm241, %v1608, 0
    %v1649 = vsel %vm241, %v1609, 0
    %v1652 = vsel %vm241, %v1610, 0
    %v1655 = vsel %vm241, %v1611, 0
    %v1658 = vsel %vm241, %v1612, 0
    %v1661 = vsel %vm241, %v1613, 0
    %v1664 = vsel %vm241, %v1614, 0
    %1666 = vmatpush.msra.mxu0 0.0
    %1667 = vmatpush.msra.mxu0 0.0
    %1668 = vmatpush.msra.mxu0 0.0
    %1669 = vmatpush.msra.mxu0 0.0
    %1670 = vmatpush.msra.mxu0 0.0
    %1671 = vmatpush.msra.mxu0 0.0
    %1672 = vmatpush.msra.mxu0 0.0
    %1673 = vmatpush.msra.mxu0 0.0
    %1674 = vmatpush.msra.mxu0 0.0
    %1675 = vmatpush.msra.mxu0 0.0
    %1676 = vmatpush.msra.mxu0 0.0
    %1677 = vmatpush.msra.mxu0 0.0
    %1678 = vmatpush.msra.mxu0 0.0
    %1679 = vmatpush.msra.mxu0 0.0
    %1680 = vmatpush.msra.mxu0 %v1617
    %1681 = vmatpush.msra.mxu0 %v1616
    %1682 = vmatmul.f32.gmra.mxu0 %v1619
    %v1683 = vpop.f32.mrf.mxu0
    %v1684 = vadd.f32 0.0, %v1683
    %1685 = vmatmul.f32.gmra.mxu0 %v1622
    %v1686 = vpop.f32.mrf.mxu0
    %v1687 = vadd.f32 0.0, %v1686
    %1688 = vmatmul.f32.gmra.mxu0 %v1625
    %v1689 = vpop.f32.mrf.mxu0
    %v1690 = vadd.f32 0.0, %v1689
    %1691 = vmatmul.f32.gmra.mxu0 %v1628
    %v1692 = vpop.f32.mrf.mxu0
    %v1693 = vadd.f32 0.0, %v1692
    %1694 = vmatmul.f32.gmra.mxu0 %v1631
    %v1695 = vpop.f32.mrf.mxu0
    %v1696 = vadd.f32 0.0, %v1695
    %1697 = vmatmul.f32.gmra.mxu0 %v1634
    %v1698 = vpop.f32.mrf.mxu0
    %v1699 = vadd.f32 0.0, %v1698
    %1700 = vmatmul.f32.gmra.mxu0 %v1637
    %v1701 = vpop.f32.mrf.mxu0
    %v1702 = vadd.f32 0.0, %v1701
    %1703 = vmatmul.f32.gmra.mxu0 %v1640
    %v1704 = vpop.f32.mrf.mxu0
    %v1705 = vadd.f32 0.0, %v1704
    %1706 = vmatmul.f32.gmra.mxu0 %v1643
    %v1707 = vpop.f32.mrf.mxu0
    %v1708 = vadd.f32 0.0, %v1707
    %1709 = vmatmul.f32.gmra.mxu0 %v1646
    %v1710 = vpop.f32.mrf.mxu0
    %v1711 = vadd.f32 0.0, %v1710
    %1712 = vmatmul.f32.gmra.mxu0 %v1649
    %v1713 = vpop.f32.mrf.mxu0
    %v1714 = vadd.f32 0.0, %v1713
    %1715 = vmatmul.f32.gmra.mxu0 %v1652
    %v1716 = vpop.f32.mrf.mxu0
    %v1717 = vadd.f32 0.0, %v1716
    %1718 = vmatmul.f32.gmra.mxu0 %v1655
    %v1719 = vpop.f32.mrf.mxu0
    %v1720 = vadd.f32 0.0, %v1719
    %1721 = vmatmul.f32.gmra.mxu0 %v1658
    %v1722 = vpop.f32.mrf.mxu0
    %v1723 = vadd.f32 0.0, %v1722
    %1724 = vmatmul.f32.gmra.mxu0 %v1661
    %v1725 = vpop.f32.mrf.mxu0
    %v1726 = vadd.f32 0.0, %v1725
    %1727 = vmatmul.f32.gmra.mxu0 %v1664
    %v1728 = vpop.f32.mrf.mxu0
    %v1729 = vadd.f32 0.0, %v1728
    %1730 = vdwg.mxu0
    %v1732 = vrot.slane %v1494, 1
    %v1733 = vrot.slane %v1494, 2
    %v1734 = vrot.slane %v1494, 3
    %v1735 = vrot.slane %v1494, 4
    %v1736 = vrot.slane %v1494, 5
    %v1737 = vrot.slane %v1494, 6
    %v1738 = vrot.slane %v1494, 7
    %v1739 = vperm.slane %v1494, 0
    %v1740 = vperm.slane %v1732, 0
    %v1741 = vperm.slane %v1733, 0
    %v1742 = vperm.slane %v1734, 0
    %v1743 = vperm.slane %v1735, 0
    %v1744 = vperm.slane %v1736, 0
    %v1745 = vperm.slane %v1737, 0
    %v1746 = vperm.slane %v1738, 0
    %v1755 = vadd.f32 %v1684, %v1739
    %v1756 = vadd.f32 %v1687, %v1739
    %v1757 = vadd.f32 %v1690, %v1740
    %v1758 = vadd.f32 %v1693, %v1740
    %v1759 = vadd.f32 %v1696, %v1741
    %v1760 = vadd.f32 %v1699, %v1741
    %v1761 = vadd.f32 %v1702, %v1742
    %v1762 = vadd.f32 %v1705, %v1742
    %v1763 = vadd.f32 %v1708, %v1743
    %v1764 = vadd.f32 %v1711, %v1743
    %v1765 = vadd.f32 %v1714, %v1744
    %v1766 = vadd.f32 %v1717, %v1744
    %v1767 = vadd.f32 %v1720, %v1745
    %v1768 = vadd.f32 %v1723, %v1745
    %v1769 = vadd.f32 %v1726, %v1746
    %v1770 = vadd.f32 %v1729, %v1746
    %s1771 = scalar_lea.vmem %s6, 1
    %v1772 = vld [vmem:[%s1771] sm:$0x1]
    %v1773 = vsel %vm396, %v1755, 0.0
    %1774 = vadd.xlane.f32.xlu0 %v1773
    %v1775 = vpop.xlane.xlu0 %1774
    %v1776 = vsel %vm396, %v1756, 0.0
    %1777 = vadd.xlane.f32.xlu0 %v1776
    %v1778 = vpop.xlane.xlu0 %1777
    %v1779 = vsel %vm396, %v1757, 0.0
    %1780 = vadd.xlane.f32.xlu0 %v1779
    %v1781 = vpop.xlane.xlu0 %1780
    %v1782 = vsel %vm396, %v1758, 0.0
    %1783 = vadd.xlane.f32.xlu0 %v1782
    %v1784 = vpop.xlane.xlu0 %1783
    %v1785 = vsel %vm396, %v1759, 0.0
    %1786 = vadd.xlane.f32.xlu0 %v1785
    %v1787 = vpop.xlane.xlu0 %1786
    %v1788 = vsel %vm396, %v1760, 0.0
    %1789 = vadd.xlane.f32.xlu0 %v1788
    %v1790 = vpop.xlane.xlu0 %1789
    %v1791 = vsel %vm396, %v1761, 0.0
    %1792 = vadd.xlane.f32.xlu0 %v1791
    %v1793 = vpop.xlane.xlu0 %1792
    %v1794 = vsel %vm396, %v1762, 0.0
    %1795 = vadd.xlane.f32.xlu0 %v1794
    %v1796 = vpop.xlane.xlu0 %1795
    %v1797 = vsel %vm396, %v1763, 0.0
    %1798 = vadd.xlane.f32.xlu0 %v1797
    %v1799 = vpop.xlane.xlu0 %1798
    %v1800 = vsel %vm396, %v1764, 0.0
    %1801 = vadd.xlane.f32.xlu0 %v1800
    %v1802 = vpop.xlane.xlu0 %1801
    %v1803 = vsel %vm396, %v1765, 0.0
    %1804 = vadd.xlane.f32.xlu0 %v1803
    %v1805 = vpop.xlane.xlu0 %1804
    %v1806 = vsel %vm396, %v1766, 0.0
    %1807 = vadd.xlane.f32.xlu0 %v1806
    %v1808 = vpop.xlane.xlu0 %1807
    %v1809 = vsel %vm396, %v1767, 0.0
    %1810 = vadd.xlane.f32.xlu0 %v1809
    %v1811 = vpop.xlane.xlu0 %1810
    %v1812 = vsel %vm396, %v1768, 0.0
    %1813 = vadd.xlane.f32.xlu0 %v1812
    %v1814 = vpop.xlane.xlu0 %1813
    %v1815 = vsel %vm396, %v1769, 0.0
    %1816 = vadd.xlane.f32.xlu0 %v1815
    %v1817 = vpop.xlane.xlu0 %1816
    %v1818 = vsel %vm396, %v1770, 0.0
    %1819 = vadd.xlane.f32.xlu0 %v1818
    %v1820 = vpop.xlane.xlu0 %1819
    %v1821 = vmul.f32 %v1775, %v451
    %v1822 = vmul.f32 %v1778, %v451
    %v1823 = vmul.f32 %v1781, %v451
    %v1824 = vmul.f32 %v1784, %v451
    %v1825 = vmul.f32 %v1787, %v451
    %v1826 = vmul.f32 %v1790, %v451
    %v1827 = vmul.f32 %v1793, %v451
    %v1828 = vmul.f32 %v1796, %v451
    %v1829 = vmul.f32 %v1799, %v451
    %v1830 = vmul.f32 %v1802, %v451
    %v1831 = vmul.f32 %v1805, %v451
    %v1832 = vmul.f32 %v1808, %v451
    %v1833 = vmul.f32 %v1811, %v451
    %v1834 = vmul.f32 %v1814, %v451
    %v1835 = vmul.f32 %v1817, %v451
    %v1836 = vmul.f32 %v1820, %v451
    %v1837 = vsub.f32 %v1755, %v1821
    %v1838 = vsub.f32 %v1756, %v1822
    %v1839 = vsub.f32 %v1757, %v1823
    %v1840 = vsub.f32 %v1758, %v1824
    %v1841 = vsub.f32 %v1759, %v1825
    %v1842 = vsub.f32 %v1760, %v1826
    %v1843 = vsub.f32 %v1761, %v1827
    %v1844 = vsub.f32 %v1762, %v1828
    %v1845 = vsub.f32 %v1763, %v1829
    %v1846 = vsub.f32 %v1764, %v1830
    %v1847 = vsub.f32 %v1765, %v1831
    %v1848 = vsub.f32 %v1766, %v1832
    %v1849 = vsub.f32 %v1767, %v1833
    %v1850 = vsub.f32 %v1768, %v1834
    %v1851 = vsub.f32 %v1769, %v1835
    %v1852 = vsub.f32 %v1770, %v1836
    %v1853 = vmul.f32 %v1837, %v1837
    %v1854 = vmul.f32 %v1838, %v1838
    %v1855 = vmul.f32 %v1839, %v1839
    %v1856 = vmul.f32 %v1840, %v1840
    %v1857 = vmul.f32 %v1841, %v1841
    %v1858 = vmul.f32 %v1842, %v1842
    %v1859 = vmul.f32 %v1843, %v1843
    %v1860 = vmul.f32 %v1844, %v1844
    %v1861 = vmul.f32 %v1845, %v1845
    %v1862 = vmul.f32 %v1846, %v1846
    %v1863 = vmul.f32 %v1847, %v1847
    %v1864 = vmul.f32 %v1848, %v1848
    %v1865 = vmul.f32 %v1849, %v1849
    %v1866 = vmul.f32 %v1850, %v1850
    %v1867 = vmul.f32 %v1851, %v1851
    %v1868 = vmul.f32 %v1852, %v1852
    %v1869 = vsel %vm396, %v1853, 0.0
    %1870 = vadd.xlane.f32.xlu0 %v1869
    %v1871 = vpop.xlane.xlu0 %1870
    %v1872 = vsel %vm396, %v1854, 0.0
    %1873 = vadd.xlane.f32.xlu0 %v1872
    %v1874 = vpop.xlane.xlu0 %1873
    %v1875 = vsel %vm396, %v1855, 0.0
    %1876 = vadd.xlane.f32.xlu0 %v1875
    %v1877 = vpop.xlane.xlu0 %1876
    %v1878 = vsel %vm396, %v1856, 0.0
    %1879 = vadd.xlane.f32.xlu0 %v1878
    %v1880 = vpop.xlane.xlu0 %1879
    %v1881 = vsel %vm396, %v1857, 0.0
    %1882 = vadd.xlane.f32.xlu0 %v1881
    %v1883 = vpop.xlane.xlu0 %1882
    %v1884 = vsel %vm396, %v1858, 0.0
    %1885 = vadd.xlane.f32.xlu0 %v1884
    %v1886 = vpop.xlane.xlu0 %1885
    %v1887 = vsel %vm396, %v1859, 0.0
    %1888 = vadd.xlane.f32.xlu0 %v1887
    %v1889 = vpop.xlane.xlu0 %1888
    %v1890 = vsel %vm396, %v1860, 0.0
    %1891 = vadd.xlane.f32.xlu0 %v1890
    %v1892 = vpop.xlane.xlu0 %1891
    %v1893 = vsel %vm396, %v1861, 0.0
    %1894 = vadd.xlane.f32.xlu0 %v1893
    %v1895 = vpop.xlane.xlu0 %1894
    %v1896 = vsel %vm396, %v1862, 0.0
    %1897 = vadd.xlane.f32.xlu0 %v1896
    %v1898 = vpop.xlane.xlu0 %1897
    %v1899 = vsel %vm396, %v1863, 0.0
    %1900 = vadd.xlane.f32.xlu0 %v1899
    %v1901 = vpop.xlane.xlu0 %1900
    %v1902 = vsel %vm396, %v1864, 0.0
    %1903 = vadd.xlane.f32.xlu0 %v1902
    %v1904 = vpop.xlane.xlu0 %1903
    %v1905 = vsel %vm396, %v1865, 0.0
    %1906 = vadd.xlane.f32.xlu0 %v1905
    %v1907 = vpop.xlane.xlu0 %1906
    %v1908 = vsel %vm396, %v1866, 0.0
    %1909 = vadd.xlane.f32.xlu0 %v1908
    %v1910 = vpop.xlane.xlu0 %1909
    %v1911 = vsel %vm396, %v1867, 0.0
    %1912 = vadd.xlane.f32.xlu0 %v1911
    %v1913 = vpop.xlane.xlu0 %1912
    %v1914 = vsel %vm396, %v1868, 0.0
    %1915 = vadd.xlane.f32.xlu0 %v1914
    %v1916 = vpop.xlane.xlu0 %1915
    %v1917 = vmul.f32 %v1871, %v451
    %v1918 = vmul.f32 %v1874, %v451
    %v1919 = vmul.f32 %v1877, %v451
    %v1920 = vmul.f32 %v1880, %v451
    %v1921 = vmul.f32 %v1883, %v451
    %v1922 = vmul.f32 %v1886, %v451
    %v1923 = vmul.f32 %v1889, %v451
    %v1924 = vmul.f32 %v1892, %v451
    %v1925 = vmul.f32 %v1895, %v451
    %v1926 = vmul.f32 %v1898, %v451
    %v1927 = vmul.f32 %v1901, %v451
    %v1928 = vmul.f32 %v1904, %v451
    %v1929 = vmul.f32 %v1907, %v451
    %v1930 = vmul.f32 %v1910, %v451
    %v1931 = vmul.f32 %v1913, %v451
    %v1932 = vmul.f32 %v1916, %v451
    %v1933 = vadd.f32 %v1917, 0.001
    %v1934 = vadd.f32 %v1918, 0.001
    %v1935 = vadd.f32 %v1919, 0.001
    %v1936 = vadd.f32 %v1920, 0.001
    %v1937 = vadd.f32 %v1921, 0.001
    %v1938 = vadd.f32 %v1922, 0.001
    %v1939 = vadd.f32 %v1923, 0.001
    %v1940 = vadd.f32 %v1924, 0.001
    %v1941 = vadd.f32 %v1925, 0.001
    %v1942 = vadd.f32 %v1926, 0.001
    %v1943 = vadd.f32 %v1927, 0.001
    %v1944 = vadd.f32 %v1928, 0.001
    %v1945 = vadd.f32 %v1929, 0.001
    %v1946 = vadd.f32 %v1930, 0.001
    %v1947 = vadd.f32 %v1931, 0.001
    %v1948 = vadd.f32 %v1932, 0.001
    %v1949 = vrsqrt.pop %v1933
    %v1950 = vmul.f32 %v1949, %v1933
    %v1951 = vmul.f32 %v1950, %v1949
    %v1952 = vmul.f32 0.5, %v1951
    %v1953 = vsub.f32 1.5, %v1952
    %v1954 = vmul.f32 %v1949, %v1953
    %vm1955 = vweird.f32 %v1933
    %vm1956 = vweird.f32 %v1949
    %vm1957 = vmor %vm1955, %vm1956
    %v1958 = vsel %vm1957, %v1949, %v1954
    %v1959 = vrsqrt.pop %v1934
    %v1960 = vmul.f32 %v1959, %v1934
    %v1961 = vmul.f32 %v1960, %v1959
    %v1962 = vmul.f32 0.5, %v1961
    %v1963 = vsub.f32 1.5, %v1962
    %v1964 = vmul.f32 %v1959, %v1963
    %vm1965 = vweird.f32 %v1934
    %vm1966 = vweird.f32 %v1959
    %vm1967 = vmor %vm1965, %vm1966
    %v1968 = vsel %vm1967, %v1959, %v1964
    %v1969 = vrsqrt.pop %v1935
    %v1970 = vmul.f32 %v1969, %v1935
    %v1971 = vmul.f32 %v1970, %v1969
    %v1972 = vmul.f32 0.5, %v1971
    %v1973 = vsub.f32 1.5, %v1972
    %v1974 = vmul.f32 %v1969, %v1973
    %vm1975 = vweird.f32 %v1935
    %vm1976 = vweird.f32 %v1969
    %vm1977 = vmor %vm1975, %vm1976
    %v1978 = vsel %vm1977, %v1969, %v1974
    %v1979 = vrsqrt.pop %v1936
    %v1980 = vmul.f32 %v1979, %v1936
    %v1981 = vmul.f32 %v1980, %v1979
    %v1982 = vmul.f32 0.5, %v1981
    %v1983 = vsub.f32 1.5, %v1982
    %v1984 = vmul.f32 %v1979, %v1983
    %vm1985 = vweird.f32 %v1936
    %vm1986 = vweird.f32 %v1979
    %vm1987 = vmor %vm1985, %vm1986
    %v1988 = vsel %vm1987, %v1979, %v1984
    %v1989 = vrsqrt.pop %v1937
    %v1990 = vmul.f32 %v1989, %v1937
    %v1991 = vmul.f32 %v1990, %v1989
    %v1992 = vmul.f32 0.5, %v1991
    %v1993 = vsub.f32 1.5, %v1992
    %v1994 = vmul.f32 %v1989, %v1993
    %vm1995 = vweird.f32 %v1937
    %vm1996 = vweird.f32 %v1989
    %vm1997 = vmor %vm1995, %vm1996
    %v1998 = vsel %vm1997, %v1989, %v1994
    %v1999 = vrsqrt.pop %v1938
    %v2000 = vmul.f32 %v1999, %v1938
    %v2001 = vmul.f32 %v2000, %v1999
    %v2002 = vmul.f32 0.5, %v2001
    %v2003 = vsub.f32 1.5, %v2002
    %v2004 = vmul.f32 %v1999, %v2003
    %vm2005 = vweird.f32 %v1938
    %vm2006 = vweird.f32 %v1999
    %vm2007 = vmor %vm2005, %vm2006
    %v2008 = vsel %vm2007, %v1999, %v2004
    %v2009 = vrsqrt.pop %v1939
    %v2010 = vmul.f32 %v2009, %v1939
    %v2011 = vmul.f32 %v2010, %v2009
    %v2012 = vmul.f32 0.5, %v2011
    %v2013 = vsub.f32 1.5, %v2012
    %v2014 = vmul.f32 %v2009, %v2013
    %vm2015 = vweird.f32 %v1939
    %vm2016 = vweird.f32 %v2009
    %vm2017 = vmor %vm2015, %vm2016
    %v2018 = vsel %vm2017, %v2009, %v2014
    %v2019 = vrsqrt.pop %v1940
    %v2020 = vmul.f32 %v2019, %v1940
    %v2021 = vmul.f32 %v2020, %v2019
    %v2022 = vmul.f32 0.5, %v2021
    %v2023 = vsub.f32 1.5, %v2022
    %v2024 = vmul.f32 %v2019, %v2023
    %vm2025 = vweird.f32 %v1940
    %vm2026 = vweird.f32 %v2019
    %vm2027 = vmor %vm2025, %vm2026
    %v2028 = vsel %vm2027, %v2019, %v2024
    %v2029 = vrsqrt.pop %v1941
    %v2030 = vmul.f32 %v2029, %v1941
    %v2031 = vmul.f32 %v2030, %v2029
    %v2032 = vmul.f32 0.5, %v2031
    %v2033 = vsub.f32 1.5, %v2032
    %v2034 = vmul.f32 %v2029, %v2033
    %vm2035 = vweird.f32 %v1941
    %vm2036 = vweird.f32 %v2029
    %vm2037 = vmor %vm2035, %vm2036
    %v2038 = vsel %vm2037, %v2029, %v2034
    %v2039 = vrsqrt.pop %v1942
    %v2040 = vmul.f32 %v2039, %v1942
    %v2041 = vmul.f32 %v2040, %v2039
    %v2042 = vmul.f32 0.5, %v2041
    %v2043 = vsub.f32 1.5, %v2042
    %v2044 = vmul.f32 %v2039, %v2043
    %vm2045 = vweird.f32 %v1942
    %vm2046 = vweird.f32 %v2039
    %vm2047 = vmor %vm2045, %vm2046
    %v2048 = vsel %vm2047, %v2039, %v2044
    %v2049 = vrsqrt.pop %v1943
    %v2050 = vmul.f32 %v2049, %v1943
    %v2051 = vmul.f32 %v2050, %v2049
    %v2052 = vmul.f32 0.5, %v2051
    %v2053 = vsub.f32 1.5, %v2052
    %v2054 = vmul.f32 %v2049, %v2053
    %vm2055 = vweird.f32 %v1943
    %vm2056 = vweird.f32 %v2049
    %vm2057 = vmor %vm2055, %vm2056
    %v2058 = vsel %vm2057, %v2049, %v2054
    %v2059 = vrsqrt.pop %v1944
    %v2060 = vmul.f32 %v2059, %v1944
    %v2061 = vmul.f32 %v2060, %v2059
    %v2062 = vmul.f32 0.5, %v2061
    %v2063 = vsub.f32 1.5, %v2062
    %v2064 = vmul.f32 %v2059, %v2063
    %vm2065 = vweird.f32 %v1944
    %vm2066 = vweird.f32 %v2059
    %vm2067 = vmor %vm2065, %vm2066
    %v2068 = vsel %vm2067, %v2059, %v2064
    %v2069 = vrsqrt.pop %v1945
    %v2070 = vmul.f32 %v2069, %v1945
    %v2071 = vmul.f32 %v2070, %v2069
    %v2072 = vmul.f32 0.5, %v2071
    %v2073 = vsub.f32 1.5, %v2072
    %v2074 = vmul.f32 %v2069, %v2073
    %vm2075 = vweird.f32 %v1945
    %vm2076 = vweird.f32 %v2069
    %vm2077 = vmor %vm2075, %vm2076
    %v2078 = vsel %vm2077, %v2069, %v2074
    %v2079 = vrsqrt.pop %v1946
    %v2080 = vmul.f32 %v2079, %v1946
    %v2081 = vmul.f32 %v2080, %v2079
    %v2082 = vmul.f32 0.5, %v2081
    %v2083 = vsub.f32 1.5, %v2082
    %v2084 = vmul.f32 %v2079, %v2083
    %vm2085 = vweird.f32 %v1946
    %vm2086 = vweird.f32 %v2079
    %vm2087 = vmor %vm2085, %vm2086
    %v2088 = vsel %vm2087, %v2079, %v2084
    %v2089 = vrsqrt.pop %v1947
    %v2090 = vmul.f32 %v2089, %v1947
    %v2091 = vmul.f32 %v2090, %v2089
    %v2092 = vmul.f32 0.5, %v2091
    %v2093 = vsub.f32 1.5, %v2092
    %v2094 = vmul.f32 %v2089, %v2093
    %vm2095 = vweird.f32 %v1947
    %vm2096 = vweird.f32 %v2089
    %vm2097 = vmor %vm2095, %vm2096
    %v2098 = vsel %vm2097, %v2089, %v2094
    %v2099 = vrsqrt.pop %v1948
    %v2100 = vmul.f32 %v2099, %v1948
    %v2101 = vmul.f32 %v2100, %v2099
    %v2102 = vmul.f32 0.5, %v2101
    %v2103 = vsub.f32 1.5, %v2102
    %v2104 = vmul.f32 %v2099, %v2103
    %vm2105 = vweird.f32 %v1948
    %vm2106 = vweird.f32 %v2099
    %vm2107 = vmor %vm2105, %vm2106
    %v2108 = vsel %vm2107, %v2099, %v2104
    %v2109 = vmul.f32 %v1837, %v1958
    %v2110 = vmul.f32 %v1838, %v1968
    %v2111 = vmul.f32 %v1839, %v1978
    %v2112 = vmul.f32 %v1840, %v1988
    %v2113 = vmul.f32 %v1841, %v1998
    %v2114 = vmul.f32 %v1842, %v2008
    %v2115 = vmul.f32 %v1843, %v2018
    %v2116 = vmul.f32 %v1844, %v2028
    %v2117 = vmul.f32 %v1845, %v2038
    %v2118 = vmul.f32 %v1846, %v2048
    %v2119 = vmul.f32 %v1847, %v2058
    %v2120 = vmul.f32 %v1848, %v2068
    %v2121 = vmul.f32 %v1849, %v2078
    %v2122 = vmul.f32 %v1850, %v2088
    %v2123 = vmul.f32 %v1851, %v2098
    %v2124 = vmul.f32 %v1852, %v2108
    %v2125 = vxor.u32 %v2109, 2147483648
    %v2126 = vxor.u32 %v2110, 2147483648
    %v2127 = vxor.u32 %v2111, 2147483648
    %v2128 = vxor.u32 %v2112, 2147483648
    %v2129 = vxor.u32 %v2113, 2147483648
    %v2130 = vxor.u32 %v2114, 2147483648
    %v2131 = vxor.u32 %v2115, 2147483648
    %v2132 = vxor.u32 %v2116, 2147483648
    %v2133 = vxor.u32 %v2117, 2147483648
    %v2134 = vxor.u32 %v2118, 2147483648
    %v2135 = vxor.u32 %v2119, 2147483648
    %v2136 = vxor.u32 %v2120, 2147483648
    %v2137 = vxor.u32 %v2121, 2147483648
    %v2138 = vxor.u32 %v2122, 2147483648
    %v2139 = vxor.u32 %v2123, 2147483648
    %v2140 = vxor.u32 %v2124, 2147483648
    %v2141 = vmul.f32 %v2125, 1.442695
    %v2142 = vpow.pop %v2141
    %v2143 = vmul.f32 %v2126, 1.442695
    %v2144 = vpow.pop %v2143
    %v2145 = vmul.f32 %v2127, 1.442695
    %v2146 = vpow.pop %v2145
    %v2147 = vmul.f32 %v2128, 1.442695
    %v2148 = vpow.pop %v2147
    %v2149 = vmul.f32 %v2129, 1.442695
    %v2150 = vpow.pop %v2149
    %v2151 = vmul.f32 %v2130, 1.442695
    %v2152 = vpow.pop %v2151
    %v2153 = vmul.f32 %v2131, 1.442695
    %v2154 = vpow.pop %v2153
    %v2155 = vmul.f32 %v2132, 1.442695
    %v2156 = vpow.pop %v2155
    %v2157 = vmul.f32 %v2133, 1.442695
    %v2158 = vpow.pop %v2157
    %v2159 = vmul.f32 %v2134, 1.442695
    %v2160 = vpow.pop %v2159
    %v2161 = vmul.f32 %v2135, 1.442695
    %v2162 = vpow.pop %v2161
    %v2163 = vmul.f32 %v2136, 1.442695
    %v2164 = vpow.pop %v2163
    %v2165 = vmul.f32 %v2137, 1.442695
    %v2166 = vpow.pop %v2165
    %v2167 = vmul.f32 %v2138, 1.442695
    %v2168 = vpow.pop %v2167
    %v2169 = vmul.f32 %v2139, 1.442695
    %v2170 = vpow.pop %v2169
    %v2171 = vmul.f32 %v2140, 1.442695
    %v2172 = vpow.pop %v2171
    %v2173 = vadd.f32 %v2142, 1.0
    %v2174 = vadd.f32 %v2144, 1.0
    %v2175 = vadd.f32 %v2146, 1.0
    %v2176 = vadd.f32 %v2148, 1.0
    %v2177 = vadd.f32 %v2150, 1.0
    %v2178 = vadd.f32 %v2152, 1.0
    %v2179 = vadd.f32 %v2154, 1.0
    %v2180 = vadd.f32 %v2156, 1.0
    %v2181 = vadd.f32 %v2158, 1.0
    %v2182 = vadd.f32 %v2160, 1.0
    %v2183 = vadd.f32 %v2162, 1.0
    %v2184 = vadd.f32 %v2164, 1.0
    %v2185 = vadd.f32 %v2166, 1.0
    %v2186 = vadd.f32 %v2168, 1.0
    %v2187 = vadd.f32 %v2170, 1.0
    %v2188 = vadd.f32 %v2172, 1.0
    %v2189 = vrcp.pop %v2173
    %v2190 = vmul.f32 %v2173, %v2189
    %v2191 = vsub.f32 1.0, %v2190
    %v2192 = vmul.f32 %v2189, %v2191
    %v2193 = vadd.f32 %v2189, %v2192
    %vm2194 = vweird.f32 %v2173
    %vm2195 = vweird.f32 %v2189
    %vm2196 = vmor %vm2194, %vm2195
    %v2197 = vsel %vm2196, %v2189, %v2193
    %v2198 = vand.u32 2147483647, %v2173
    %vm2199 = vcmp.eq.f32.partialorder %v2198, 8.507059e+37
    %v2200 = vand.u32 %v2173, 2147483648
    %v2201 = vor.u32 1.1754944e-38, %v2200
    %v2202 = vsel %vm2199, %v2201, %v2197
    %v2203 = vmul.f32 1.0, %v2202
    %v2204 = vrcp.pop %v2174
    %v2205 = vmul.f32 %v2174, %v2204
    %v2206 = vsub.f32 1.0, %v2205
    %v2207 = vmul.f32 %v2204, %v2206
    %v2208 = vadd.f32 %v2204, %v2207
    %vm2209 = vweird.f32 %v2174
    %vm2210 = vweird.f32 %v2204
    %vm2211 = vmor %vm2209, %vm2210
    %v2212 = vsel %vm2211, %v2204, %v2208
    %v2213 = vand.u32 2147483647, %v2174
    %vm2214 = vcmp.eq.f32.partialorder %v2213, 8.507059e+37
    %v2215 = vand.u32 %v2174, 2147483648
    %v2216 = vor.u32 1.1754944e-38, %v2215
    %v2217 = vsel %vm2214, %v2216, %v2212
    %v2218 = vmul.f32 1.0, %v2217
    %v2219 = vrcp.pop %v2175
    %v2220 = vmul.f32 %v2175, %v2219
    %v2221 = vsub.f32 1.0, %v2220
    %v2222 = vmul.f32 %v2219, %v2221
    %v2223 = vadd.f32 %v2219, %v2222
    %vm2224 = vweird.f32 %v2175
    %vm2225 = vweird.f32 %v2219
    %vm2226 = vmor %vm2224, %vm2225
    %v2227 = vsel %vm2226, %v2219, %v2223
    %v2228 = vand.u32 2147483647, %v2175
    %vm2229 = vcmp.eq.f32.partialorder %v2228, 8.507059e+37
    %v2230 = vand.u32 %v2175, 2147483648
    %v2231 = vor.u32 1.1754944e-38, %v2230
    %v2232 = vsel %vm2229, %v2231, %v2227
    %v2233 = vmul.f32 1.0, %v2232
    %v2234 = vrcp.pop %v2176
    %v2235 = vmul.f32 %v2176, %v2234
    %v2236 = vsub.f32 1.0, %v2235
    %v2237 = vmul.f32 %v2234, %v2236
    %v2238 = vadd.f32 %v2234, %v2237
    %vm2239 = vweird.f32 %v2176
    %vm2240 = vweird.f32 %v2234
    %vm2241 = vmor %vm2239, %vm2240
    %v2242 = vsel %vm2241, %v2234, %v2238
    %v2243 = vand.u32 2147483647, %v2176
    %vm2244 = vcmp.eq.f32.partialorder %v2243, 8.507059e+37
    %v2245 = vand.u32 %v2176, 2147483648
    %v2246 = vor.u32 1.1754944e-38, %v2245
    %v2247 = vsel %vm2244, %v2246, %v2242
    %v2248 = vmul.f32 1.0, %v2247
    %v2249 = vrcp.pop %v2177
    %v2250 = vmul.f32 %v2177, %v2249
    %v2251 = vsub.f32 1.0, %v2250
    %v2252 = vmul.f32 %v2249, %v2251
    %v2253 = vadd.f32 %v2249, %v2252
    %vm2254 = vweird.f32 %v2177
    %vm2255 = vweird.f32 %v2249
    %vm2256 = vmor %vm2254, %vm2255
    %v2257 = vsel %vm2256, %v2249, %v2253
    %v2258 = vand.u32 2147483647, %v2177
    %vm2259 = vcmp.eq.f32.partialorder %v2258, 8.507059e+37
    %v2260 = vand.u32 %v2177, 2147483648
    %v2261 = vor.u32 1.1754944e-38, %v2260
    %v2262 = vsel %vm2259, %v2261, %v2257
    %v2263 = vmul.f32 1.0, %v2262
    %v2264 = vrcp.pop %v2178
    %v2265 = vmul.f32 %v2178, %v2264
    %v2266 = vsub.f32 1.0, %v2265
    %v2267 = vmul.f32 %v2264, %v2266
    %v2268 = vadd.f32 %v2264, %v2267
    %vm2269 = vweird.f32 %v2178
    %vm2270 = vweird.f32 %v2264
    %vm2271 = vmor %vm2269, %vm2270
    %v2272 = vsel %vm2271, %v2264, %v2268
    %v2273 = vand.u32 2147483647, %v2178
    %vm2274 = vcmp.eq.f32.partialorder %v2273, 8.507059e+37
    %v2275 = vand.u32 %v2178, 2147483648
    %v2276 = vor.u32 1.1754944e-38, %v2275
    %v2277 = vsel %vm2274, %v2276, %v2272
    %v2278 = vmul.f32 1.0, %v2277
    %v2279 = vrcp.pop %v2179
    %v2280 = vmul.f32 %v2179, %v2279
    %v2281 = vsub.f32 1.0, %v2280
    %v2282 = vmul.f32 %v2279, %v2281
    %v2283 = vadd.f32 %v2279, %v2282
    %vm2284 = vweird.f32 %v2179
    %vm2285 = vweird.f32 %v2279
    %vm2286 = vmor %vm2284, %vm2285
    %v2287 = vsel %vm2286, %v2279, %v2283
    %v2288 = vand.u32 2147483647, %v2179
    %vm2289 = vcmp.eq.f32.partialorder %v2288, 8.507059e+37
    %v2290 = vand.u32 %v2179, 2147483648
    %v2291 = vor.u32 1.1754944e-38, %v2290
    %v2292 = vsel %vm2289, %v2291, %v2287
    %v2293 = vmul.f32 1.0, %v2292
    %v2294 = vrcp.pop %v2180
    %v2295 = vmul.f32 %v2180, %v2294
    %v2296 = vsub.f32 1.0, %v2295
    %v2297 = vmul.f32 %v2294, %v2296
    %v2298 = vadd.f32 %v2294, %v2297
    %vm2299 = vweird.f32 %v2180
    %vm2300 = vweird.f32 %v2294
    %vm2301 = vmor %vm2299, %vm2300
    %v2302 = vsel %vm2301, %v2294, %v2298
    %v2303 = vand.u32 2147483647, %v2180
    %vm2304 = vcmp.eq.f32.partialorder %v2303, 8.507059e+37
    %v2305 = vand.u32 %v2180, 2147483648
    %v2306 = vor.u32 1.1754944e-38, %v2305
    %v2307 = vsel %vm2304, %v2306, %v2302
    %v2308 = vmul.f32 1.0, %v2307
    %v2309 = vrcp.pop %v2181
    %v2310 = vmul.f32 %v2181, %v2309
    %v2311 = vsub.f32 1.0, %v2310
    %v2312 = vmul.f32 %v2309, %v2311
    %v2313 = vadd.f32 %v2309, %v2312
    %vm2314 = vweird.f32 %v2181
    %vm2315 = vweird.f32 %v2309
    %vm2316 = vmor %vm2314, %vm2315
    %v2317 = vsel %vm2316, %v2309, %v2313
    %v2318 = vand.u32 2147483647, %v2181
    %vm2319 = vcmp.eq.f32.partialorder %v2318, 8.507059e+37
    %v2320 = vand.u32 %v2181, 2147483648
    %v2321 = vor.u32 1.1754944e-38, %v2320
    %v2322 = vsel %vm2319, %v2321, %v2317
    %v2323 = vmul.f32 1.0, %v2322
    %v2324 = vrcp.pop %v2182
    %v2325 = vmul.f32 %v2182, %v2324
    %v2326 = vsub.f32 1.0, %v2325
    %v2327 = vmul.f32 %v2324, %v2326
    %v2328 = vadd.f32 %v2324, %v2327
    %vm2329 = vweird.f32 %v2182
    %vm2330 = vweird.f32 %v2324
    %vm2331 = vmor %vm2329, %vm2330
    %v2332 = vsel %vm2331, %v2324, %v2328
    %v2333 = vand.u32 2147483647, %v2182
    %vm2334 = vcmp.eq.f32.partialorder %v2333, 8.507059e+37
    %v2335 = vand.u32 %v2182, 2147483648
    %v2336 = vor.u32 1.1754944e-38, %v2335
    %v2337 = vsel %vm2334, %v2336, %v2332
    %v2338 = vmul.f32 1.0, %v2337
    %v2339 = vrcp.pop %v2183
    %v2340 = vmul.f32 %v2183, %v2339
    %v2341 = vsub.f32 1.0, %v2340
    %v2342 = vmul.f32 %v2339, %v2341
    %v2343 = vadd.f32 %v2339, %v2342
    %vm2344 = vweird.f32 %v2183
    %vm2345 = vweird.f32 %v2339
    %vm2346 = vmor %vm2344, %vm2345
    %v2347 = vsel %vm2346, %v2339, %v2343
    %v2348 = vand.u32 2147483647, %v2183
    %vm2349 = vcmp.eq.f32.partialorder %v2348, 8.507059e+37
    %v2350 = vand.u32 %v2183, 2147483648
    %v2351 = vor.u32 1.1754944e-38, %v2350
    %v2352 = vsel %vm2349, %v2351, %v2347
    %v2353 = vmul.f32 1.0, %v2352
    %v2354 = vrcp.pop %v2184
    %v2355 = vmul.f32 %v2184, %v2354
    %v2356 = vsub.f32 1.0, %v2355
    %v2357 = vmul.f32 %v2354, %v2356
    %v2358 = vadd.f32 %v2354, %v2357
    %vm2359 = vweird.f32 %v2184
    %vm2360 = vweird.f32 %v2354
    %vm2361 = vmor %vm2359, %vm2360
    %v2362 = vsel %vm2361, %v2354, %v2358
    %v2363 = vand.u32 2147483647, %v2184
    %vm2364 = vcmp.eq.f32.partialorder %v2363, 8.507059e+37
    %v2365 = vand.u32 %v2184, 2147483648
    %v2366 = vor.u32 1.1754944e-38, %v2365
    %v2367 = vsel %vm2364, %v2366, %v2362
    %v2368 = vmul.f32 1.0, %v2367
    %v2369 = vrcp.pop %v2185
    %v2370 = vmul.f32 %v2185, %v2369
    %v2371 = vsub.f32 1.0, %v2370
    %v2372 = vmul.f32 %v2369, %v2371
    %v2373 = vadd.f32 %v2369, %v2372
    %vm2374 = vweird.f32 %v2185
    %vm2375 = vweird.f32 %v2369
    %vm2376 = vmor %vm2374, %vm2375
    %v2377 = vsel %vm2376, %v2369, %v2373
    %v2378 = vand.u32 2147483647, %v2185
    %vm2379 = vcmp.eq.f32.partialorder %v2378, 8.507059e+37
    %v2380 = vand.u32 %v2185, 2147483648
    %v2381 = vor.u32 1.1754944e-38, %v2380
    %v2382 = vsel %vm2379, %v2381, %v2377
    %v2383 = vmul.f32 1.0, %v2382
    %v2384 = vrcp.pop %v2186
    %v2385 = vmul.f32 %v2186, %v2384
    %v2386 = vsub.f32 1.0, %v2385
    %v2387 = vmul.f32 %v2384, %v2386
    %v2388 = vadd.f32 %v2384, %v2387
    %vm2389 = vweird.f32 %v2186
    %vm2390 = vweird.f32 %v2384
    %vm2391 = vmor %vm2389, %vm2390
    %v2392 = vsel %vm2391, %v2384, %v2388
    %v2393 = vand.u32 2147483647, %v2186
    %vm2394 = vcmp.eq.f32.partialorder %v2393, 8.507059e+37
    %v2395 = vand.u32 %v2186, 2147483648
    %v2396 = vor.u32 1.1754944e-38, %v2395
    %v2397 = vsel %vm2394, %v2396, %v2392
    %v2398 = vmul.f32 1.0, %v2397
    %v2399 = vrcp.pop %v2187
    %v2400 = vmul.f32 %v2187, %v2399
    %v2401 = vsub.f32 1.0, %v2400
    %v2402 = vmul.f32 %v2399, %v2401
    %v2403 = vadd.f32 %v2399, %v2402
    %vm2404 = vweird.f32 %v2187
    %vm2405 = vweird.f32 %v2399
    %vm2406 = vmor %vm2404, %vm2405
    %v2407 = vsel %vm2406, %v2399, %v2403
    %v2408 = vand.u32 2147483647, %v2187
    %vm2409 = vcmp.eq.f32.partialorder %v2408, 8.507059e+37
    %v2410 = vand.u32 %v2187, 2147483648
    %v2411 = vor.u32 1.1754944e-38, %v2410
    %v2412 = vsel %vm2409, %v2411, %v2407
    %v2413 = vmul.f32 1.0, %v2412
    %v2414 = vrcp.pop %v2188
    %v2415 = vmul.f32 %v2188, %v2414
    %v2416 = vsub.f32 1.0, %v2415
    %v2417 = vmul.f32 %v2414, %v2416
    %v2418 = vadd.f32 %v2414, %v2417
    %vm2419 = vweird.f32 %v2188
    %vm2420 = vweird.f32 %v2414
    %vm2421 = vmor %vm2419, %vm2420
    %v2422 = vsel %vm2421, %v2414, %v2418
    %v2423 = vand.u32 2147483647, %v2188
    %vm2424 = vcmp.eq.f32.partialorder %v2423, 8.507059e+37
    %v2425 = vand.u32 %v2188, 2147483648
    %v2426 = vor.u32 1.1754944e-38, %v2425
    %v2427 = vsel %vm2424, %v2426, %v2422
    %v2428 = vmul.f32 1.0, %v2427
    %v2429 = vmul.f32 %v2203, %v1755
    %v2430 = vmul.f32 %v2218, %v1756
    %v2431 = vmul.f32 %v2233, %v1757
    %v2432 = vmul.f32 %v2248, %v1758
    %v2433 = vmul.f32 %v2263, %v1759
    %v2434 = vmul.f32 %v2278, %v1760
    %v2435 = vmul.f32 %v2293, %v1761
    %v2436 = vmul.f32 %v2308, %v1762
    %v2437 = vmul.f32 %v2323, %v1763
    %v2438 = vmul.f32 %v2338, %v1764
    %v2439 = vmul.f32 %v2353, %v1765
    %v2440 = vmul.f32 %v2368, %v1766
    %v2441 = vmul.f32 %v2383, %v1767
    %v2442 = vmul.f32 %v2398, %v1768
    %v2443 = vmul.f32 %v2413, %v1769
    %v2444 = vmul.f32 %v2428, %v1770
    %v2445 = vsub.f32 1.0, %v2203
    %v2446 = vsub.f32 1.0, %v2218
    %v2447 = vsub.f32 1.0, %v2233
    %v2448 = vsub.f32 1.0, %v2248
    %v2449 = vsub.f32 1.0, %v2263
    %v2450 = vsub.f32 1.0, %v2278
    %v2451 = vsub.f32 1.0, %v2293
    %v2452 = vsub.f32 1.0, %v2308
    %v2453 = vsub.f32 1.0, %v2323
    %v2454 = vsub.f32 1.0, %v2338
    %v2455 = vsub.f32 1.0, %v2353
    %v2456 = vsub.f32 1.0, %v2368
    %v2457 = vsub.f32 1.0, %v2383
    %v2458 = vsub.f32 1.0, %v2398
    %v2459 = vsub.f32 1.0, %v2413
    %v2460 = vsub.f32 1.0, %v2428
    %v2462 = vperm.slane %v1772, 0
    %2463 = vset.pattern.permute.xlu0 0
    %2464 = vperm.xlu0 %2463, %v2462
    %v2465 = vpop.permute.xlu0 %2464
    %v2467 = vmul.f32 %v2445, %v2465
    %v2468 = vmul.f32 %v2446, %v2465
    %v2469 = vmul.f32 %v2447, %v2465
    %v2470 = vmul.f32 %v2448, %v2465
    %v2471 = vmul.f32 %v2449, %v2465
    %v2472 = vmul.f32 %v2450, %v2465
    %v2473 = vmul.f32 %v2451, %v2465
    %v2474 = vmul.f32 %v2452, %v2465
    %v2475 = vmul.f32 %v2453, %v2465
    %v2476 = vmul.f32 %v2454, %v2465
    %v2477 = vmul.f32 %v2455, %v2465
    %v2478 = vmul.f32 %v2456, %v2465
    %v2479 = vmul.f32 %v2457, %v2465
    %v2480 = vmul.f32 %v2458, %v2465
    %v2481 = vmul.f32 %v2459, %v2465
    %v2482 = vmul.f32 %v2460, %v2465
    %v2483 = vmul.f32 %v2467, %v1755
    %v2484 = vmul.f32 %v2468, %v1756
    %v2485 = vmul.f32 %v2469, %v1757
    %v2486 = vmul.f32 %v2470, %v1758
    %v2487 = vmul.f32 %v2471, %v1759
    %v2488 = vmul.f32 %v2472, %v1760
    %v2489 = vmul.f32 %v2473, %v1761
    %v2490 = vmul.f32 %v2474, %v1762
    %v2491 = vmul.f32 %v2475, %v1763
    %v2492 = vmul.f32 %v2476, %v1764
    %v2493 = vmul.f32 %v2477, %v1765
    %v2494 = vmul.f32 %v2478, %v1766
    %v2495 = vmul.f32 %v2479, %v1767
    %v2496 = vmul.f32 %v2480, %v1768
    %v2497 = vmul.f32 %v2481, %v1769
    %v2498 = vmul.f32 %v2482, %v1770
    %v2499 = vadd.f32 %v2429, %v2483
    %v2500 = vadd.f32 %v2430, %v2484
    %v2501 = vadd.f32 %v2431, %v2485
    %v2502 = vadd.f32 %v2432, %v2486
    %v2503 = vadd.f32 %v2433, %v2487
    %v2504 = vadd.f32 %v2434, %v2488
    %v2505 = vadd.f32 %v2435, %v2489
    %v2506 = vadd.f32 %v2436, %v2490
    %v2507 = vadd.f32 %v2437, %v2491
    %v2508 = vadd.f32 %v2438, %v2492
    %v2509 = vadd.f32 %v2439, %v2493
    %v2510 = vadd.f32 %v2440, %v2494
    %v2511 = vadd.f32 %v2441, %v2495
    %v2512 = vadd.f32 %v2442, %v2496
    %v2513 = vadd.f32 %v2443, %v2497
    %v2514 = vadd.f32 %v2444, %v2498
    %s2515 = scalar_lea.vmem %s7, 1
    %v2516 = vld [vmem:[%s2515] sm:$0x1]
    %v2518 = vperm.slane %v2516, 0
    %v2520 = vmul.f32 %v2499, %v2518
    %v2521 = vmul.f32 %v2500, %v2518
    %v2522 = vmul.f32 %v2501, %v2518
    %v2523 = vmul.f32 %v2502, %v2518
    %v2524 = vmul.f32 %v2503, %v2518
    %v2525 = vmul.f32 %v2504, %v2518
    %v2526 = vmul.f32 %v2505, %v2518
    %v2527 = vmul.f32 %v2506, %v2518
    %v2528 = vmul.f32 %v2507, %v2518
    %v2529 = vmul.f32 %v2508, %v2518
    %v2530 = vmul.f32 %v2509, %v2518
    %v2531 = vmul.f32 %v2510, %v2518
    %v2532 = vmul.f32 %v2511, %v2518
    %v2533 = vmul.f32 %v2512, %v2518
    %v2534 = vmul.f32 %v2513, %v2518
    %v2535 = vmul.f32 %v2514, %v2518
    %v2536 = vsel %vm396, %v2520, 0.0
    %2537 = vadd.xlane.f32.xlu0 %v2536
    %v2538 = vpop.xlane.xlu0 %2537
    %v2539 = vsel %vm396, %v2521, 0.0
    %2540 = vadd.xlane.f32.xlu0 %v2539
    %v2541 = vpop.xlane.xlu0 %2540
    %v2542 = vsel %vm396, %v2522, 0.0
    %2543 = vadd.xlane.f32.xlu0 %v2542
    %v2544 = vpop.xlane.xlu0 %2543
    %v2545 = vsel %vm396, %v2523, 0.0
    %2546 = vadd.xlane.f32.xlu0 %v2545
    %v2547 = vpop.xlane.xlu0 %2546
    %v2548 = vsel %vm396, %v2524, 0.0
    %2549 = vadd.xlane.f32.xlu0 %v2548
    %v2550 = vpop.xlane.xlu0 %2549
    %v2551 = vsel %vm396, %v2525, 0.0
    %2552 = vadd.xlane.f32.xlu0 %v2551
    %v2553 = vpop.xlane.xlu0 %2552
    %v2554 = vsel %vm396, %v2526, 0.0
    %2555 = vadd.xlane.f32.xlu0 %v2554
    %v2556 = vpop.xlane.xlu0 %2555
    %v2557 = vsel %vm396, %v2527, 0.0
    %2558 = vadd.xlane.f32.xlu0 %v2557
    %v2559 = vpop.xlane.xlu0 %2558
    %v2560 = vsel %vm396, %v2528, 0.0
    %2561 = vadd.xlane.f32.xlu0 %v2560
    %v2562 = vpop.xlane.xlu0 %2561
    %v2563 = vsel %vm396, %v2529, 0.0
    %2564 = vadd.xlane.f32.xlu0 %v2563
    %v2565 = vpop.xlane.xlu0 %2564
    %v2566 = vsel %vm396, %v2530, 0.0
    %2567 = vadd.xlane.f32.xlu0 %v2566
    %v2568 = vpop.xlane.xlu0 %2567
    %v2569 = vsel %vm396, %v2531, 0.0
    %2570 = vadd.xlane.f32.xlu0 %v2569
    %v2571 = vpop.xlane.xlu0 %2570
    %v2572 = vsel %vm396, %v2532, 0.0
    %2573 = vadd.xlane.f32.xlu0 %v2572
    %v2574 = vpop.xlane.xlu0 %2573
    %v2575 = vsel %vm396, %v2533, 0.0
    %2576 = vadd.xlane.f32.xlu0 %v2575
    %v2577 = vpop.xlane.xlu0 %2576
    %v2578 = vsel %vm396, %v2534, 0.0
    %2579 = vadd.xlane.f32.xlu0 %v2578
    %v2580 = vpop.xlane.xlu0 %2579
    %v2581 = vsel %vm396, %v2535, 0.0
    %2582 = vadd.xlane.f32.xlu0 %v2581
    %v2583 = vpop.xlane.xlu0 %2582
    %s2584 = scalar_lea.vmem %s8, 1
    %v2585 = vld [vmem:[%s2584] sm:$0x1]
    %v2587 = vperm.slane %v2585, 0
    %v2589 = vadd.f32 %v2538, %v2587
    %v2590 = vadd.f32 %v2541, %v2587
    %v2591 = vadd.f32 %v2544, %v2587
    %v2592 = vadd.f32 %v2547, %v2587
    %v2593 = vadd.f32 %v2550, %v2587
    %v2594 = vadd.f32 %v2553, %v2587
    %v2595 = vadd.f32 %v2556, %v2587
    %v2596 = vadd.f32 %v2559, %v2587
    %v2597 = vadd.f32 %v2562, %v2587
    %v2598 = vadd.f32 %v2565, %v2587
    %v2599 = vadd.f32 %v2568, %v2587
    %v2600 = vadd.f32 %v2571, %v2587
    %v2601 = vadd.f32 %v2574, %v2587
    %v2602 = vadd.f32 %v2577, %v2587
    %v2603 = vadd.f32 %v2580, %v2587
    %v2604 = vadd.f32 %v2583, %v2587
    %2606 = vset.pattern.permute.xlu0 0
    %2607 = vperm.xlu0 %2606, %v2589
    %v2608 = vpop.permute.xlu0 %2607
    %2611 = vset.pattern.permute.xlu0 0
    %2612 = vperm.xlu0 %2611, %v2590
    %v2613 = vpop.permute.xlu0 %2612
    %2616 = vset.pattern.permute.xlu0 0
    %2617 = vperm.xlu0 %2616, %v2591
    %v2618 = vpop.permute.xlu0 %2617
    %2621 = vset.pattern.permute.xlu0 0
    %2622 = vperm.xlu0 %2621, %v2592
    %v2623 = vpop.permute.xlu0 %2622
    %2626 = vset.pattern.permute.xlu0 0
    %2627 = vperm.xlu0 %2626, %v2593
    %v2628 = vpop.permute.xlu0 %2627
    %2631 = vset.pattern.permute.xlu0 0
    %2632 = vperm.xlu0 %2631, %v2594
    %v2633 = vpop.permute.xlu0 %2632
    %2636 = vset.pattern.permute.xlu0 0
    %2637 = vperm.xlu0 %2636, %v2595
    %v2638 = vpop.permute.xlu0 %2637
    %2641 = vset.pattern.permute.xlu0 0
    %2642 = vperm.xlu0 %2641, %v2596
    %v2643 = vpop.permute.xlu0 %2642
    %2646 = vset.pattern.permute.xlu0 0
    %2647 = vperm.xlu0 %2646, %v2597
    %v2648 = vpop.permute.xlu0 %2647
    %2651 = vset.pattern.permute.xlu0 0
    %2652 = vperm.xlu0 %2651, %v2598
    %v2653 = vpop.permute.xlu0 %2652
    %2656 = vset.pattern.permute.xlu0 0
    %2657 = vperm.xlu0 %2656, %v2599
    %v2658 = vpop.permute.xlu0 %2657
    %2661 = vset.pattern.permute.xlu0 0
    %2662 = vperm.xlu0 %2661, %v2600
    %v2663 = vpop.permute.xlu0 %2662
    %2666 = vset.pattern.permute.xlu0 0
    %2667 = vperm.xlu0 %2666, %v2601
    %v2668 = vpop.permute.xlu0 %2667
    %2671 = vset.pattern.permute.xlu0 0
    %2672 = vperm.xlu0 %2671, %v2602
    %v2673 = vpop.permute.xlu0 %2672
    %2676 = vset.pattern.permute.xlu0 0
    %2677 = vperm.xlu0 %2676, %v2603
    %v2678 = vpop.permute.xlu0 %2677
    %2681 = vset.pattern.permute.xlu0 0
    %2682 = vperm.xlu0 %2681, %v2604
    %v2683 = vpop.permute.xlu0 %2682
    %v2685 = vmul.f32 %v2608, %v1448
    %v2686 = vmul.f32 %v2613, %v1449
    %v2687 = vmul.f32 %v2618, %v1450
    %v2688 = vmul.f32 %v2623, %v1451
    %v2689 = vmul.f32 %v2628, %v1452
    %v2690 = vmul.f32 %v2633, %v1453
    %v2691 = vmul.f32 %v2638, %v1454
    %v2692 = vmul.f32 %v2643, %v1455
    %v2693 = vmul.f32 %v2648, %v1456
    %v2694 = vmul.f32 %v2653, %v1457
    %v2695 = vmul.f32 %v2658, %v1458
    %v2696 = vmul.f32 %v2663, %v1459
    %v2697 = vmul.f32 %v2668, %v1460
    %v2698 = vmul.f32 %v2673, %v1461
    %v2699 = vmul.f32 %v2678, %v1462
    %v2700 = vmul.f32 %v2683, %v1463
    %v2701 = vsel %vm96, %v2685, 0.0
    %v2702 = vsel %vm96, %v2686, 0.0
    %v2703 = vadd.f32 %v2701, %v2702
    %v2704 = vrot.slane %v2703, 4
    %v2705 = vadd.f32 %v2703, %v2704
    %v2706 = vrot.slane %v2705, 2
    %v2707 = vadd.f32 %v2705, %v2706
    %v2708 = vrot.slane %v2707, 1
    %v2709 = vadd.f32 %v2707, %v2708
    %v2710 = vsel %vm96, %v2687, 0.0
    %v2711 = vsel %vm96, %v2688, 0.0
    %v2712 = vadd.f32 %v2710, %v2711
    %v2713 = vrot.slane %v2712, 4
    %v2714 = vadd.f32 %v2712, %v2713
    %v2715 = vrot.slane %v2714, 2
    %v2716 = vadd.f32 %v2714, %v2715
    %v2717 = vrot.slane %v2716, 1
    %v2718 = vadd.f32 %v2716, %v2717
    %v2719 = vsel %vm96, %v2689, 0.0
    %v2720 = vsel %vm96, %v2690, 0.0
    %v2721 = vadd.f32 %v2719, %v2720
    %v2722 = vrot.slane %v2721, 4
    %v2723 = vadd.f32 %v2721, %v2722
    %v2724 = vrot.slane %v2723, 2
    %v2725 = vadd.f32 %v2723, %v2724
    %v2726 = vrot.slane %v2725, 1
    %v2727 = vadd.f32 %v2725, %v2726
    %v2728 = vsel %vm96, %v2691, 0.0
    %v2729 = vsel %vm96, %v2692, 0.0
    %v2730 = vadd.f32 %v2728, %v2729
    %v2731 = vrot.slane %v2730, 4
    %v2732 = vadd.f32 %v2730, %v2731
    %v2733 = vrot.slane %v2732, 2
    %v2734 = vadd.f32 %v2732, %v2733
    %v2735 = vrot.slane %v2734, 1
    %v2736 = vadd.f32 %v2734, %v2735
    %v2737 = vsel %vm96, %v2693, 0.0
    %v2738 = vsel %vm96, %v2694, 0.0
    %v2739 = vadd.f32 %v2737, %v2738
    %v2740 = vrot.slane %v2739, 4
    %v2741 = vadd.f32 %v2739, %v2740
    %v2742 = vrot.slane %v2741, 2
    %v2743 = vadd.f32 %v2741, %v2742
    %v2744 = vrot.slane %v2743, 1
    %v2745 = vadd.f32 %v2743, %v2744
    %v2746 = vsel %vm96, %v2695, 0.0
    %v2747 = vsel %vm96, %v2696, 0.0
    %v2748 = vadd.f32 %v2746, %v2747
    %v2749 = vrot.slane %v2748, 4
    %v2750 = vadd.f32 %v2748, %v2749
    %v2751 = vrot.slane %v2750, 2
    %v2752 = vadd.f32 %v2750, %v2751
    %v2753 = vrot.slane %v2752, 1
    %v2754 = vadd.f32 %v2752, %v2753
    %v2755 = vsel %vm96, %v2697, 0.0
    %v2756 = vsel %vm96, %v2698, 0.0
    %v2757 = vadd.f32 %v2755, %v2756
    %v2758 = vrot.slane %v2757, 4
    %v2759 = vadd.f32 %v2757, %v2758
    %v2760 = vrot.slane %v2759, 2
    %v2761 = vadd.f32 %v2759, %v2760
    %v2762 = vrot.slane %v2761, 1
    %v2763 = vadd.f32 %v2761, %v2762
    %v2764 = vsel %vm96, %v2699, 0.0
    %v2765 = vsel %vm96, %v2700, 0.0
    %v2766 = vadd.f32 %v2764, %v2765
    %v2767 = vrot.slane %v2766, 4
    %v2768 = vadd.f32 %v2766, %v2767
    %v2769 = vrot.slane %v2768, 2
    %v2770 = vadd.f32 %v2768, %v2769
    %v2771 = vrot.slane %v2770, 1
    %v2772 = vadd.f32 %v2770, %v2771
    %v2781 = vsel %vm1410, %v2718, %v2709
    %v2782 = vsel %vm1412, %v2727, %v2781
    %v2783 = vsel %vm1414, %v2736, %v2782
    %v2784 = vsel %vm1416, %v2745, %v2783
    %v2785 = vsel %vm1418, %v2754, %v2784
    %v2786 = vsel %vm1420, %v2763, %v2785
    %v2787 = vsel %vm1422, %v2772, %v2786
    %v2788 = vsel %vm96, %v2787, 0
    %2790 = vmatpush.msra.mxu0 0.0
    %2791 = vmatpush.msra.mxu0 0.0
    %2792 = vmatpush.msra.mxu0 0.0
    %2793 = vmatpush.msra.mxu0 0.0
    %2794 = vmatpush.msra.mxu0 0.0
    %2795 = vmatpush.msra.mxu0 0.0
    %2796 = vmatpush.msra.mxu0 0.0
    %2797 = vmatpush.msra.mxu0 0.0
    %2798 = vmatpush.msra.mxu0 0.0
    %2799 = vmatpush.msra.mxu0 0.0
    %2800 = vmatpush.msra.mxu0 0.0
    %2801 = vmatpush.msra.mxu0 0.0
    %2802 = vmatpush.msra.mxu0 0.0
    %2803 = vmatpush.msra.mxu0 0.0
    %2804 = vmatpush.msra.mxu0 0.0
    %2805 = vmatpush.msra.mxu0 %v64
    %2806 = vmatmul.f32.gmra.mxu0 %v2788
    %v2807 = vpop.f32.mrf.mxu0
    %v2808 = vadd.f32 0.0, %v2807
    %2809 = vdwg.mxu0
    %v2810 = vadd.f32 %v1446, %v2808
    %2811 = vmatpush.msra.mxu0 0.0
    %2812 = vmatpush.msra.mxu0 0.0
    %2813 = vmatpush.msra.mxu0 0.0
    %2814 = vmatpush.msra.mxu0 0.0
    %2815 = vmatpush.msra.mxu0 0.0
    %2816 = vmatpush.msra.mxu0 0.0
    %2817 = vmatpush.msra.mxu0 0.0
    %2818 = vmatpush.msra.mxu0 0.0
    %2819 = vmatpush.msra.mxu0 0.0
    %2820 = vmatpush.msra.mxu0 0.0
    %2821 = vmatpush.msra.mxu0 0.0
    %2822 = vmatpush.msra.mxu0 0.0
    %2823 = vmatpush.msra.mxu0 0.0
    %2824 = vmatpush.msra.mxu0 0.0
    %2825 = vmatpush.msra.mxu0 0.0
    %2826 = vmatpush.msra.mxu0 %v65
    %2827 = vmatmul.f32.gmra.mxu0 %v98
    %v2828 = vpop.f32.mrf.mxu0
    %v2829 = vadd.f32 0.0, %v2828
    %2830 = vdwg.mxu0
    %v2831 = vadd.f32 %v2810, %v2829
    %2832 = vmatpush.msra.mxu0 0.0
    %2833 = vmatpush.msra.mxu0 0.0
    %2834 = vmatpush.msra.mxu0 0.0
    %2835 = vmatpush.msra.mxu0 0.0
    %2836 = vmatpush.msra.mxu0 0.0
    %2837 = vmatpush.msra.mxu0 0.0
    %2838 = vmatpush.msra.mxu0 0.0
    %2839 = vmatpush.msra.mxu0 0.0
    %2840 = vmatpush.msra.mxu0 0.0
    %2841 = vmatpush.msra.mxu0 0.0
    %2842 = vmatpush.msra.mxu0 0.0
    %2843 = vmatpush.msra.mxu0 0.0
    %2844 = vmatpush.msra.mxu0 0.0
    %2845 = vmatpush.msra.mxu0 0.0
    %2846 = vmatpush.msra.mxu0 0.0
    %2847 = vmatpush.msra.mxu0 %v66
    %2848 = vmatmul.f32.gmra.mxu0 %v1474
    %v2849 = vpop.f32.mrf.mxu0
    %v2850 = vadd.f32 0.0, %v2849
    %2851 = vdwg.mxu0
    %v2852 = vadd.f32 %v2831, %v2850
    %v2853 = vld [vmem:[%s2] sm:$0xff]
    %v2855 = vsel %vm96, %v2853, 0
    %2857 = vmatpush.msra.mxu0 0.0
    %2858 = vmatpush.msra.mxu0 0.0
    %2859 = vmatpush.msra.mxu0 0.0
    %2860 = vmatpush.msra.mxu0 0.0
    %2861 = vmatpush.msra.mxu0 0.0
    %2862 = vmatpush.msra.mxu0 0.0
    %2863 = vmatpush.msra.mxu0 0.0
    %2864 = vmatpush.msra.mxu0 0.0
    %2865 = vmatpush.msra.mxu0 0.0
    %2866 = vmatpush.msra.mxu0 0.0
    %2867 = vmatpush.msra.mxu0 0.0
    %2868 = vmatpush.msra.mxu0 0.0
    %2869 = vmatpush.msra.mxu0 0.0
    %2870 = vmatpush.msra.mxu0 0.0
    %2871 = vmatpush.msra.mxu0 0.0
    %2872 = vmatpush.msra.mxu0 %v67
    %2873 = vmatmul.f32.gmra.mxu0 %v2855
    %v2874 = vpop.f32.mrf.mxu0
    %v2875 = vadd.f32 0.0, %v2874
    %2876 = vdwg.mxu0
    %v2877 = vadd.f32 %v2852, %v2875
    %s2878 = scalar_lea.vmem %s2, 8
    %v2879 = vld [vmem:[%s2878] sm:$0xff]
    %v2881 = vsel %vm96, %v2879, 0
    %2883 = vmatpush.msra.mxu0 0.0
    %2884 = vmatpush.msra.mxu0 0.0
    %2885 = vmatpush.msra.mxu0 0.0
    %2886 = vmatpush.msra.mxu0 0.0
    %2887 = vmatpush.msra.mxu0 0.0
    %2888 = vmatpush.msra.mxu0 0.0
    %2889 = vmatpush.msra.mxu0 0.0
    %2890 = vmatpush.msra.mxu0 0.0
    %2891 = vmatpush.msra.mxu0 0.0
    %2892 = vmatpush.msra.mxu0 0.0
    %2893 = vmatpush.msra.mxu0 0.0
    %2894 = vmatpush.msra.mxu0 0.0
    %2895 = vmatpush.msra.mxu0 0.0
    %2896 = vmatpush.msra.mxu0 0.0
    %2897 = vmatpush.msra.mxu0 0.0
    %2898 = vmatpush.msra.mxu0 %v68
    %2899 = vmatmul.f32.gmra.mxu0 %v2881
    %v2900 = vpop.f32.mrf.mxu0
    %v2901 = vadd.f32 0.0, %v2900
    %2902 = vdwg.mxu0
    %v2903 = vadd.f32 %v2877, %v2901
    %s2904 = scalar_lea.vmem %s2, 16
    %v2905 = vld [vmem:[%s2904] sm:$0xff]
    %v2907 = vsel %vm96, %v2905, 0
    %2909 = vmatpush.msra.mxu0 0.0
    %2910 = vmatpush.msra.mxu0 0.0
    %2911 = vmatpush.msra.mxu0 0.0
    %2912 = vmatpush.msra.mxu0 0.0
    %2913 = vmatpush.msra.mxu0 0.0
    %2914 = vmatpush.msra.mxu0 0.0
    %2915 = vmatpush.msra.mxu0 0.0
    %2916 = vmatpush.msra.mxu0 0.0
    %2917 = vmatpush.msra.mxu0 0.0
    %2918 = vmatpush.msra.mxu0 0.0
    %2919 = vmatpush.msra.mxu0 0.0
    %2920 = vmatpush.msra.mxu0 0.0
    %2921 = vmatpush.msra.mxu0 0.0
    %2922 = vmatpush.msra.mxu0 0.0
    %2923 = vmatpush.msra.mxu0 0.0
    %2924 = vmatpush.msra.mxu0 %v69
    %2925 = vmatmul.f32.gmra.mxu0 %v2907
    %v2926 = vpop.f32.mrf.mxu0
    %v2927 = vadd.f32 0.0, %v2926
    %2928 = vdwg.mxu0
    %v2929 = vadd.f32 %v2903, %v2927
    %v2930 = vld [vmem:[#allocation2] sm:$0x1]
    %vm2931 = vcmask 523264
    %v2932 = vsel %vm2931, %v2929, 0.0
    %2933 = vadd.xlane.f32.xlu0 %v2932
    %v2934 = vpop.xlane.xlu0 %2933
    %v2935 = vrcp.pop 64.0
    %v2936 = vmul.f32 64.0, %v2935
    %v2937 = vsub.f32 1.0, %v2936
    %v2938 = vmul.f32 %v2935, %v2937
    %v2939 = vadd.f32 %v2935, %v2938
    %vm2940 = vweird.f32 %v2935
    %v2941 = vsel %vm2940, %v2935, %v2939
    %v2942 = vmul.f32 %v2934, %v2941
    %v2943 = vsub.f32 %v2929, %v2942
    %v2944 = vmul.f32 %v2943, %v2943
    %v2945 = vsel %vm2931, %v2944, 0.0
    %2946 = vadd.xlane.f32.xlu0 %v2945
    %v2947 = vpop.xlane.xlu0 %2946
    %v2948 = vmul.f32 %v2947, %v2941
    %v2949 = vadd.f32 %v2948, 0.001
    %v2950 = vrsqrt.pop %v2949
    %v2951 = vmul.f32 %v2950, %v2949
    %v2952 = vmul.f32 %v2951, %v2950
    %v2953 = vmul.f32 0.5, %v2952
    %v2954 = vsub.f32 1.5, %v2953
    %v2955 = vmul.f32 %v2950, %v2954
    %vm2956 = vweird.f32 %v2949
    %vm2957 = vweird.f32 %v2950
    %vm2958 = vmor %vm2956, %vm2957
    %v2959 = vsel %vm2958, %v2950, %v2955
    %v2960 = vmul.f32 %v2943, %v2959
    %v2961 = vxor.u32 %v2960, 2147483648
    %v2962 = vmul.f32 %v2961, 1.442695
    %v2963 = vpow.pop %v2962
    %v2964 = vadd.f32 %v2963, 1.0
    %v2965 = vrcp.pop %v2964
    %v2966 = vmul.f32 %v2964, %v2965
    %v2967 = vsub.f32 1.0, %v2966
    %v2968 = vmul.f32 %v2965, %v2967
    %v2969 = vadd.f32 %v2965, %v2968
    %vm2970 = vweird.f32 %v2964
    %vm2971 = vweird.f32 %v2965
    %vm2972 = vmor %vm2970, %vm2971
    %v2973 = vsel %vm2972, %v2965, %v2969
    %v2974 = vand.u32 2147483647, %v2964
    %vm2975 = vcmp.eq.f32.partialorder %v2974, 8.507059e+37
    %v2976 = vand.u32 %v2964, 2147483648
    %v2977 = vor.u32 1.1754944e-38, %v2976
    %v2978 = vsel %vm2975, %v2977, %v2973
    %v2979 = vmul.f32 1.0, %v2978
    %v2980 = vmul.f32 %v2979, %v2929
    %v2981 = vsub.f32 1.0, %v2979
    %v2983 = vperm.slane %v2930, 0
    %2984 = vset.pattern.permute.xlu0 0
    %2985 = vperm.xlu0 %2984, %v2983
    %v2986 = vpop.permute.xlu0 %2985
    %v2988 = vmul.f32 %v2981, %v2986
    %v2989 = vmul.f32 %v2988, %v2929
    %v2990 = vadd.f32 %v2980, %v2989
    %v2991 = vld [vmem:[%s12] sm:$0xff]
    %v2992 = vld [vmem:[%s12 + $0x8] sm:$0xff]
    %v2993 = vld [vmem:[%s12 + $0x10] sm:$0xff]
    %v2994 = vld [vmem:[%s12 + $0x18] sm:$0xff]
    %v2995 = vld [vmem:[%s12 + $0x20] sm:$0xff]
    %v2996 = vld [vmem:[%s12 + $0x28] sm:$0xff]
    %v2997 = vld [vmem:[%s12 + $0x30] sm:$0xff]
    %v2998 = vld [vmem:[%s12 + $0x38] sm:$0xff]
    %v2999 = vld [vmem:[%s13] sm:$0x1]
    %v3001 = vperm.slane %v2999, 0
    %v3004 = vsel %vm2931, %v2990, 0
    %3006 = vmatpush.msra.mxu0 0.0
    %3007 = vmatpush.msra.mxu0 0.0
    %3008 = vmatpush.msra.mxu0 0.0
    %3009 = vmatpush.msra.mxu0 0.0
    %3010 = vmatpush.msra.mxu0 0.0
    %3011 = vmatpush.msra.mxu0 0.0
    %3012 = vmatpush.msra.mxu0 0.0
    %3013 = vmatpush.msra.mxu0 0.0
    %3014 = vmatpush.msra.mxu0 %v2998
    %3015 = vmatpush.msra.mxu0 %v2997
    %3016 = vmatpush.msra.mxu0 %v2996
    %3017 = vmatpush.msra.mxu0 %v2995
    %3018 = vmatpush.msra.mxu0 %v2994
    %3019 = vmatpush.msra.mxu0 %v2993
    %3020 = vmatpush.msra.mxu0 %v2992
    %3021 = vmatpush.msra.mxu0 %v2991
    %3022 = vmatmul.f32.gmra.mxu0 %v3004
    %v3023 = vpop.f32.mrf.mxu0
    %v3024 = vadd.f32 %v3001, %v3023
    %3025 = vdwg.mxu0
    %v3026 = vld [vmem:[#allocation3] sm:$0x1]
    %vm3027 = vcmask 261120
    %v3028 = vsel %vm3027, %v3024, 0.0
    %3029 = vadd.xlane.f32.xlu0 %v3028
    %v3030 = vpop.xlane.xlu0 %3029
    %v3031 = vrcp.pop 32.0
    %v3032 = vmul.f32 32.0, %v3031
    %v3033 = vsub.f32 1.0, %v3032
    %v3034 = vmul.f32 %v3031, %v3033
    %v3035 = vadd.f32 %v3031, %v3034
    %vm3036 = vweird.f32 %v3031
    %v3037 = vsel %vm3036, %v3031, %v3035
    %v3038 = vmul.f32 %v3030, %v3037
    %v3039 = vsub.f32 %v3024, %v3038
    %v3040 = vmul.f32 %v3039, %v3039
    %v3041 = vsel %vm3027, %v3040, 0.0
    %3042 = vadd.xlane.f32.xlu0 %v3041
    %v3043 = vpop.xlane.xlu0 %3042
    %v3044 = vmul.f32 %v3043, %v3037
    %v3045 = vadd.f32 %v3044, 0.001
    %v3046 = vrsqrt.pop %v3045
    %v3047 = vmul.f32 %v3046, %v3045
    %v3048 = vmul.f32 %v3047, %v3046
    %v3049 = vmul.f32 0.5, %v3048
    %v3050 = vsub.f32 1.5, %v3049
    %v3051 = vmul.f32 %v3046, %v3050
    %vm3052 = vweird.f32 %v3045
    %vm3053 = vweird.f32 %v3046
    %vm3054 = vmor %vm3052, %vm3053
    %v3055 = vsel %vm3054, %v3046, %v3051
    %v3056 = vmul.f32 %v3039, %v3055
    %v3057 = vxor.u32 %v3056, 2147483648
    %v3058 = vmul.f32 %v3057, 1.442695
    %v3059 = vpow.pop %v3058
    %v3060 = vadd.f32 %v3059, 1.0
    %v3061 = vrcp.pop %v3060
    %v3062 = vmul.f32 %v3060, %v3061
    %v3063 = vsub.f32 1.0, %v3062
    %v3064 = vmul.f32 %v3061, %v3063
    %v3065 = vadd.f32 %v3061, %v3064
    %vm3066 = vweird.f32 %v3060
    %vm3067 = vweird.f32 %v3061
    %vm3068 = vmor %vm3066, %vm3067
    %v3069 = vsel %vm3068, %v3061, %v3065
    %v3070 = vand.u32 2147483647, %v3060
    %vm3071 = vcmp.eq.f32.partialorder %v3070, 8.507059e+37
    %v3072 = vand.u32 %v3060, 2147483648
    %v3073 = vor.u32 1.1754944e-38, %v3072
    %v3074 = vsel %vm3071, %v3073, %v3069
    %v3075 = vmul.f32 1.0, %v3074
    %v3076 = vmul.f32 %v3075, %v3024
    %v3077 = vsub.f32 1.0, %v3075
    %v3079 = vperm.slane %v3026, 0
    %3080 = vset.pattern.permute.xlu0 0
    %3081 = vperm.xlu0 %3080, %v3079
    %v3082 = vpop.permute.xlu0 %3081
    %v3084 = vmul.f32 %v3077, %v3082
    %v3085 = vmul.f32 %v3084, %v3024
    %v3086 = vadd.f32 %v3076, %v3085
    %v3087 = vld [vmem:[%s15] sm:$0x1]
    %v3088 = vld [vmem:[#allocation4] sm:$0x1]
    %3090 = vset.pattern.permute.xlu0 0
    %3091 = vperm.xlu0 %3090, %v3088
    %v3092 = vpop.permute.xlu0 %3091
    %v3094 = vperm.slane %v3092, 0
    %v3096 = vsel %vm3027, %v3087, 0
    %v3099 = vsel %vm3027, %v3086, 0
    %3101 = vmatpush.xpose.msra.mxu0 0.0
    %3102 = vmatpush.xpose.msra.mxu0 0.0
    %3103 = vmatpush.xpose.msra.mxu0 0.0
    %3104 = vmatpush.xpose.msra.mxu0 0.0
    %3105 = vmatpush.xpose.msra.mxu0 0.0
    %3106 = vmatpush.xpose.msra.mxu0 0.0
    %3107 = vmatpush.xpose.msra.mxu0 0.0
    %3108 = vmatpush.xpose.msra.mxu0 0.0
    %3109 = vmatpush.xpose.msra.mxu0 0.0
    %3110 = vmatpush.xpose.msra.mxu0 0.0
    %3111 = vmatpush.xpose.msra.mxu0 0.0
    %3112 = vmatpush.xpose.msra.mxu0 0.0
    %3113 = vmatpush.xpose.msra.mxu0 0.0
    %3114 = vmatpush.xpose.msra.mxu0 0.0
    %3115 = vmatpush.xpose.msra.mxu0 0.0
    %3116 = vmatpush.xpose.msra.mxu0 %v3099
    %3117 = vmatmul.f32.gmra.mxu0 %v3096
    %v3118 = vpop.f32.mrf.mxu0
    %v3119 = vadd.f32 %v3094, %v3118
    %3120 = vdwg.mxu0
    %v3121 = vxor.u32 %v3119, 2147483648
    %v3122 = vmul.f32 %v3121, 1.442695
    %v3123 = vpow.pop %v3122
    %v3124 = vadd.f32 %v3123, 1.0
    %v3125 = vrcp.pop %v3124
    %v3126 = vmul.f32 %v3124, %v3125
    %v3127 = vsub.f32 1.0, %v3126
    %v3128 = vmul.f32 %v3125, %v3127
    %v3129 = vadd.f32 %v3125, %v3128
    %vm3130 = vweird.f32 %v3124
    %vm3131 = vweird.f32 %v3125
    %vm3132 = vmor %vm3130, %vm3131
    %v3133 = vsel %vm3132, %v3125, %v3129
    %v3134 = vand.u32 2147483647, %v3124
    %vm3135 = vcmp.eq.f32.partialorder %v3134, 8.507059e+37
    %v3136 = vand.u32 %v3124, 2147483648
    %v3137 = vor.u32 1.1754944e-38, %v3136
    %v3138 = vsel %vm3135, %v3137, %v3133
    %v3139 = vmul.f32 1.0, %v3138
    %vm3140 = vcmask 57344
    %3141 = vst.msk [vmem:[#allocation5] sm:$0x1] %vm3140, %v3139
    // Predicated region
    $region70: #{tpu_custom_call.1} parent=1 // pred_check
      _
    $region71: #{tpu_custom_call.1} parent=1 // pred_check_branch
      %3143 = sbr.rel (0) target = $region73
    $region72: #{tpu_custom_call.1} parent=1 // pred_region
      %3145 = vsyncadd [#allocation6], 0
      %s3147 = sshll.u32 [#allocation5], 4
      %s3148 = int_to_ptr.vmem [resolvable:$true] %s3147
      %s3149 = sshll.u32 %s17, 4
      %s3150 = int_to_ptr.hbm [resolvable:$true] %s3149
      %3152 = dma.vmem_to_hbm [thread:$0]  %s3148, 16, %s3150, [#allocation6]
    $region73: #{tpu_custom_call.1} parent=1 // pred_fallthru
      _
    // Predicated region
    $region74: #{tpu_custom_call.1} parent=1 // pred_check
      _
    $region75: #{tpu_custom_call.1} parent=1 // pred_check_branch
      %3154 = sbr.rel (0) target = $region77
    $region76: #{tpu_custom_call.1} parent=1 // pred_region
      %3156 = dma.done [#allocation6], 16
    $region77: #{tpu_custom_call.1} parent=1 // pred_fallthru
      _
    %3157 = vsyncpa [#allocation6], 1

</llo_original>
